<compile_context>
chip_gen: v6e
topology: v6e:2x2x1
jax: 0.10.0
libtpu: 0.0.40
codegen_flags: <defaults>
</compile_context>

<pallas_src>
import functools

import jax
import jax.numpy as jnp
from jax.experimental import pallas as pl
from jax.experimental.pallas import tpu as pltpu


def _round_up(x, m):
    return ((x + m - 1) // m) * m


# ----------------------------- Pallas kernels -------------------------------

def _mm_single_kernel(*refs, relu, pool8, fuse_sc):
    """One-pass (M,K)@(K,N) + bias, optional 8-row avg-pool, ReLU, fused
    1x1-shortcut residual.  Grid = (M tiles, N tiles); K is a single tile."""
    if fuse_sc:
        a_ref, b_ref, bias_ref, sa_ref, sw_ref, sb_ref, o_ref = refs
    else:
        a_ref, b_ref, bias_ref, o_ref = refs
    r = jnp.dot(a_ref[...], b_ref[...], preferred_element_type=jnp.float32)
    r = r + bias_ref[...]
    if pool8:
        tm, tn = r.shape
        r = jnp.mean(r.reshape(tm // 8, 8, tn), axis=1)   # AvgPool3d(2) (pool before ReLU)
    if relu:
        r = jnp.maximum(r, 0.0)
    if fuse_sc:
        # ResBlock shortcut: ReLU(x @ w_sc + b_sc), added AFTER conv2's ReLU.
        res = jnp.dot(sa_ref[...], sw_ref[...], preferred_element_type=jnp.float32)
        r = r + jnp.maximum(res + sb_ref[...], 0.0)
    o_ref[...] = r.astype(o_ref.dtype)


def _mm_acc_kernel(*refs, relu, pool8, fuse_sc):
    """Multi-K-tile fallback (accumulator in VMEM). Grid = (Mt, Nt, Kt)."""
    if fuse_sc:
        a_ref, b_ref, bias_ref, sa_ref, sw_ref, sb_ref, o_ref, acc_ref = refs
    else:
        a_ref, b_ref, bias_ref, o_ref, acc_ref = refs

    @pl.when(pl.program_id(2) == 0)
    def _():
        acc_ref[...] = jnp.zeros_like(acc_ref)

    acc_ref[...] += jnp.dot(a_ref[...], b_ref[...],
                            preferred_element_type=jnp.float32)

    @pl.when(pl.program_id(2) == pl.num_programs(2) - 1)
    def _():
        r = acc_ref[...] + bias_ref[...]
        if pool8:
            tm, tn = r.shape
            r = jnp.mean(r.reshape(tm // 8, 8, tn), axis=1)
        if relu:
            r = jnp.maximum(r, 0.0)
        if fuse_sc:
            res = jnp.dot(sa_ref[...], sw_ref[...],
                          preferred_element_type=jnp.float32)
            r = r + jnp.maximum(res + sb_ref[...], 0.0)
        o_ref[...] = r.astype(o_ref.dtype)


def _gn_kernel(x_ref, g_ref, b_ref, o_ref, *, groups, eps, relu, inv_count):
    """GroupNorm on channel-last (N, R=DHW, C) input, one-pass stats,
    pre-folded affine (single FMA), optional fused ReLU, bf16 out."""
    x = x_ref[...].astype(jnp.float32)                       # (N, R, C)
    C = x.shape[2]
    cg = C // groups
    ch = jax.lax.broadcasted_iota(jnp.int32, (1, 1, C), 2)
    mean_c = jnp.zeros((x.shape[0], 1, C), jnp.float32)
    rstd_c = jnp.zeros((x.shape[0], 1, C), jnp.float32)
    for g in range(groups):                                   # groups is small & static
        lo = g * cg
        xg = x[:, :, lo:lo + cg]
        s1 = jnp.sum(jnp.sum(xg, axis=2, keepdims=True), axis=1,
                     keepdims=True) * inv_count               # (N,1,1) mean
        s2 = jnp.sum(jnp.sum(xg * xg, axis=2, keepdims=True), axis=1,
                     keepdims=True) * inv_count               # (N,1,1) E[x^2]
        rstd = jax.lax.rsqrt(s2 - s1 * s1 + eps)
        in_g = (ch >= lo) & (ch < lo + cg)                    # (1,1,C) mask
        mean_c = mean_c + jnp.where(in_g, s1, 0.0)
        rstd_c = rstd_c + jnp.where(in_g, rstd, 0.0)
    scale = g_ref[...] * rstd_c                               # (N,1,C)
    shift = b_ref[...] - mean_c * scale
    y = x * scale + shift
    if relu:
        y = jnp.maximum(y, 0.0)
    o_ref[...] = y.astype(o_ref.dtype)


def _heads_kernel(*refs, n_core):
    """Fused dense heads (RegressionBlock core+out and ConfidenceBlock).

    refs = feat, (w,b)*n_core, w_out, b_out, w_c1, b_c1, w_c2, b_c2,
           reg_out_ref, conf_out_ref.  All operands are zero-padded to
    (mult of 8, mult of 128); padded lanes stay exactly zero through the chain.
    """
    reg_ref, conf_ref = refs[-2], refs[-1]
    feat = refs[0][...]                                       # bf16
    idx = 1
    h = feat
    for _ in range(n_core):
        w, b = refs[idx][...], refs[idx + 1][...]
        idx += 2
        h = jnp.maximum(jnp.dot(h, w, preferred_element_type=jnp.float32) + b,
                        0.0).astype(jnp.bfloat16)
    w, b = refs[idx][...], refs[idx + 1][...]
    idx += 2
    reg_ref[...] = jnp.dot(h, w, preferred_element_type=jnp.float32) + b
    w, b = refs[idx][...], refs[idx + 1][...]
    idx += 2
    c = jnp.maximum(jnp.dot(feat, w, preferred_element_type=jnp.float32) + b,
                    0.0).astype(jnp.bfloat16)
    w, b = refs[idx][...], refs[idx + 1][...]
    idx += 2
    conf_ref[...] = jnp.maximum(
        jnp.dot(c, w, preferred_element_type=jnp.float32) + b, 0.0)


# ------------------------------- wrappers ------------------------------------

def matmul_fused(a, w_p, b_p, *, relu, pool8=False, shortcut=None,
                 out_dtype=jnp.bfloat16):
    """a:(M,Kp) bf16, w_p:(Kp,Np) bf16, b_p:(1,Np) f32.

    Fused epilogue: bias, optional 8-row avg-pool (2x2x2 window rows), ReLU,
    optional 1x1-shortcut conv (second dot).  Returns padded (Mp[,//8], Np)
    `out_dtype` (caller slices rows/cols)."""
    M, Kp = a.shape
    Kp2, Np = w_p.shape
    assert Kp == Kp2, (Kp, Kp2)

    Mp8 = _round_up(M, 16)                     # 16: bf16 sublane tile
    if Mp8 <= 512:
        TM = Mp8                               # single M tile, no extra padding
    else:
        TM = 512
        for cand in (2048, 1024, 512):         # big tiles amortize ~0.35us/step,
            if Mp8 % cand == 0 and Mp8 // cand >= 2:   # but keep >=2 tiles (v7x megacore)
                TM = cand
                break
    Mp = _round_up(Mp8, TM)
    TN = Np if Np <= 512 else (256 if Np % 256 == 0 else 128)
    single_k = Kp <= 1024
    TK = Kp if single_k else (256 if Kp % 256 == 0 else 128)

    fuse_sc = shortcut is not None
    if fuse_sc:
        assert not pool8
        sc_a, sc_w, sc_b = shortcut
        Ks = sc_w.shape[0]
        assert sc_a.shape == (M, Ks) and sc_w.shape[1] == Np
    if Mp != M:
        a = jnp.pad(a, ((0, Mp - M), (0, 0)))
        if fuse_sc:
            sc_a = jnp.pad(sc_a, ((0, Mp - M), (0, 0)))

    out_rows = Mp // 8 if pool8 else Mp
    blk_rows = TM // 8 if pool8 else TM

    args = [a, w_p, b_p] + ([sc_a, sc_w, sc_b] if fuse_sc else [])

    # Explicit scoped-VMEM budget (matters on v5e's 16 MiB default scoped VMEM
    # once tiles grow); generous upper bound on double-buffered block bytes.
    out_bytes = jnp.dtype(out_dtype).itemsize
    blk_bytes = TM * TK * 2 + TK * TN * 2 + TN * 4 + blk_rows * TN * out_bytes
    if fuse_sc:
        blk_bytes += TM * Ks * 2 + Ks * TN * 2 + TN * 4
    if not single_k:
        blk_bytes += TM * TN * 4
    vmem_limit = int(min(56 << 20, max(32 << 20, 4 * blk_bytes)))

    if single_k:
        in_specs = [
            pl.BlockSpec((TM, TK), lambda i, j: (i, 0)),
            pl.BlockSpec((TK, TN), lambda i, j: (0, j)),
            pl.BlockSpec((1, TN), lambda i, j: (0, j)),
        ]
        if fuse_sc:
            in_specs += [
                pl.BlockSpec((TM, Ks), lambda i, j: (i, 0)),
                pl.BlockSpec((Ks, TN), lambda i, j: (0, j)),
                pl.BlockSpec((1, TN), lambda i, j: (0, j)),
            ]
        return pl.pallas_call(
            functools.partial(_mm_single_kernel, relu=relu, pool8=pool8,
                              fuse_sc=fuse_sc),
            out_shape=jax.ShapeDtypeStruct((out_rows, Np), out_dtype),
            grid=(Mp // TM, Np // TN),
            in_specs=in_specs,
            out_specs=pl.BlockSpec((blk_rows, TN), lambda i, j: (i, j)),
            compiler_params=pltpu.CompilerParams(
                dimension_semantics=("parallel", "parallel"),
                vmem_limit_bytes=vmem_limit),
        )(*args)

    in_specs = [
        pl.BlockSpec((TM, TK), lambda i, j, kk: (i, kk)),
        pl.BlockSpec((TK, TN), lambda i, j, kk: (kk, j)),
        pl.BlockSpec((1, TN), lambda i, j, kk: (0, j)),
    ]
    if fuse_sc:
        in_specs += [
            pl.BlockSpec((TM, Ks), lambda i, j, kk: (i, 0)),
            pl.BlockSpec((Ks, TN), lambda i, j, kk: (0, j)),
            pl.BlockSpec((1, TN), lambda i, j, kk: (0, j)),
        ]
    return pl.pallas_call(
        functools.partial(_mm_acc_kernel, relu=relu, pool8=pool8,
                          fuse_sc=fuse_sc),
        out_shape=jax.ShapeDtypeStruct((out_rows, Np), out_dtype),
        grid=(Mp // TM, Np // TN, Kp // TK),
        in_specs=in_specs,
        out_specs=pl.BlockSpec((blk_rows, TN), lambda i, j, kk: (i, j)),
        scratch_shapes=[pltpu.VMEM((TM, TN), jnp.float32)],
        compiler_params=pltpu.CompilerParams(
            dimension_semantics=("parallel", "parallel", "arbitrary"),
            vmem_limit_bytes=vmem_limit),
    )(*args)


def group_norm(x5, gn, groups, relu, eps=1e-5):
    """nn.GroupNorm semantics on channel-last (N, D, H, W, C); bf16 in/out."""
    N, D, H, W, C = x5.shape
    R = D * H * W
    x3 = x5.reshape(N, R, C)
    inv_count = 1.0 / float(R * (C // groups))
    y = pl.pallas_call(
        functools.partial(_gn_kernel, groups=groups, eps=eps, relu=relu,
                          inv_count=inv_count),
        out_shape=jax.ShapeDtypeStruct((N, R, C), jnp.bfloat16),
        in_specs=[pl.BlockSpec(memory_space=pltpu.MemorySpace.VMEM)] * 3,
        out_specs=pl.BlockSpec(memory_space=pltpu.MemorySpace.VMEM),
    )(x3, gn['g'], gn['b'])
    return y.reshape(N, D, H, W, C)


def conv3d_block(x5, p, stride, *, relu=True, shortcut=None):
    """Conv3dBlock on channel-last bf16 input:
    Conv3d(k, stride, padding=k//2) [-> AvgPool3d(2,2) if stride>1] -> ReLU,
    all epilogues fused into the matmul kernel.  `shortcut=(flat_in, sc_params)`
    additionally fuses the ResBlock's ReLU(1x1-conv) residual add.
    Returns channel-last bf16 (N, OD, OH, OW, cout)."""
    k = p['k']
    pad = k // 2
    N, D, H, W, C = x5.shape
    cout, K, Kp, Np = p['cout'], p['K'], p['Kp'], p['Np']
    assert K == k ** 3 * C

    xp = x5 if pad == 0 else jnp.pad(
        x5, ((0, 0), (pad, pad), (pad, pad), (pad, pad), (0, 0)))

    sc_args = None
    if shortcut is not None:
        sc_in, sc_p = shortcut
        if sc_in.shape[1] < sc_p['Kp']:
            sc_in = jnp.pad(sc_in, ((0, 0), (0, sc_p['Kp'] - sc_in.shape[1])))
        sc_args = (sc_in, sc_p['w'], sc_p['b'])

    if stride == 1:
        OD = D + 2 * pad - k + 1
        OH = H + 2 * pad - k + 1
        OW = W + 2 * pad - k + 1
        # TODO(synk): XLA-side im2col; move in-kernel at real volume sizes.
        cols = []
        for kd in range(k):
            for kh in range(k):
                for kw in range(k):
                    cols.append(xp[:, kd:kd + OD, kh:kh + OH, kw:kw + OW, :])
        if Kp > K:
            cols.append(jnp.zeros((N, OD, OH, OW, Kp - K), jnp.bfloat16))
        A = jnp.concatenate(cols, axis=-1).reshape(N * OD * OH * OW, Kp)
        M = N * OD * OH * OW
        out = matmul_fused(A, p['w'], p['b'], relu=relu, shortcut=sc_args)
        return out[:M, :cout].reshape(N, OD, OH, OW, cout)

    # stride > 1: conv(stride) -> AvgPool3d(2,2) -> ReLU; pool fused in the
    # epilogue via window-ordered im2col rows (8 consecutive rows = 1 window).
    assert sc_args is None
    s = stride
    OD = (D + 2 * pad - k) // s + 1
    OH = (H + 2 * pad - k) // s + 1
    OW = (W + 2 * pad - k) // s + 1
    PD, PH, PW = OD // 2, OH // 2, OW // 2        # AvgPool3d floor mode
    wins = []
    for wd in range(2):
        for wh in range(2):
            for ww in range(2):
                cols = []
                for kd in range(k):
                    for kh in range(k):
                        for kw in range(k):
                            d0 = kd + s * wd
                            h0 = kh + s * wh
                            w0 = kw + s * ww
                            cols.append(xp[:,
                                           d0:d0 + (PD - 1) * 2 * s + 1:2 * s,
                                           h0:h0 + (PH - 1) * 2 * s + 1:2 * s,
                                           w0:w0 + (PW - 1) * 2 * s + 1:2 * s, :])
                if Kp > K:
                    cols.append(jnp.zeros((N, PD, PH, PW, Kp - K), jnp.bfloat16))
                wins.append(jnp.concatenate(cols, axis=-1))
    A = jnp.stack(wins, axis=4).reshape(N * PD * PH * PW * 8, Kp)
    M = N * PD * PH * PW * 8
    out = matmul_fused(A, p['w'], p['b'], relu=relu, pool8=True)
    return out[:M // 8, :cout].reshape(N, PD, PH, PW, cout)


def dense_heads(feat, params, opts):
    """RegressionBlock core+out and ConfidenceBlock in one fused pallas_call."""
    Nb, F = feat.shape
    Fp = params['conf_fc1']['w'].shape[0]
    Nbp = _round_up(Nb, 8)
    feat_p = jnp.pad(feat.astype(jnp.bfloat16), ((0, Nbp - Nb), (0, Fp - F)))

    args = [feat_p]
    for lin in params['reg_core']:
        args += [lin['w'], lin['b']]
    args += [params['reg_out']['w'], params['reg_out']['b'],
             params['conf_fc1']['w'], params['conf_fc1']['b'],
             params['conf_fc2']['w'], params['conf_fc2']['b']]

    reg_np = params['reg_out']['w'].shape[1]
    conf_np = params['conf_fc2']['w'].shape[1]
    reg_p, conf_p = pl.pallas_call(
        functools.partial(_heads_kernel, n_core=len(params['reg_core'])),
        out_shape=(jax.ShapeDtypeStruct((Nbp, reg_np), jnp.float32),
                   jax.ShapeDtypeStruct((Nbp, conf_np), jnp.float32)),
        in_specs=[pl.BlockSpec(memory_space=pltpu.MemorySpace.VMEM)] * len(args),
        out_specs=(pl.BlockSpec(memory_space=pltpu.MemorySpace.VMEM),
                   pl.BlockSpec(memory_space=pltpu.MemorySpace.VMEM)),
    )(*args)
    T = opts['inner_timesteps']
    return reg_p[:Nb, :2], conf_p[:Nb, :T]


# --------------------------- parameter construction --------------------------

def init_conv(key, cin, cout, k):
    kw, kb = jax.random.split(key)
    fan_in = cin * k ** 3
    w = jax.random.normal(kw, (k, k, k, cin, cout), jnp.float32) * (fan_in ** -0.5)
    b = jax.random.normal(kb, (cout,), jnp.float32) * 0.01
    K = k ** 3 * cin
    Kp = _round_up(K, 128)
    if Kp > 1024:                      # acc path: 256-granular K tiles (v6e/v7x MXU)
        Kp = _round_up(K, 256)
    Np = _round_up(cout, 128)
    w_p = jnp.pad(w.reshape(K, cout),
                  ((0, Kp - K), (0, Np - cout))).astype(jnp.bfloat16)
    b_p = jnp.pad(b, (0, Np - cout)).reshape(1, Np)
    return {'w': w_p, 'b': b_p, 'k': k, 'cin': cin, 'cout': cout,
            'K': K, 'Kp': Kp, 'Np': Np}


def init_linear(key, fin, fout):
    kw, kb = jax.random.split(key)
    w = jax.random.normal(kw, (fin, fout), jnp.float32) * (fin ** -0.5)
    b = jax.random.normal(kb, (fout,), jnp.float32) * 0.01
    finp, foutp = _round_up(fin, 128), _round_up(fout, 128)
    return {'w': jnp.pad(w, ((0, finp - fin), (0, foutp - fout))).astype(jnp.bfloat16),
            'b': jnp.pad(b, (0, foutp - fout)).reshape(1, foutp),
            'fin': fin, 'fout': fout}


def init_gn(key, c):
    kg, kb = jax.random.split(key)
    g = 1.0 + 0.1 * jax.random.normal(kg, (c,), jnp.float32)
    b = 0.1 * jax.random.normal(kb, (c,), jnp.float32)
    return {'g': g.reshape(1, 1, c), 'b': b.reshape(1, 1, c)}


def build_params(key, input_shape, opts):
    channels, X, Y, Z = input_shape
    ki = iter(jax.random.split(key, 128))
    params = {}
    params['first'] = init_conv(next(ki), channels, opts['filters'], opts['kernel'])

    blocks = []
    ch = opts['filters']
    depth = opts['depth']
    for level in range(depth):
        nf = int(opts['multiplier'] ** level) * opts['filters']
        for _ in range(level):
            blocks.append(('res', {
                'shortcut': init_conv(next(ki), ch, nf, 1),
                'norm1': init_gn(next(ki), ch),
                'conv1': init_conv(next(ki), ch, nf, 3),
                'norm2': init_gn(next(ki), nf),
                'conv2': init_conv(next(ki), nf, nf, 3),
            }))
            ch = nf
        if level < depth - 1:
            blocks.append(('down', init_conv(next(ki), ch, nf, 3)))
            ch = nf
    params['down_blocks'] = blocks
    params['out_norm'] = init_gn(next(ki), ch)

    def ds(s):  # conv(k=3,s=2,p=1) then AvgPool3d(2,2), per downsample level
        for _ in range(depth - 1):
            s = ((s + 2 - 3) // 2 + 1) // 2
        return s
    bottleneck = ch * ds(X) * ds(Y) * ds(Z)

    reg_core = []
    fin = bottleneck
    for _ in range(opts['num_dense']):
        reg_core.append(init_linear(next(ki), fin, opts['num_fc']))
        fin = opts['num_fc']
    params['reg_core'] = reg_core
    params['reg_out'] = init_linear(next(ki), fin, 2)
    params['conf_fc1'] = init_linear(next(ki), bottleneck, opts['num_fc'])
    params['conf_fc2'] = init_linear(next(ki), opts['num_fc'], opts['inner_timesteps'])
    return params


# --------------------------------- forward -----------------------------------

def forward(x, params, opts):
    groups = opts['groups']
    depth = opts['depth']

    # Single layout change of the whole forward: NCDHW input -> channel-last bf16.
    x5 = jnp.transpose(x, (0, 2, 3, 4, 1)).astype(jnp.bfloat16)

    # first Conv3dBlock (stride 1, fused ReLU); Dropout3d -> identity in eval.
    x5 = conv3d_block(x5, params['first'], stride=1)

    # DownsampleBlock
    idx = 0
    blocks = params['down_blocks']
    for level in range(depth):
        for _ in range(level):
            _, bp = blocks[idx]; idx += 1
            N, D, H, W, C = x5.shape
            sc_in = x5.reshape(N * D * H * W, C)      # bf16 flat input of the 1x1 shortcut
            h = group_norm(x5, bp['norm1'], groups, relu=False)
            h = conv3d_block(h, bp['conv1'], stride=1)
            h = group_norm(h, bp['norm2'], groups, relu=False)
            # conv2 + ReLU + fused ReLU(1x1-shortcut) residual in one kernel.
            x5 = conv3d_block(h, bp['conv2'], stride=1,
                              shortcut=(sc_in, bp['shortcut']))
        if level < depth - 1:
            _, bp = blocks[idx]; idx += 1
            x5 = conv3d_block(x5, bp, stride=2)
    x5 = group_norm(x5, params['out_norm'], groups, relu=True)

    # Flatten (channel-last order; the feature permutation vs NCDHW-flatten is
    # absorbed by the randomly-initialized head weights -> same semantics).
    feat = x5.reshape(x5.shape[0], -1)

    # RegressionBlock: in eval mode every inner timestep sees identical features
    # and dropout is inactive, so compute once and broadcast (exact).
    reg_single, conf = dense_heads(feat, params, opts)
    T = opts['inner_timesteps']
    reg = jnp.broadcast_to(reg_single[:, None, :], (feat.shape[0], T, 2))
    return reg, conf


# ----------------------------------- main -------------------------------------

if __name__ == "__main__":
    opts = dict(filters=4, kernel=3, depth=2, multiplier=2, groups=2,
                num_dense=2, num_fc=16, inner_timesteps=4,
                dropout_rate=0.1, gaussian_noise=0, mc_dropout=False)
    input_shape = (4, 8, 8, 8)          # (channels, x, y, z)
    batch = 2

    key = jax.random.PRNGKey(0)
    k_param, k_data = jax.random.split(key)
    params = build_params(k_param, input_shape, opts)
    x = jax.random.normal(k_data, (batch,) + input_shape, jnp.float32)

    fwd = jax.jit(lambda inp: forward(inp, params, opts))
    reg, conf = fwd(x)
    reg, conf = jax.block_until_ready((reg, conf))

    assert reg.shape == (batch, opts['inner_timesteps'], 2), reg.shape
    assert conf.shape == (batch, opts['inner_timesteps']), conf.shape
    assert bool(jnp.all(jnp.isfinite(reg))) and bool(jnp.all(jnp.isfinite(conf)))
    print("KERNEL_OK")
</pallas_src>

<mosaic_0001>
module attributes {stable_mosaic.version = 11 : i64} {
  func.func @_mm_single_kernel(%arg0: i32, %arg1: i32, %arg2: memref<512x128xbf16, #tpu.memory_space<vmem>>, %arg3: memref<128x128xbf16, #tpu.memory_space<vmem>>, %arg4: memref<1x128xf32, #tpu.memory_space<vmem>>, %arg5: memref<512x128xbf16, #tpu.memory_space<vmem>>) attributes {dimension_semantics = [#tpu.dimension_semantics<parallel>, #tpu.dimension_semantics<parallel>], iteration_bounds = array<i64: 2, 1>, scalar_prefetch = 0 : i64, scratch_operands = 0 : i64, tpu.core_type = #tpu.core_type<tc>, window_params = [{transform_indices = @transform_0, window_bounds = array<i64: 512, 128>}, {transform_indices = @transform_1, window_bounds = array<i64: 128, 128>}, {transform_indices = @transform_2, window_bounds = array<i64: 1, 128>}, {transform_indices = @transform_3, window_bounds = array<i64: 512, 128>}]} {
    %c0 = arith.constant 0 : index
    %c0_0 = arith.constant 0 : index
    %0 = vector.load %arg2[%c0, %c0_0] : memref<512x128xbf16, #tpu.memory_space<vmem>>, vector<512x128xbf16>
    %c0_1 = arith.constant 0 : index
    %c0_2 = arith.constant 0 : index
    %1 = vector.load %arg3[%c0_1, %c0_2] : memref<128x128xbf16, #tpu.memory_space<vmem>>, vector<128x128xbf16>
    %cst = arith.constant dense<0.000000e+00> : vector<512x128xf32>
    %2 = tpu.matmul %0, %1, %cst {dimension_numbers = #tpu.dot_dimension_numbers<[1], [0], [0], [1], [0, 0, 1, 1], [], []>} : vector<512x128xbf16>, vector<128x128xbf16>, vector<512x128xf32> -> vector<512x128xf32>
    %c0_3 = arith.constant 0 : index
    %c0_4 = arith.constant 0 : index
    %3 = vector.load %arg4[%c0_3, %c0_4] : memref<1x128xf32, #tpu.memory_space<vmem>>, vector<1x128xf32>
    %4 = vector.broadcast %3 : vector<1x128xf32> to vector<512x128xf32>
    %5 = arith.addf %2, %4 : vector<512x128xf32>
    %cst_5 = arith.constant 0.000000e+00 : f32
    %6 = vector.broadcast %cst_5 : f32 to vector<512x128xf32>
    %7 = arith.maximumf %5, %6 : vector<512x128xf32>
    %8 = arith.truncf %7 : vector<512x128xf32> to vector<512x128xbf16>
    %c0_6 = arith.constant 0 : index
    %c0_7 = arith.constant 0 : index
    %9 = vector.load %arg5[%c0_6, %c0_7] : memref<512x128xbf16, #tpu.memory_space<vmem>>, vector<512x128xbf16>
    tpu.vector_store %arg5[%c0_6, %c0_7], %8 {strides = array<i32>} : memref<512x128xbf16, #tpu.memory_space<vmem>>, vector<512x128xbf16>,
    return
  }
  func.func @transform_0(%arg0: i32, %arg1: i32) -> (i32, i32) {
    %c0_i32 = arith.constant 0 : i32
    %c0_i32_0 = arith.constant 0 : i32
    return %arg0, %c0_i32 : i32, i32
  }
  func.func @transform_1(%arg0: i32, %arg1: i32) -> (i32, i32) {
    %c0_i32 = arith.constant 0 : i32
    %c0_i32_0 = arith.constant 0 : i32
    return %c0_i32, %arg1 : i32, i32
  }
  func.func @transform_2(%arg0: i32, %arg1: i32) -> (i32, i32) {
    %c0_i32 = arith.constant 0 : i32
    %c0_i32_0 = arith.constant 0 : i32
    return %c0_i32, %arg1 : i32, i32
  }
  func.func @transform_3(%arg0: i32, %arg1: i32) -> (i32, i32) {
    %c0_i32 = arith.constant 0 : i32
    return %arg0, %arg1 : i32, i32
  }
}

module attributes {stable_mosaic.version = 11 : i64} {
  func.func @_mm_single_kernel(%arg0: i32, %arg1: i32, %arg2: memref<128x128xbf16, #tpu.memory_space<vmem>>, %arg3: memref<128x128xbf16, #tpu.memory_space<vmem>>, %arg4: memref<1x128xf32, #tpu.memory_space<vmem>>, %arg5: memref<16x128xbf16, #tpu.memory_space<vmem>>) attributes {dimension_semantics = [#tpu.dimension_semantics<parallel>, #tpu.dimension_semantics<parallel>], iteration_bounds = array<i64: 1, 1>, scalar_prefetch = 0 : i64, scratch_operands = 0 : i64, tpu.core_type = #tpu.core_type<tc>, window_params = [{transform_indices = @transform_0, window_bounds = array<i64: 128, 128>}, {transform_indices = @transform_1, window_bounds = array<i64: 128, 128>}, {transform_indices = @transform_2, window_bounds = array<i64: 1, 128>}, {transform_indices = @transform_3, window_bounds = array<i64: 16, 128>}]} {
    %c0 = arith.constant 0 : index
    %c0_0 = arith.constant 0 : index
    %0 = vector.load %arg2[%c0, %c0_0] : memref<128x128xbf16, #tpu.memory_space<vmem>>, vector<128x128xbf16>
    %c0_1 = arith.constant 0 : index
    %c0_2 = arith.constant 0 : index
    %1 = vector.load %arg3[%c0_1, %c0_2] : memref<128x128xbf16, #tpu.memory_space<vmem>>, vector<128x128xbf16>
    %cst = arith.constant dense<0.000000e+00> : vector<128x128xf32>
    %2 = tpu.matmul %0, %1, %cst {dimension_numbers = #tpu.dot_dimension_numbers<[1], [0], [0], [1], [0, 0, 1, 1], [], []>} : vector<128x128xbf16>, vector<128x128xbf16>, vector<128x128xf32> -> vector<128x128xf32>
    %c0_3 = arith.constant 0 : index
    %c0_4 = arith.constant 0 : index
    %3 = vector.load %arg4[%c0_3, %c0_4] : memref<1x128xf32, #tpu.memory_space<vmem>>, vector<1x128xf32>
    %4 = vector.broadcast %3 : vector<1x128xf32> to vector<128x128xf32>
    %5 = arith.addf %2, %4 : vector<128x128xf32>
    %6 = vector.shape_cast %5 : vector<128x128xf32> to vector<16x8x128xf32>
    %cst_5 = arith.constant dense<0.000000e+00> : vector<16x128xf32>
    %7 = vector.multi_reduction <add>, %6, %cst_5 [1] : vector<16x8x128xf32> to vector<16x128xf32>
    %cst_6 = arith.constant 8.000000e+00 : f32
    %8 = vector.broadcast %cst_6 : f32 to vector<16x128xf32>
    %9 = arith.divf %7, %8 : vector<16x128xf32>
    %cst_7 = arith.constant 0.000000e+00 : f32
    %10 = vector.broadcast %cst_7 : f32 to vector<16x128xf32>
    %11 = arith.maximumf %9, %10 : vector<16x128xf32>
    %12 = arith.truncf %11 : vector<16x128xf32> to vector<16x128xbf16>
    %c0_8 = arith.constant 0 : index
    %c0_9 = arith.constant 0 : index
    %13 = vector.load %arg5[%c0_8, %c0_9] : memref<16x128xbf16, #tpu.memory_space<vmem>>, vector<16x128xbf16>
    tpu.vector_store %arg5[%c0_8, %c0_9], %12 {strides = array<i32>} : memref<16x128xbf16, #tpu.memory_space<vmem>>, vector<16x128xbf16>,
    return
  }
  func.func @transform_0(%arg0: i32, %arg1: i32) -> (i32, i32) {
    %c0_i32 = arith.constant 0 : i32
    %c0_i32_0 = arith.constant 0 : i32
    return %arg0, %c0_i32 : i32, i32
  }
  func.func @transform_1(%arg0: i32, %arg1: i32) -> (i32, i32) {
    %c0_i32 = arith.constant 0 : i32
    %c0_i32_0 = arith.constant 0 : i32
    return %c0_i32, %arg1 : i32, i32
  }
  func.func @transform_2(%arg0: i32, %arg1: i32) -> (i32, i32) {
    %c0_i32 = arith.constant 0 : i32
    %c0_i32_0 = arith.constant 0 : i32
    return %c0_i32, %arg1 : i32, i32
  }
  func.func @transform_3(%arg0: i32, %arg1: i32) -> (i32, i32) {
    %c0_i32 = arith.constant 0 : i32
    return %arg0, %arg1 : i32, i32
  }
}

module attributes {stable_mosaic.version = 11 : i64} {
  func.func @_mm_single_kernel(%arg0: i32, %arg1: i32, %arg2: memref<16x128xbf16, #tpu.memory_space<vmem>>, %arg3: memref<128x128xbf16, #tpu.memory_space<vmem>>, %arg4: memref<1x128xf32, #tpu.memory_space<vmem>>, %arg5: memref<16x128xbf16, #tpu.memory_space<vmem>>) attributes {dimension_semantics = [#tpu.dimension_semantics<parallel>, #tpu.dimension_semantics<parallel>], iteration_bounds = array<i64: 1, 1>, scalar_prefetch = 0 : i64, scratch_operands = 0 : i64, tpu.core_type = #tpu.core_type<tc>, window_params = [{transform_indices = @transform_0, window_bounds = array<i64: 16, 128>}, {transform_indices = @transform_1, window_bounds = array<i64: 128, 128>}, {transform_indices = @transform_2, window_bounds = array<i64: 1, 128>}, {transform_indices = @transform_3, window_bounds = array<i64: 16, 128>}]} {
    %c0 = arith.constant 0 : index
    %c0_0 = arith.constant 0 : index
    %0 = vector.load %arg2[%c0, %c0_0] : memref<16x128xbf16, #tpu.memory_space<vmem>>, vector<16x128xbf16>
    %c0_1 = arith.constant 0 : index
    %c0_2 = arith.constant 0 : index
    %1 = vector.load %arg3[%c0_1, %c0_2] : memref<128x128xbf16, #tpu.memory_space<vmem>>, vector<128x128xbf16>
    %cst = arith.constant dense<0.000000e+00> : vector<16x128xf32>
    %2 = tpu.matmul %0, %1, %cst {dimension_numbers = #tpu.dot_dimension_numbers<[1], [0], [0], [1], [0, 0, 1, 1], [], []>} : vector<16x128xbf16>, vector<128x128xbf16>, vector<16x128xf32> -> vector<16x128xf32>
    %c0_3 = arith.constant 0 : index
    %c0_4 = arith.constant 0 : index
    %3 = vector.load %arg4[%c0_3, %c0_4] : memref<1x128xf32, #tpu.memory_space<vmem>>, vector<1x128xf32>
    %4 = vector.broadcast %3 : vector<1x128xf32> to vector<16x128xf32>
    %5 = arith.addf %2, %4 : vector<16x128xf32>
    %cst_5 = arith.constant 0.000000e+00 : f32
    %6 = vector.broadcast %cst_5 : f32 to vector<16x128xf32>
    %7 = arith.maximumf %5, %6 : vector<16x128xf32>
    %8 = arith.truncf %7 : vector<16x128xf32> to vector<16x128xbf16>
    %c0_6 = arith.constant 0 : index
    %c0_7 = arith.constant 0 : index
    %9 = vector.load %arg5[%c0_6, %c0_7] : memref<16x128xbf16, #tpu.memory_space<vmem>>, vector<16x128xbf16>
    tpu.vector_store %arg5[%c0_6, %c0_7], %8 {strides = array<i32>} : memref<16x128xbf16, #tpu.memory_space<vmem>>, vector<16x128xbf16>,
    return
  }
  func.func @transform_0(%arg0: i32, %arg1: i32) -> (i32, i32) {
    %c0_i32 = arith.constant 0 : i32
    %c0_i32_0 = arith.constant 0 : i32
    return %arg0, %c0_i32 : i32, i32
  }
  func.func @transform_1(%arg0: i32, %arg1: i32) -> (i32, i32) {
    %c0_i32 = arith.constant 0 : i32
    %c0_i32_0 = arith.constant 0 : i32
    return %c0_i32, %arg1 : i32, i32
  }
  func.func @transform_2(%arg0: i32, %arg1: i32) -> (i32, i32) {
    %c0_i32 = arith.constant 0 : i32
    %c0_i32_0 = arith.constant 0 : i32
    return %c0_i32, %arg1 : i32, i32
  }
  func.func @transform_3(%arg0: i32, %arg1: i32) -> (i32, i32) {
    %c0_i32 = arith.constant 0 : i32
    return %arg0, %arg1 : i32, i32
  }
}

module attributes {stable_mosaic.version = 11 : i64} {
  func.func @_gn_kernel(%arg0: memref<2x8x4xbf16, #tpu.memory_space<vmem>>, %arg1: memref<1x1x4xf32, #tpu.memory_space<vmem>>, %arg2: memref<1x1x4xf32, #tpu.memory_space<vmem>>, %arg3: memref<2x8x4xbf16, #tpu.memory_space<vmem>>) attributes {dimension_semantics = [], scalar_prefetch = 0 : i64, scratch_operands = 0 : i64, tpu.core_type = #tpu.core_type<tc>} {
    %c0 = arith.constant 0 : index
    %c0_0 = arith.constant 0 : index
    %c0_1 = arith.constant 0 : index
    %0 = vector.load %arg0[%c0, %c0_0, %c0_1] : memref<2x8x4xbf16, #tpu.memory_space<vmem>>, vector<2x8x4xbf16>
    %1 = arith.extf %0 : vector<2x8x4xbf16> to vector<2x8x4xf32>
    %2 = tpu.iota {dimensions = array<i32: 2>} : vector<1x1x4xi32>
    %cst = arith.constant 0.000000e+00 : f32
    %3 = vector.broadcast %cst : f32 to vector<2x1x4xf32>
    %cst_2 = arith.constant 0.000000e+00 : f32
    %4 = vector.broadcast %cst_2 : f32 to vector<2x1x4xf32>
    %5 = vector.extract_strided_slice %1 {offsets = [0, 0, 0], sizes = [2, 8, 2], strides = [1, 1, 1]} : vector<2x8x4xf32> to vector<2x8x2xf32>
    %cst_3 = arith.constant dense<0.000000e+00> : vector<2x8xf32>
    %6 = vector.multi_reduction <add>, %5, %cst_3 [2] : vector<2x8x2xf32> to vector<2x8xf32>
    %7 = vector.shape_cast %6 : vector<2x8xf32> to vector<2x8x1xf32>
    %cst_4 = arith.constant dense<0.000000e+00> : vector<2x1xf32>
    %8 = vector.multi_reduction <add>, %7, %cst_4 [1] : vector<2x8x1xf32> to vector<2x1xf32>
    %9 = vector.shape_cast %8 : vector<2x1xf32> to vector<2x1x1xf32>
    %cst_5 = arith.constant 6.250000e-02 : f32
    %10 = vector.broadcast %cst_5 : f32 to vector<2x1x1xf32>
    %11 = arith.mulf %9, %10 : vector<2x1x1xf32>
    %12 = arith.mulf %5, %5 : vector<2x8x2xf32>
    %cst_6 = arith.constant dense<0.000000e+00> : vector<2x8xf32>
    %13 = vector.multi_reduction <add>, %12, %cst_6 [2] : vector<2x8x2xf32> to vector<2x8xf32>
    %14 = vector.shape_cast %13 : vector<2x8xf32> to vector<2x8x1xf32>
    %cst_7 = arith.constant dense<0.000000e+00> : vector<2x1xf32>
    %15 = vector.multi_reduction <add>, %14, %cst_7 [1] : vector<2x8x1xf32> to vector<2x1xf32>
    %16 = vector.shape_cast %15 : vector<2x1xf32> to vector<2x1x1xf32>
    %cst_8 = arith.constant 6.250000e-02 : f32
    %17 = vector.broadcast %cst_8 : f32 to vector<2x1x1xf32>
    %18 = arith.mulf %16, %17 : vector<2x1x1xf32>
    %19 = arith.mulf %11, %11 : vector<2x1x1xf32>
    %20 = arith.subf %18, %19 : vector<2x1x1xf32>
    %cst_9 = arith.constant 9.99999974E-6 : f32
    %21 = vector.broadcast %cst_9 : f32 to vector<2x1x1xf32>
    %22 = arith.addf %20, %21 : vector<2x1x1xf32>
    %23 = math.rsqrt %22 : vector<2x1x1xf32>
    %c0_i32 = arith.constant 0 : i32
    %24 = vector.broadcast %c0_i32 : i32 to vector<1x1x4xi32>
    %25 = arith.cmpi sge, %2, %24 : vector<1x1x4xi32>
    %c2_i32 = arith.constant 2 : i32
    %26 = vector.broadcast %c2_i32 : i32 to vector<1x1x4xi32>
    %27 = arith.cmpi slt, %2, %26 : vector<1x1x4xi32>
    %28 = arith.andi %25, %27 : vector<1x1x4xi1>
    %cst_10 = arith.constant 0.000000e+00 : f32
    %29 = vector.shape_cast %28 : vector<1x1x4xi1> to vector<1x1x4xi1>
    %30 = vector.broadcast %29 : vector<1x1x4xi1> to vector<2x1x4xi1>
    %31 = vector.shape_cast %11 : vector<2x1x1xf32> to vector<2x1x1xf32>
    %32 = vector.broadcast %31 : vector<2x1x1xf32> to vector<2x1x4xf32>
    %33 = vector.broadcast %cst_10 : f32 to vector<2x1x4xf32>
    %34 = arith.select %30, %32, %33 : vector<2x1x4xi1>, vector<2x1x4xf32>
    %35 = arith.addf %3, %34 : vector<2x1x4xf32>
    %cst_11 = arith.constant 0.000000e+00 : f32
    %36 = vector.shape_cast %28 : vector<1x1x4xi1> to vector<1x1x4xi1>
    %37 = vector.broadcast %36 : vector<1x1x4xi1> to vector<2x1x4xi1>
    %38 = vector.shape_cast %23 : vector<2x1x1xf32> to vector<2x1x1xf32>
    %39 = vector.broadcast %38 : vector<2x1x1xf32> to vector<2x1x4xf32>
    %40 = vector.broadcast %cst_11 : f32 to vector<2x1x4xf32>
    %41 = arith.select %37, %39, %40 : vector<2x1x4xi1>, vector<2x1x4xf32>
    %42 = arith.addf %4, %41 : vector<2x1x4xf32>
    %43 = vector.extract_strided_slice %1 {offsets = [0, 0, 2], sizes = [2, 8, 2], strides = [1, 1, 1]} : vector<2x8x4xf32> to vector<2x8x2xf32>
    %cst_12 = arith.constant dense<0.000000e+00> : vector<2x8xf32>
    %44 = vector.multi_reduction <add>, %43, %cst_12 [2] : vector<2x8x2xf32> to vector<2x8xf32>
    %45 = vector.shape_cast %44 : vector<2x8xf32> to vector<2x8x1xf32>
    %cst_13 = arith.constant dense<0.000000e+00> : vector<2x1xf32>
    %46 = vector.multi_reduction <add>, %45, %cst_13 [1] : vector<2x8x1xf32> to vector<2x1xf32>
    %47 = vector.shape_cast %46 : vector<2x1xf32> to vector<2x1x1xf32>
    %cst_14 = arith.constant 6.250000e-02 : f32
    %48 = vector.broadcast %cst_14 : f32 to vector<2x1x1xf32>
    %49 = arith.mulf %47, %48 : vector<2x1x1xf32>
    %50 = arith.mulf %43, %43 : vector<2x8x2xf32>
    %cst_15 = arith.constant dense<0.000000e+00> : vector<2x8xf32>
    %51 = vector.multi_reduction <add>, %50, %cst_15 [2] : vector<2x8x2xf32> to vector<2x8xf32>
    %52 = vector.shape_cast %51 : vector<2x8xf32> to vector<2x8x1xf32>
    %cst_16 = arith.constant dense<0.000000e+00> : vector<2x1xf32>
    %53 = vector.multi_reduction <add>, %52, %cst_16 [1] : vector<2x8x1xf32> to vector<2x1xf32>
    %54 = vector.shape_cast %53 : vector<2x1xf32> to vector<2x1x1xf32>
    %cst_17 = arith.constant 6.250000e-02 : f32
    %55 = vector.broadcast %cst_17 : f32 to vector<2x1x1xf32>
    %56 = arith.mulf %54, %55 : vector<2x1x1xf32>
    %57 = arith.mulf %49, %49 : vector<2x1x1xf32>
    %58 = arith.subf %56, %57 : vector<2x1x1xf32>
    %cst_18 = arith.constant 9.99999974E-6 : f32
    %59 = vector.broadcast %cst_18 : f32 to vector<2x1x1xf32>
    %60 = arith.addf %58, %59 : vector<2x1x1xf32>
    %61 = math.rsqrt %60 : vector<2x1x1xf32>
    %c2_i32_19 = arith.constant 2 : i32
    %62 = vector.broadcast %c2_i32_19 : i32 to vector<1x1x4xi32>
    %63 = arith.cmpi sge, %2, %62 : vector<1x1x4xi32>
    %c4_i32 = arith.constant 4 : i32
    %64 = vector.broadcast %c4_i32 : i32 to vector<1x1x4xi32>
    %65 = arith.cmpi slt, %2, %64 : vector<1x1x4xi32>
    %66 = arith.andi %63, %65 : vector<1x1x4xi1>
    %cst_20 = arith.constant 0.000000e+00 : f32
    %67 = vector.shape_cast %66 : vector<1x1x4xi1> to vector<1x1x4xi1>
    %68 = vector.broadcast %67 : vector<1x1x4xi1> to vector<2x1x4xi1>
    %69 = vector.shape_cast %49 : vector<2x1x1xf32> to vector<2x1x1xf32>
    %70 = vector.broadcast %69 : vector<2x1x1xf32> to vector<2x1x4xf32>
    %71 = vector.broadcast %cst_20 : f32 to vector<2x1x4xf32>
    %72 = arith.select %68, %70, %71 : vector<2x1x4xi1>, vector<2x1x4xf32>
    %73 = arith.addf %35, %72 : vector<2x1x4xf32>
    %cst_21 = arith.constant 0.000000e+00 : f32
    %74 = vector.shape_cast %66 : vector<1x1x4xi1> to vector<1x1x4xi1>
    %75 = vector.broadcast %74 : vector<1x1x4xi1> to vector<2x1x4xi1>
    %76 = vector.shape_cast %61 : vector<2x1x1xf32> to vector<2x1x1xf32>
    %77 = vector.broadcast %76 : vector<2x1x1xf32> to vector<2x1x4xf32>
    %78 = vector.broadcast %cst_21 : f32 to vector<2x1x4xf32>
    %79 = arith.select %75, %77, %78 : vector<2x1x4xi1>, vector<2x1x4xf32>
    %80 = arith.addf %42, %79 : vector<2x1x4xf32>
    %c0_22 = arith.constant 0 : index
    %c0_23 = arith.constant 0 : index
    %c0_24 = arith.constant 0 : index
    %81 = vector.load %arg1[%c0_22, %c0_23, %c0_24] : memref<1x1x4xf32, #tpu.memory_space<vmem>>, vector<1x1x4xf32>
    %82 = vector.broadcast %81 : vector<1x1x4xf32> to vector<2x1x4xf32>
    %83 = arith.mulf %82, %80 : vector<2x1x4xf32>
    %c0_25 = arith.constant 0 : index
    %c0_26 = arith.constant 0 : index
    %c0_27 = arith.constant 0 : index
    %84 = vector.load %arg2[%c0_25, %c0_26, %c0_27] : memref<1x1x4xf32, #tpu.memory_space<vmem>>, vector<1x1x4xf32>
    %85 = arith.mulf %73, %83 : vector<2x1x4xf32>
    %86 = vector.broadcast %84 : vector<1x1x4xf32> to vector<2x1x4xf32>
    %87 = arith.subf %86, %85 : vector<2x1x4xf32>
    %88 = vector.broadcast %83 : vector<2x1x4xf32> to vector<2x8x4xf32>
    %89 = arith.mulf %1, %88 : vector<2x8x4xf32>
    %90 = vector.broadcast %87 : vector<2x1x4xf32> to vector<2x8x4xf32>
    %91 = arith.addf %89, %90 : vector<2x8x4xf32>
    %92 = arith.truncf %91 : vector<2x8x4xf32> to vector<2x8x4xbf16>
    %c0_28 = arith.constant 0 : index
    %c0_29 = arith.constant 0 : index
    %c0_30 = arith.constant 0 : index
    %93 = vector.load %arg3[%c0_28, %c0_29, %c0_30] : memref<2x8x4xbf16, #tpu.memory_space<vmem>>, vector<2x8x4xbf16>
    tpu.vector_store %arg3[%c0_28, %c0_29, %c0_30], %92 {strides = array<i32>} : memref<2x8x4xbf16, #tpu.memory_space<vmem>>, vector<2x8x4xbf16>,
    return
  }
}

module attributes {stable_mosaic.version = 11 : i64} {
  func.func @_gn_kernel(%arg0: memref<2x8x8xbf16, #tpu.memory_space<vmem>>, %arg1: memref<1x1x8xf32, #tpu.memory_space<vmem>>, %arg2: memref<1x1x8xf32, #tpu.memory_space<vmem>>, %arg3: memref<2x8x8xbf16, #tpu.memory_space<vmem>>) attributes {dimension_semantics = [], scalar_prefetch = 0 : i64, scratch_operands = 0 : i64, tpu.core_type = #tpu.core_type<tc>} {
    %c0 = arith.constant 0 : index
    %c0_0 = arith.constant 0 : index
    %c0_1 = arith.constant 0 : index
    %0 = vector.load %arg0[%c0, %c0_0, %c0_1] : memref<2x8x8xbf16, #tpu.memory_space<vmem>>, vector<2x8x8xbf16>
    %1 = arith.extf %0 : vector<2x8x8xbf16> to vector<2x8x8xf32>
    %2 = tpu.iota {dimensions = array<i32: 2>} : vector<1x1x8xi32>
    %cst = arith.constant 0.000000e+00 : f32
    %3 = vector.broadcast %cst : f32 to vector<2x1x8xf32>
    %cst_2 = arith.constant 0.000000e+00 : f32
    %4 = vector.broadcast %cst_2 : f32 to vector<2x1x8xf32>
    %5 = vector.extract_strided_slice %1 {offsets = [0, 0, 0], sizes = [2, 8, 4], strides = [1, 1, 1]} : vector<2x8x8xf32> to vector<2x8x4xf32>
    %cst_3 = arith.constant dense<0.000000e+00> : vector<2x8xf32>
    %6 = vector.multi_reduction <add>, %5, %cst_3 [2] : vector<2x8x4xf32> to vector<2x8xf32>
    %7 = vector.shape_cast %6 : vector<2x8xf32> to vector<2x8x1xf32>
    %cst_4 = arith.constant dense<0.000000e+00> : vector<2x1xf32>
    %8 = vector.multi_reduction <add>, %7, %cst_4 [1] : vector<2x8x1xf32> to vector<2x1xf32>
    %9 = vector.shape_cast %8 : vector<2x1xf32> to vector<2x1x1xf32>
    %cst_5 = arith.constant 3.125000e-02 : f32
    %10 = vector.broadcast %cst_5 : f32 to vector<2x1x1xf32>
    %11 = arith.mulf %9, %10 : vector<2x1x1xf32>
    %12 = arith.mulf %5, %5 : vector<2x8x4xf32>
    %cst_6 = arith.constant dense<0.000000e+00> : vector<2x8xf32>
    %13 = vector.multi_reduction <add>, %12, %cst_6 [2] : vector<2x8x4xf32> to vector<2x8xf32>
    %14 = vector.shape_cast %13 : vector<2x8xf32> to vector<2x8x1xf32>
    %cst_7 = arith.constant dense<0.000000e+00> : vector<2x1xf32>
    %15 = vector.multi_reduction <add>, %14, %cst_7 [1] : vector<2x8x1xf32> to vector<2x1xf32>
    %16 = vector.shape_cast %15 : vector<2x1xf32> to vector<2x1x1xf32>
    %cst_8 = arith.constant 3.125000e-02 : f32
    %17 = vector.broadcast %cst_8 : f32 to vector<2x1x1xf32>
    %18 = arith.mulf %16, %17 : vector<2x1x1xf32>
    %19 = arith.mulf %11, %11 : vector<2x1x1xf32>
    %20 = arith.subf %18, %19 : vector<2x1x1xf32>
    %cst_9 = arith.constant 9.99999974E-6 : f32
    %21 = vector.broadcast %cst_9 : f32 to vector<2x1x1xf32>
    %22 = arith.addf %20, %21 : vector<2x1x1xf32>
    %23 = math.rsqrt %22 : vector<2x1x1xf32>
    %c0_i32 = arith.constant 0 : i32
    %24 = vector.broadcast %c0_i32 : i32 to vector<1x1x8xi32>
    %25 = arith.cmpi sge, %2, %24 : vector<1x1x8xi32>
    %c4_i32 = arith.constant 4 : i32
    %26 = vector.broadcast %c4_i32 : i32 to vector<1x1x8xi32>
    %27 = arith.cmpi slt, %2, %26 : vector<1x1x8xi32>
    %28 = arith.andi %25, %27 : vector<1x1x8xi1>
    %cst_10 = arith.constant 0.000000e+00 : f32
    %29 = vector.shape_cast %28 : vector<1x1x8xi1> to vector<1x1x8xi1>
    %30 = vector.broadcast %29 : vector<1x1x8xi1> to vector<2x1x8xi1>
    %31 = vector.shape_cast %11 : vector<2x1x1xf32> to vector<2x1x1xf32>
    %32 = vector.broadcast %31 : vector<2x1x1xf32> to vector<2x1x8xf32>
    %33 = vector.broadcast %cst_10 : f32 to vector<2x1x8xf32>
    %34 = arith.select %30, %32, %33 : vector<2x1x8xi1>, vector<2x1x8xf32>
    %35 = arith.addf %3, %34 : vector<2x1x8xf32>
    %cst_11 = arith.constant 0.000000e+00 : f32
    %36 = vector.shape_cast %28 : vector<1x1x8xi1> to vector<1x1x8xi1>
    %37 = vector.broadcast %36 : vector<1x1x8xi1> to vector<2x1x8xi1>
    %38 = vector.shape_cast %23 : vector<2x1x1xf32> to vector<2x1x1xf32>
    %39 = vector.broadcast %38 : vector<2x1x1xf32> to vector<2x1x8xf32>
    %40 = vector.broadcast %cst_11 : f32 to vector<2x1x8xf32>
    %41 = arith.select %37, %39, %40 : vector<2x1x8xi1>, vector<2x1x8xf32>
    %42 = arith.addf %4, %41 : vector<2x1x8xf32>
    %43 = vector.extract_strided_slice %1 {offsets = [0, 0, 4], sizes = [2, 8, 4], strides = [1, 1, 1]} : vector<2x8x8xf32> to vector<2x8x4xf32>
    %cst_12 = arith.constant dense<0.000000e+00> : vector<2x8xf32>
    %44 = vector.multi_reduction <add>, %43, %cst_12 [2] : vector<2x8x4xf32> to vector<2x8xf32>
    %45 = vector.shape_cast %44 : vector<2x8xf32> to vector<2x8x1xf32>
    %cst_13 = arith.constant dense<0.000000e+00> : vector<2x1xf32>
    %46 = vector.multi_reduction <add>, %45, %cst_13 [1] : vector<2x8x1xf32> to vector<2x1xf32>
    %47 = vector.shape_cast %46 : vector<2x1xf32> to vector<2x1x1xf32>
    %cst_14 = arith.constant 3.125000e-02 : f32
    %48 = vector.broadcast %cst_14 : f32 to vector<2x1x1xf32>
    %49 = arith.mulf %47, %48 : vector<2x1x1xf32>
    %50 = arith.mulf %43, %43 : vector<2x8x4xf32>
    %cst_15 = arith.constant dense<0.000000e+00> : vector<2x8xf32>
    %51 = vector.multi_reduction <add>, %50, %cst_15 [2] : vector<2x8x4xf32> to vector<2x8xf32>
    %52 = vector.shape_cast %51 : vector<2x8xf32> to vector<2x8x1xf32>
    %cst_16 = arith.constant dense<0.000000e+00> : vector<2x1xf32>
    %53 = vector.multi_reduction <add>, %52, %cst_16 [1] : vector<2x8x1xf32> to vector<2x1xf32>
    %54 = vector.shape_cast %53 : vector<2x1xf32> to vector<2x1x1xf32>
    %cst_17 = arith.constant 3.125000e-02 : f32
    %55 = vector.broadcast %cst_17 : f32 to vector<2x1x1xf32>
    %56 = arith.mulf %54, %55 : vector<2x1x1xf32>
    %57 = arith.mulf %49, %49 : vector<2x1x1xf32>
    %58 = arith.subf %56, %57 : vector<2x1x1xf32>
    %cst_18 = arith.constant 9.99999974E-6 : f32
    %59 = vector.broadcast %cst_18 : f32 to vector<2x1x1xf32>
    %60 = arith.addf %58, %59 : vector<2x1x1xf32>
    %61 = math.rsqrt %60 : vector<2x1x1xf32>
    %c4_i32_19 = arith.constant 4 : i32
    %62 = vector.broadcast %c4_i32_19 : i32 to vector<1x1x8xi32>
    %63 = arith.cmpi sge, %2, %62 : vector<1x1x8xi32>
    %c8_i32 = arith.constant 8 : i32
    %64 = vector.broadcast %c8_i32 : i32 to vector<1x1x8xi32>
    %65 = arith.cmpi slt, %2, %64 : vector<1x1x8xi32>
    %66 = arith.andi %63, %65 : vector<1x1x8xi1>
    %cst_20 = arith.constant 0.000000e+00 : f32
    %67 = vector.shape_cast %66 : vector<1x1x8xi1> to vector<1x1x8xi1>
    %68 = vector.broadcast %67 : vector<1x1x8xi1> to vector<2x1x8xi1>
    %69 = vector.shape_cast %49 : vector<2x1x1xf32> to vector<2x1x1xf32>
    %70 = vector.broadcast %69 : vector<2x1x1xf32> to vector<2x1x8xf32>
    %71 = vector.broadcast %cst_20 : f32 to vector<2x1x8xf32>
    %72 = arith.select %68, %70, %71 : vector<2x1x8xi1>, vector<2x1x8xf32>
    %73 = arith.addf %35, %72 : vector<2x1x8xf32>
    %cst_21 = arith.constant 0.000000e+00 : f32
    %74 = vector.shape_cast %66 : vector<1x1x8xi1> to vector<1x1x8xi1>
    %75 = vector.broadcast %74 : vector<1x1x8xi1> to vector<2x1x8xi1>
    %76 = vector.shape_cast %61 : vector<2x1x1xf32> to vector<2x1x1xf32>
    %77 = vector.broadcast %76 : vector<2x1x1xf32> to vector<2x1x8xf32>
    %78 = vector.broadcast %cst_21 : f32 to vector<2x1x8xf32>
    %79 = arith.select %75, %77, %78 : vector<2x1x8xi1>, vector<2x1x8xf32>
    %80 = arith.addf %42, %79 : vector<2x1x8xf32>
    %c0_22 = arith.constant 0 : index
    %c0_23 = arith.constant 0 : index
    %c0_24 = arith.constant 0 : index
    %81 = vector.load %arg1[%c0_22, %c0_23, %c0_24] : memref<1x1x8xf32, #tpu.memory_space<vmem>>, vector<1x1x8xf32>
    %82 = vector.broadcast %81 : vector<1x1x8xf32> to vector<2x1x8xf32>
    %83 = arith.mulf %82, %80 : vector<2x1x8xf32>
    %c0_25 = arith.constant 0 : index
    %c0_26 = arith.constant 0 : index
    %c0_27 = arith.constant 0 : index
    %84 = vector.load %arg2[%c0_25, %c0_26, %c0_27] : memref<1x1x8xf32, #tpu.memory_space<vmem>>, vector<1x1x8xf32>
    %85 = arith.mulf %73, %83 : vector<2x1x8xf32>
    %86 = vector.broadcast %84 : vector<1x1x8xf32> to vector<2x1x8xf32>
    %87 = arith.subf %86, %85 : vector<2x1x8xf32>
    %88 = vector.broadcast %83 : vector<2x1x8xf32> to vector<2x8x8xf32>
    %89 = arith.mulf %1, %88 : vector<2x8x8xf32>
    %90 = vector.broadcast %87 : vector<2x1x8xf32> to vector<2x8x8xf32>
    %91 = arith.addf %89, %90 : vector<2x8x8xf32>
    %92 = arith.truncf %91 : vector<2x8x8xf32> to vector<2x8x8xbf16>
    %c0_28 = arith.constant 0 : index
    %c0_29 = arith.constant 0 : index
    %c0_30 = arith.constant 0 : index
    %93 = vector.load %arg3[%c0_28, %c0_29, %c0_30] : memref<2x8x8xbf16, #tpu.memory_space<vmem>>, vector<2x8x8xbf16>
    tpu.vector_store %arg3[%c0_28, %c0_29, %c0_30], %92 {strides = array<i32>} : memref<2x8x8xbf16, #tpu.memory_space<vmem>>, vector<2x8x8xbf16>,
    return
  }
}

module attributes {stable_mosaic.version = 11 : i64} {
  func.func @_mm_single_kernel(%arg0: i32, %arg1: i32, %arg2: memref<16x256xbf16, #tpu.memory_space<vmem>>, %arg3: memref<256x128xbf16, #tpu.memory_space<vmem>>, %arg4: memref<1x128xf32, #tpu.memory_space<vmem>>, %arg5: memref<16x128xbf16, #tpu.memory_space<vmem>>, %arg6: memref<128x128xbf16, #tpu.memory_space<vmem>>, %arg7: memref<1x128xf32, #tpu.memory_space<vmem>>, %arg8: memref<16x128xbf16, #tpu.memory_space<vmem>>) attributes {dimension_semantics = [#tpu.dimension_semantics<parallel>, #tpu.dimension_semantics<parallel>], iteration_bounds = array<i64: 1, 1>, scalar_prefetch = 0 : i64, scratch_operands = 0 : i64, tpu.core_type = #tpu.core_type<tc>, window_params = [{transform_indices = @transform_0, window_bounds = array<i64: 16, 256>}, {transform_indices = @transform_1, window_bounds = array<i64: 256, 128>}, {transform_indices = @transform_2, window_bounds = array<i64: 1, 128>}, {transform_indices = @transform_3, window_bounds = array<i64: 16, 128>}, {transform_indices = @transform_4, window_bounds = array<i64: 128, 128>}, {transform_indices = @transform_5, window_bounds = array<i64: 1, 128>}, {transform_indices = @transform_6, window_bounds = array<i64: 16, 128>}]} {
    %c0 = arith.constant 0 : index
    %c0_0 = arith.constant 0 : index
    %0 = vector.load %arg2[%c0, %c0_0] : memref<16x256xbf16, #tpu.memory_space<vmem>>, vector<16x256xbf16>
    %c0_1 = arith.constant 0 : index
    %c0_2 = arith.constant 0 : index
    %1 = vector.load %arg3[%c0_1, %c0_2] : memref<256x128xbf16, #tpu.memory_space<vmem>>, vector<256x128xbf16>
    %cst = arith.constant dense<0.000000e+00> : vector<16x128xf32>
    %2 = tpu.matmul %0, %1, %cst {dimension_numbers = #tpu.dot_dimension_numbers<[1], [0], [0], [1], [0, 0, 1, 1], [], []>} : vector<16x256xbf16>, vector<256x128xbf16>, vector<16x128xf32> -> vector<16x128xf32>
    %c0_3 = arith.constant 0 : index
    %c0_4 = arith.constant 0 : index
    %3 = vector.load %arg4[%c0_3, %c0_4] : memref<1x128xf32, #tpu.memory_space<vmem>>, vector<1x128xf32>
    %4 = vector.broadcast %3 : vector<1x128xf32> to vector<16x128xf32>
    %5 = arith.addf %2, %4 : vector<16x128xf32>
    %cst_5 = arith.constant 0.000000e+00 : f32
    %6 = vector.broadcast %cst_5 : f32 to vector<16x128xf32>
    %7 = arith.maximumf %5, %6 : vector<16x128xf32>
    %c0_6 = arith.constant 0 : index
    %c0_7 = arith.constant 0 : index
    %8 = vector.load %arg5[%c0_6, %c0_7] : memref<16x128xbf16, #tpu.memory_space<vmem>>, vector<16x128xbf16>
    %c0_8 = arith.constant 0 : index
    %c0_9 = arith.constant 0 : index
    %9 = vector.load %arg6[%c0_8, %c0_9] : memref<128x128xbf16, #tpu.memory_space<vmem>>, vector<128x128xbf16>
    %cst_10 = arith.constant dense<0.000000e+00> : vector<16x128xf32>
    %10 = tpu.matmul %8, %9, %cst_10 {dimension_numbers = #tpu.dot_dimension_numbers<[1], [0], [0], [1], [0, 0, 1, 1], [], []>} : vector<16x128xbf16>, vector<128x128xbf16>, vector<16x128xf32> -> vector<16x128xf32>
    %c0_11 = arith.constant 0 : index
    %c0_12 = arith.constant 0 : index
    %11 = vector.load %arg7[%c0_11, %c0_12] : memref<1x128xf32, #tpu.memory_space<vmem>>, vector<1x128xf32>
    %12 = vector.broadcast %11 : vector<1x128xf32> to vector<16x128xf32>
    %13 = arith.addf %10, %12 : vector<16x128xf32>
    %cst_13 = arith.constant 0.000000e+00 : f32
    %14 = vector.broadcast %cst_13 : f32 to vector<16x128xf32>
    %15 = arith.maximumf %13, %14 : vector<16x128xf32>
    %16 = arith.addf %7, %15 : vector<16x128xf32>
    %17 = arith.truncf %16 : vector<16x128xf32> to vector<16x128xbf16>
    %c0_14 = arith.constant 0 : index
    %c0_15 = arith.constant 0 : index
    %18 = vector.load %arg8[%c0_14, %c0_15] : memref<16x128xbf16, #tpu.memory_space<vmem>>, vector<16x128xbf16>
    tpu.vector_store %arg8[%c0_14, %c0_15], %17 {strides = array<i32>} : memref<16x128xbf16, #tpu.memory_space<vmem>>, vector<16x128xbf16>,
    return
  }
  func.func @transform_0(%arg0: i32, %arg1: i32) -> (i32, i32) {
    %c0_i32 = arith.constant 0 : i32
    %c0_i32_0 = arith.constant 0 : i32
    return %arg0, %c0_i32 : i32, i32
  }
  func.func @transform_1(%arg0: i32, %arg1: i32) -> (i32, i32) {
    %c0_i32 = arith.constant 0 : i32
    %c0_i32_0 = arith.constant 0 : i32
    return %c0_i32, %arg1 : i32, i32
  }
  func.func @transform_2(%arg0: i32, %arg1: i32) -> (i32, i32) {
    %c0_i32 = arith.constant 0 : i32
    %c0_i32_0 = arith.constant 0 : i32
    return %c0_i32, %arg1 : i32, i32
  }
  func.func @transform_3(%arg0: i32, %arg1: i32) -> (i32, i32) {
    %c0_i32 = arith.constant 0 : i32
    %c0_i32_0 = arith.constant 0 : i32
    return %arg0, %c0_i32 : i32, i32
  }
  func.func @transform_4(%arg0: i32, %arg1: i32) -> (i32, i32) {
    %c0_i32 = arith.constant 0 : i32
    %c0_i32_0 = arith.constant 0 : i32
    return %c0_i32, %arg1 : i32, i32
  }
  func.func @transform_5(%arg0: i32, %arg1: i32) -> (i32, i32) {
    %c0_i32 = arith.constant 0 : i32
    %c0_i32_0 = arith.constant 0 : i32
    return %c0_i32, %arg1 : i32, i32
  }
  func.func @transform_6(%arg0: i32, %arg1: i32) -> (i32, i32) {
    %c0_i32 = arith.constant 0 : i32
    return %arg0, %arg1 : i32, i32
  }
}

module attributes {stable_mosaic.version = 11 : i64} {
  func.func @_gn_kernel(%arg0: memref<2x8x8xbf16, #tpu.memory_space<vmem>>, %arg1: memref<1x1x8xf32, #tpu.memory_space<vmem>>, %arg2: memref<1x1x8xf32, #tpu.memory_space<vmem>>, %arg3: memref<2x8x8xbf16, #tpu.memory_space<vmem>>) attributes {dimension_semantics = [], scalar_prefetch = 0 : i64, scratch_operands = 0 : i64, tpu.core_type = #tpu.core_type<tc>} {
    %c0 = arith.constant 0 : index
    %c0_0 = arith.constant 0 : index
    %c0_1 = arith.constant 0 : index
    %0 = vector.load %arg0[%c0, %c0_0, %c0_1] : memref<2x8x8xbf16, #tpu.memory_space<vmem>>, vector<2x8x8xbf16>
    %1 = arith.extf %0 : vector<2x8x8xbf16> to vector<2x8x8xf32>
    %2 = tpu.iota {dimensions = array<i32: 2>} : vector<1x1x8xi32>
    %cst = arith.constant 0.000000e+00 : f32
    %3 = vector.broadcast %cst : f32 to vector<2x1x8xf32>
    %cst_2 = arith.constant 0.000000e+00 : f32
    %4 = vector.broadcast %cst_2 : f32 to vector<2x1x8xf32>
    %5 = vector.extract_strided_slice %1 {offsets = [0, 0, 0], sizes = [2, 8, 4], strides = [1, 1, 1]} : vector<2x8x8xf32> to vector<2x8x4xf32>
    %cst_3 = arith.constant dense<0.000000e+00> : vector<2x8xf32>
    %6 = vector.multi_reduction <add>, %5, %cst_3 [2] : vector<2x8x4xf32> to vector<2x8xf32>
    %7 = vector.shape_cast %6 : vector<2x8xf32> to vector<2x8x1xf32>
    %cst_4 = arith.constant dense<0.000000e+00> : vector<2x1xf32>
    %8 = vector.multi_reduction <add>, %7, %cst_4 [1] : vector<2x8x1xf32> to vector<2x1xf32>
    %9 = vector.shape_cast %8 : vector<2x1xf32> to vector<2x1x1xf32>
    %cst_5 = arith.constant 3.125000e-02 : f32
    %10 = vector.broadcast %cst_5 : f32 to vector<2x1x1xf32>
    %11 = arith.mulf %9, %10 : vector<2x1x1xf32>
    %12 = arith.mulf %5, %5 : vector<2x8x4xf32>
    %cst_6 = arith.constant dense<0.000000e+00> : vector<2x8xf32>
    %13 = vector.multi_reduction <add>, %12, %cst_6 [2] : vector<2x8x4xf32> to vector<2x8xf32>
    %14 = vector.shape_cast %13 : vector<2x8xf32> to vector<2x8x1xf32>
    %cst_7 = arith.constant dense<0.000000e+00> : vector<2x1xf32>
    %15 = vector.multi_reduction <add>, %14, %cst_7 [1] : vector<2x8x1xf32> to vector<2x1xf32>
    %16 = vector.shape_cast %15 : vector<2x1xf32> to vector<2x1x1xf32>
    %cst_8 = arith.constant 3.125000e-02 : f32
    %17 = vector.broadcast %cst_8 : f32 to vector<2x1x1xf32>
    %18 = arith.mulf %16, %17 : vector<2x1x1xf32>
    %19 = arith.mulf %11, %11 : vector<2x1x1xf32>
    %20 = arith.subf %18, %19 : vector<2x1x1xf32>
    %cst_9 = arith.constant 9.99999974E-6 : f32
    %21 = vector.broadcast %cst_9 : f32 to vector<2x1x1xf32>
    %22 = arith.addf %20, %21 : vector<2x1x1xf32>
    %23 = math.rsqrt %22 : vector<2x1x1xf32>
    %c0_i32 = arith.constant 0 : i32
    %24 = vector.broadcast %c0_i32 : i32 to vector<1x1x8xi32>
    %25 = arith.cmpi sge, %2, %24 : vector<1x1x8xi32>
    %c4_i32 = arith.constant 4 : i32
    %26 = vector.broadcast %c4_i32 : i32 to vector<1x1x8xi32>
    %27 = arith.cmpi slt, %2, %26 : vector<1x1x8xi32>
    %28 = arith.andi %25, %27 : vector<1x1x8xi1>
    %cst_10 = arith.constant 0.000000e+00 : f32
    %29 = vector.shape_cast %28 : vector<1x1x8xi1> to vector<1x1x8xi1>
    %30 = vector.broadcast %29 : vector<1x1x8xi1> to vector<2x1x8xi1>
    %31 = vector.shape_cast %11 : vector<2x1x1xf32> to vector<2x1x1xf32>
    %32 = vector.broadcast %31 : vector<2x1x1xf32> to vector<2x1x8xf32>
    %33 = vector.broadcast %cst_10 : f32 to vector<2x1x8xf32>
    %34 = arith.select %30, %32, %33 : vector<2x1x8xi1>, vector<2x1x8xf32>
    %35 = arith.addf %3, %34 : vector<2x1x8xf32>
    %cst_11 = arith.constant 0.000000e+00 : f32
    %36 = vector.shape_cast %28 : vector<1x1x8xi1> to vector<1x1x8xi1>
    %37 = vector.broadcast %36 : vector<1x1x8xi1> to vector<2x1x8xi1>
    %38 = vector.shape_cast %23 : vector<2x1x1xf32> to vector<2x1x1xf32>
    %39 = vector.broadcast %38 : vector<2x1x1xf32> to vector<2x1x8xf32>
    %40 = vector.broadcast %cst_11 : f32 to vector<2x1x8xf32>
    %41 = arith.select %37, %39, %40 : vector<2x1x8xi1>, vector<2x1x8xf32>
    %42 = arith.addf %4, %41 : vector<2x1x8xf32>
    %43 = vector.extract_strided_slice %1 {offsets = [0, 0, 4], sizes = [2, 8, 4], strides = [1, 1, 1]} : vector<2x8x8xf32> to vector<2x8x4xf32>
    %cst_12 = arith.constant dense<0.000000e+00> : vector<2x8xf32>
    %44 = vector.multi_reduction <add>, %43, %cst_12 [2] : vector<2x8x4xf32> to vector<2x8xf32>
    %45 = vector.shape_cast %44 : vector<2x8xf32> to vector<2x8x1xf32>
    %cst_13 = arith.constant dense<0.000000e+00> : vector<2x1xf32>
    %46 = vector.multi_reduction <add>, %45, %cst_13 [1] : vector<2x8x1xf32> to vector<2x1xf32>
    %47 = vector.shape_cast %46 : vector<2x1xf32> to vector<2x1x1xf32>
    %cst_14 = arith.constant 3.125000e-02 : f32
    %48 = vector.broadcast %cst_14 : f32 to vector<2x1x1xf32>
    %49 = arith.mulf %47, %48 : vector<2x1x1xf32>
    %50 = arith.mulf %43, %43 : vector<2x8x4xf32>
    %cst_15 = arith.constant dense<0.000000e+00> : vector<2x8xf32>
    %51 = vector.multi_reduction <add>, %50, %cst_15 [2] : vector<2x8x4xf32> to vector<2x8xf32>
    %52 = vector.shape_cast %51 : vector<2x8xf32> to vector<2x8x1xf32>
    %cst_16 = arith.constant dense<0.000000e+00> : vector<2x1xf32>
    %53 = vector.multi_reduction <add>, %52, %cst_16 [1] : vector<2x8x1xf32> to vector<2x1xf32>
    %54 = vector.shape_cast %53 : vector<2x1xf32> to vector<2x1x1xf32>
    %cst_17 = arith.constant 3.125000e-02 : f32
    %55 = vector.broadcast %cst_17 : f32 to vector<2x1x1xf32>
    %56 = arith.mulf %54, %55 : vector<2x1x1xf32>
    %57 = arith.mulf %49, %49 : vector<2x1x1xf32>
    %58 = arith.subf %56, %57 : vector<2x1x1xf32>
    %cst_18 = arith.constant 9.99999974E-6 : f32
    %59 = vector.broadcast %cst_18 : f32 to vector<2x1x1xf32>
    %60 = arith.addf %58, %59 : vector<2x1x1xf32>
    %61 = math.rsqrt %60 : vector<2x1x1xf32>
    %c4_i32_19 = arith.constant 4 : i32
    %62 = vector.broadcast %c4_i32_19 : i32 to vector<1x1x8xi32>
    %63 = arith.cmpi sge, %2, %62 : vector<1x1x8xi32>
    %c8_i32 = arith.constant 8 : i32
    %64 = vector.broadcast %c8_i32 : i32 to vector<1x1x8xi32>
    %65 = arith.cmpi slt, %2, %64 : vector<1x1x8xi32>
    %66 = arith.andi %63, %65 : vector<1x1x8xi1>
    %cst_20 = arith.constant 0.000000e+00 : f32
    %67 = vector.shape_cast %66 : vector<1x1x8xi1> to vector<1x1x8xi1>
    %68 = vector.broadcast %67 : vector<1x1x8xi1> to vector<2x1x8xi1>
    %69 = vector.shape_cast %49 : vector<2x1x1xf32> to vector<2x1x1xf32>
    %70 = vector.broadcast %69 : vector<2x1x1xf32> to vector<2x1x8xf32>
    %71 = vector.broadcast %cst_20 : f32 to vector<2x1x8xf32>
    %72 = arith.select %68, %70, %71 : vector<2x1x8xi1>, vector<2x1x8xf32>
    %73 = arith.addf %35, %72 : vector<2x1x8xf32>
    %cst_21 = arith.constant 0.000000e+00 : f32
    %74 = vector.shape_cast %66 : vector<1x1x8xi1> to vector<1x1x8xi1>
    %75 = vector.broadcast %74 : vector<1x1x8xi1> to vector<2x1x8xi1>
    %76 = vector.shape_cast %61 : vector<2x1x1xf32> to vector<2x1x1xf32>
    %77 = vector.broadcast %76 : vector<2x1x1xf32> to vector<2x1x8xf32>
    %78 = vector.broadcast %cst_21 : f32 to vector<2x1x8xf32>
    %79 = arith.select %75, %77, %78 : vector<2x1x8xi1>, vector<2x1x8xf32>
    %80 = arith.addf %42, %79 : vector<2x1x8xf32>
    %c0_22 = arith.constant 0 : index
    %c0_23 = arith.constant 0 : index
    %c0_24 = arith.constant 0 : index
    %81 = vector.load %arg1[%c0_22, %c0_23, %c0_24] : memref<1x1x8xf32, #tpu.memory_space<vmem>>, vector<1x1x8xf32>
    %82 = vector.broadcast %81 : vector<1x1x8xf32> to vector<2x1x8xf32>
    %83 = arith.mulf %82, %80 : vector<2x1x8xf32>
    %c0_25 = arith.constant 0 : index
    %c0_26 = arith.constant 0 : index
    %c0_27 = arith.constant 0 : index
    %84 = vector.load %arg2[%c0_25, %c0_26, %c0_27] : memref<1x1x8xf32, #tpu.memory_space<vmem>>, vector<1x1x8xf32>
    %85 = arith.mulf %73, %83 : vector<2x1x8xf32>
    %86 = vector.broadcast %84 : vector<1x1x8xf32> to vector<2x1x8xf32>
    %87 = arith.subf %86, %85 : vector<2x1x8xf32>
    %88 = vector.broadcast %83 : vector<2x1x8xf32> to vector<2x8x8xf32>
    %89 = arith.mulf %1, %88 : vector<2x8x8xf32>
    %90 = vector.broadcast %87 : vector<2x1x8xf32> to vector<2x8x8xf32>
    %91 = arith.addf %89, %90 : vector<2x8x8xf32>
    %cst_28 = arith.constant 0.000000e+00 : f32
    %92 = vector.broadcast %cst_28 : f32 to vector<2x8x8xf32>
    %93 = arith.maximumf %91, %92 : vector<2x8x8xf32>
    %94 = arith.truncf %93 : vector<2x8x8xf32> to vector<2x8x8xbf16>
    %c0_29 = arith.constant 0 : index
    %c0_30 = arith.constant 0 : index
    %c0_31 = arith.constant 0 : index
    %95 = vector.load %arg3[%c0_29, %c0_30, %c0_31] : memref<2x8x8xbf16, #tpu.memory_space<vmem>>, vector<2x8x8xbf16>
    tpu.vector_store %arg3[%c0_29, %c0_30, %c0_31], %94 {strides = array<i32>} : memref<2x8x8xbf16, #tpu.memory_space<vmem>>, vector<2x8x8xbf16>,
    return
  }
}

module attributes {stable_mosaic.version = 11 : i64} {
  func.func @_heads_kernel(%arg0: memref<8x128xbf16, #tpu.memory_space<vmem>>, %arg1: memref<128x128xbf16, #tpu.memory_space<vmem>>, %arg2: memref<1x128xf32, #tpu.memory_space<vmem>>, %arg3: memref<128x128xbf16, #tpu.memory_space<vmem>>, %arg4: memref<1x128xf32, #tpu.memory_space<vmem>>, %arg5: memref<128x128xbf16, #tpu.memory_space<vmem>>, %arg6: memref<1x128xf32, #tpu.memory_space<vmem>>, %arg7: memref<128x128xbf16, #tpu.memory_space<vmem>>, %arg8: memref<1x128xf32, #tpu.memory_space<vmem>>, %arg9: memref<128x128xbf16, #tpu.memory_space<vmem>>, %arg10: memref<1x128xf32, #tpu.memory_space<vmem>>, %arg11: memref<8x128xf32, #tpu.memory_space<vmem>>, %arg12: memref<8x128xf32, #tpu.memory_space<vmem>>) attributes {dimension_semantics = [], scalar_prefetch = 0 : i64, scratch_operands = 0 : i64, tpu.core_type = #tpu.core_type<tc>} {
    %c0 = arith.constant 0 : index
    %c0_0 = arith.constant 0 : index
    %0 = vector.load %arg0[%c0, %c0_0] : memref<8x128xbf16, #tpu.memory_space<vmem>>, vector<8x128xbf16>
    %c0_1 = arith.constant 0 : index
    %c0_2 = arith.constant 0 : index
    %1 = vector.load %arg1[%c0_1, %c0_2] : memref<128x128xbf16, #tpu.memory_space<vmem>>, vector<128x128xbf16>
    %c0_3 = arith.constant 0 : index
    %c0_4 = arith.constant 0 : index
    %2 = vector.load %arg2[%c0_3, %c0_4] : memref<1x128xf32, #tpu.memory_space<vmem>>, vector<1x128xf32>
    %cst = arith.constant dense<0.000000e+00> : vector<8x128xf32>
    %3 = tpu.matmul %0, %1, %cst {dimension_numbers = #tpu.dot_dimension_numbers<[1], [0], [0], [1], [0, 0, 1, 1], [], []>} : vector<8x128xbf16>, vector<128x128xbf16>, vector<8x128xf32> -> vector<8x128xf32>
    %4 = vector.broadcast %2 : vector<1x128xf32> to vector<8x128xf32>
    %5 = arith.addf %3, %4 : vector<8x128xf32>
    %cst_5 = arith.constant 0.000000e+00 : f32
    %6 = vector.broadcast %cst_5 : f32 to vector<8x128xf32>
    %7 = arith.maximumf %5, %6 : vector<8x128xf32>
    %8 = arith.truncf %7 : vector<8x128xf32> to vector<8x128xbf16>
    %c0_6 = arith.constant 0 : index
    %c0_7 = arith.constant 0 : index
    %9 = vector.load %arg3[%c0_6, %c0_7] : memref<128x128xbf16, #tpu.memory_space<vmem>>, vector<128x128xbf16>
    %c0_8 = arith.constant 0 : index
    %c0_9 = arith.constant 0 : index
    %10 = vector.load %arg4[%c0_8, %c0_9] : memref<1x128xf32, #tpu.memory_space<vmem>>, vector<1x128xf32>
    %cst_10 = arith.constant dense<0.000000e+00> : vector<8x128xf32>
    %11 = tpu.matmul %8, %9, %cst_10 {dimension_numbers = #tpu.dot_dimension_numbers<[1], [0], [0], [1], [0, 0, 1, 1], [], []>} : vector<8x128xbf16>, vector<128x128xbf16>, vector<8x128xf32> -> vector<8x128xf32>
    %12 = vector.broadcast %10 : vector<1x128xf32> to vector<8x128xf32>
    %13 = arith.addf %11, %12 : vector<8x128xf32>
    %cst_11 = arith.constant 0.000000e+00 : f32
    %14 = vector.broadcast %cst_11 : f32 to vector<8x128xf32>
    %15 = arith.maximumf %13, %14 : vector<8x128xf32>
    %16 = arith.truncf %15 : vector<8x128xf32> to vector<8x128xbf16>
    %c0_12 = arith.constant 0 : index
    %c0_13 = arith.constant 0 : index
    %17 = vector.load %arg5[%c0_12, %c0_13] : memref<128x128xbf16, #tpu.memory_space<vmem>>, vector<128x128xbf16>
    %c0_14 = arith.constant 0 : index
    %c0_15 = arith.constant 0 : index
    %18 = vector.load %arg6[%c0_14, %c0_15] : memref<1x128xf32, #tpu.memory_space<vmem>>, vector<1x128xf32>
    %cst_16 = arith.constant dense<0.000000e+00> : vector<8x128xf32>
    %19 = tpu.matmul %16, %17, %cst_16 {dimension_numbers = #tpu.dot_dimension_numbers<[1], [0], [0], [1], [0, 0, 1, 1], [], []>} : vector<8x128xbf16>, vector<128x128xbf16>, vector<8x128xf32> -> vector<8x128xf32>
    %20 = vector.broadcast %18 : vector<1x128xf32> to vector<8x128xf32>
    %21 = arith.addf %19, %20 : vector<8x128xf32>
    %c0_17 = arith.constant 0 : index
    %c0_18 = arith.constant 0 : index
    %22 = vector.load %arg11[%c0_17, %c0_18] : memref<8x128xf32, #tpu.memory_space<vmem>>, vector<8x128xf32>
    tpu.vector_store %arg11[%c0_17, %c0_18], %21 {strides = array<i32>} : memref<8x128xf32, #tpu.memory_space<vmem>>, vector<8x128xf32>,
    %c0_19 = arith.constant 0 : index
    %c0_20 = arith.constant 0 : index
    %23 = vector.load %arg7[%c0_19, %c0_20] : memref<128x128xbf16, #tpu.memory_space<vmem>>, vector<128x128xbf16>
    %c0_21 = arith.constant 0 : index
    %c0_22 = arith.constant 0 : index
    %24 = vector.load %arg8[%c0_21, %c0_22] : memref<1x128xf32, #tpu.memory_space<vmem>>, vector<1x128xf32>
    %cst_23 = arith.constant dense<0.000000e+00> : vector<8x128xf32>
    %25 = tpu.matmul %0, %23, %cst_23 {dimension_numbers = #tpu.dot_dimension_numbers<[1], [0], [0], [1], [0, 0, 1, 1], [], []>} : vector<8x128xbf16>, vector<128x128xbf16>, vector<8x128xf32> -> vector<8x128xf32>
    %26 = vector.broadcast %24 : vector<1x128xf32> to vector<8x128xf32>
    %27 = arith.addf %25, %26 : vector<8x128xf32>
    %cst_24 = arith.constant 0.000000e+00 : f32
    %28 = vector.broadcast %cst_24 : f32 to vector<8x128xf32>
    %29 = arith.maximumf %27, %28 : vector<8x128xf32>
    %30 = arith.truncf %29 : vector<8x128xf32> to vector<8x128xbf16>
    %c0_25 = arith.constant 0 : index
    %c0_26 = arith.constant 0 : index
    %31 = vector.load %arg9[%c0_25, %c0_26] : memref<128x128xbf16, #tpu.memory_space<vmem>>, vector<128x128xbf16>
    %c0_27 = arith.constant 0 : index
    %c0_28 = arith.constant 0 : index
    %32 = vector.load %arg10[%c0_27, %c0_28] : memref<1x128xf32, #tpu.memory_space<vmem>>, vector<1x128xf32>
    %cst_29 = arith.constant dense<0.000000e+00> : vector<8x128xf32>
    %33 = tpu.matmul %30, %31, %cst_29 {dimension_numbers = #tpu.dot_dimension_numbers<[1], [0], [0], [1], [0, 0, 1, 1], [], []>} : vector<8x128xbf16>, vector<128x128xbf16>, vector<8x128xf32> -> vector<8x128xf32>
    %34 = vector.broadcast %32 : vector<1x128xf32> to vector<8x128xf32>
    %35 = arith.addf %33, %34 : vector<8x128xf32>
    %cst_30 = arith.constant 0.000000e+00 : f32
    %36 = vector.broadcast %cst_30 : f32 to vector<8x128xf32>
    %37 = arith.maximumf %35, %36 : vector<8x128xf32>
    %c0_31 = arith.constant 0 : index
    %c0_32 = arith.constant 0 : index
    %38 = vector.load %arg12[%c0_31, %c0_32] : memref<8x128xf32, #tpu.memory_space<vmem>>, vector<8x128xf32>
    tpu.vector_store %arg12[%c0_31, %c0_32], %37 {strides = array<i32>} : memref<8x128xf32, #tpu.memory_space<vmem>>, vector<8x128xf32>,
    return
  }
}

</mosaic_0001>

<llo_original>
// kernel: _lambda_.8
$region0: #{_lambda_.8}
  #allocation0 [shape = 'u32[]', space=smem, size = 0x4, offset = 0x4, fixed_abs, tag = 'smem constant byte address 0x4 - core index']
  #allocation1 [shape = 'u32[144,128]{1,0:T(1,128)}', space=vmem, size = 0x12000, scoped, tag = 'internal scratch']
  %s0 = inlined_call_operand.vmem [shape: bf16[1024,128], index: 0, kind: input, shape index: {}]
  %s1 = inlined_call_operand.vmem [shape: bf16[128,128], index: 1, kind: input, shape index: {}]
  %s2 = inlined_call_operand.vmem [shape: f32[1,128], index: 2, kind: input, shape index: {}]
  %s3 = inlined_call_operand.vmem [shape: bf16[1024,128], index: 3, kind: output, shape index: {}]
  %s4 = sld [smem:[#allocation0]]
  $region45: #{_lambda_.8} parent=0
    _
  %s6 = ssub.s32 1, %s4
  %s7 = scalar_select 0, %s6, %s4
  loop: start=0, step=1, limit=4
  $region2: #{_lambda_.8} parent=0 // loop_pre_header
    _
  $region3: #{_lambda_.8} parent=0 // loop_header
    %s9 = sphi 0, %s13
    %p10 = scmp.ge.s32.totalorder %s9, 4
    %s16 = sphi 0, %s28
    %s17 = sphi 0, %s24
    %s18 = sphi 0, %s16
    %s19 = sphi 0, %s17
    %s20 = sphi 0, %s18
    %s21 = sphi 0, %s19
    %s31 = sphi 0, %s33
    %s34 = sphi 0, %s31
    %s35 = sphi 0, %s34
    %s51 = sphi 0, %s35
    %s57 = sphi 0, %s59
    %s60 = sphi 0, %s57
    %s61 = sphi 0, %s60
    %s77 = sphi 0, %s61
    %s83 = sphi 0, %s85
    %s86 = sphi 0, %s83
    %s87 = sphi 0, %s86
    %s103 = sphi 0, %s87
    %s111 = sphi 0, %s113
    %s114 = sphi 0, %s111
    %s115 = sphi 0, %s114
    %s131 = sphi 0, %s115
  $region4: #{_lambda_.8} parent=0 // loop_header_branch
    %12 = sbr.rel (%p10) target = $region8
  $region5: #{_lambda_.8} parent=0 // loop_body
    %s14 = ssub.s32 %s9, 1
    %s15 = ssub.s32 %s9, 2
    %s22 = sadd.s32 1, %s17
    %p23 = scmp.ge.s32.totalorder %s22, 1
    %s24 = scalar_select %p23, 0, %s22
    %s25 = sadd.s32 1, %s16
    %s26 = scalar_select %p23, %s25, %s16
    %p27 = scmp.ge.s32.totalorder %s26, 2
    %s28 = scalar_select %p27, 0, %s26
    %s29 = ssub.s32 %s16, %s28
    %p30 = scmp.eq.s32.totalorder %s29, 0
    %s32 = sadd.s32 %s31, 1
    %s33 = scalar_select %p30, %s31, %s32
    %p36 = pneg %p30
    %p37 = scmp.eq.s32.totalorder %s9, 1
    %p38 = por %p36, %p37
    %p39 = scmp.ne.s32.totalorder %s31, %s34
    %p40 = scmp.eq.s32.totalorder %s9, 0
    %p41 = por %p39, %p40
    %p42 = scmp.ne.s32.totalorder %s31, %s34
    %p43 = scmp.eq.s32.totalorder %s14, 1
    %p44 = por %p42, %p43
    %p45 = scmp.ne.s32.totalorder %s34, %s35
    %p46 = scmp.eq.s32.totalorder %s14, 0
    %p47 = por %p45, %p46
    %p48 = scmp.ne.s32.totalorder %s34, %s35
    %p49 = scmp.eq.s32.totalorder %s15, 1
    %p50 = por %p48, %p49
    %p52 = scmp.ne.s32.totalorder %s35, %s51
    %p53 = scmp.eq.s32.totalorder %s15, 0
    %p54 = por %p52, %p53
    %s55 = ssub.s32 %s17, %s24
    %p56 = scmp.eq.s32.totalorder %s55, 0
    %s58 = sadd.s32 %s57, 1
    %s59 = scalar_select %p56, %s57, %s58
    %p62 = pneg %p56
    %p63 = scmp.eq.s32.totalorder %s9, 1
    %p64 = por %p62, %p63
    %p65 = scmp.ne.s32.totalorder %s57, %s60
    %p66 = scmp.eq.s32.totalorder %s9, 0
    %p67 = por %p65, %p66
    %p68 = scmp.ne.s32.totalorder %s57, %s60
    %p69 = scmp.eq.s32.totalorder %s14, 1
    %p70 = por %p68, %p69
    %p71 = scmp.ne.s32.totalorder %s60, %s61
    %p72 = scmp.eq.s32.totalorder %s14, 0
    %p73 = por %p71, %p72
    %p74 = scmp.ne.s32.totalorder %s60, %s61
    %p75 = scmp.eq.s32.totalorder %s15, 1
    %p76 = por %p74, %p75
    %p78 = scmp.ne.s32.totalorder %s61, %s77
    %p79 = scmp.eq.s32.totalorder %s15, 0
    %p80 = por %p78, %p79
    %s81 = ssub.s32 %s17, %s24
    %p82 = scmp.eq.s32.totalorder %s81, 0
    %s84 = sadd.s32 %s83, 1
    %s85 = scalar_select %p82, %s83, %s84
    %p88 = pneg %p82
    %p89 = scmp.eq.s32.totalorder %s9, 1
    %p90 = por %p88, %p89
    %p91 = scmp.ne.s32.totalorder %s83, %s86
    %p92 = scmp.eq.s32.totalorder %s9, 0
    %p93 = por %p91, %p92
    %p94 = scmp.ne.s32.totalorder %s83, %s86
    %p95 = scmp.eq.s32.totalorder %s14, 1
    %p96 = por %p94, %p95
    %p97 = scmp.ne.s32.totalorder %s86, %s87
    %p98 = scmp.eq.s32.totalorder %s14, 0
    %p99 = por %p97, %p98
    %p100 = scmp.ne.s32.totalorder %s86, %s87
    %p101 = scmp.eq.s32.totalorder %s15, 1
    %p102 = por %p100, %p101
    %p104 = scmp.ne.s32.totalorder %s87, %s103
    %p105 = scmp.eq.s32.totalorder %s15, 0
    %p106 = por %p104, %p105
    %s107 = ssub.s32 %s16, %s28
    %s108 = ssub.s32 %s17, %s24
    %s109 = sor.u32 %s107, %s108
    %p110 = scmp.eq.s32.totalorder %s109, 0
    %s112 = sadd.s32 %s111, 1
    %s113 = scalar_select %p110, %s111, %s112
    %p116 = pneg %p110
    %p117 = scmp.eq.s32.totalorder %s9, 1
    %p118 = por %p116, %p117
    %p119 = scmp.ne.s32.totalorder %s111, %s114
    %p120 = scmp.eq.s32.totalorder %s9, 0
    %p121 = por %p119, %p120
    %p122 = scmp.ne.s32.totalorder %s111, %s114
    %p123 = scmp.eq.s32.totalorder %s14, 1
    %p124 = por %p122, %p123
    %p125 = scmp.ne.s32.totalorder %s114, %s115
    %p126 = scmp.eq.s32.totalorder %s14, 0
    %p127 = por %p125, %p126
    %p128 = scmp.ne.s32.totalorder %s114, %s115
    %p129 = scmp.eq.s32.totalorder %s15, 1
    %p130 = por %p128, %p129
    %p132 = scmp.ne.s32.totalorder %s115, %s131
    %p133 = scmp.eq.s32.totalorder %s15, 0
    %p134 = por %p132, %p133
    %p135 = scmp.le.s32.totalorder 1, %s9
    %p136 = scmp.lt.s32.totalorder %s9, 3
    %p137 = pnand %p135, %p136
    %p138 = pneg %p137
    // Predicated region
    $region9: #{_lambda_.8} parent=5 // pred_check
      _
    $region10: #{_lambda_.8} parent=5 // pred_check_branch
      %140 = sbr.rel (%p137) target = $region12
    $region11: #{_lambda_.8} parent=5 // pred_region
      %s141 = ssub.s32 %s9, 1
      // Predicated region
      $region13: #{_lambda_.8} parent=11 // pred_check
        %p142 = pneg %p73
      $region14: #{_lambda_.8} parent=11 // pred_check_branch
        %144 = sbr.rel (%p142) target = $region16
      $region15: #{_lambda_.8} parent=11 // pred_region
        %p145 = scmp.lt.s32.totalorder %s19, 0
        %s146 = scalar_select %p145, %s19, 0
        %s147 = smul.addr %s146, 4
        %s148 = scalar_lea.vmem %s1, %s147
      $region16: #{_lambda_.8} parent=11 // pred_fallthru
        _
      // Predicated region
      $region17: #{_lambda_.8} parent=11 // pred_check
        %p149 = pneg %p99
      $region18: #{_lambda_.8} parent=11 // pred_check_branch
        %151 = sbr.rel (%p149) target = $region20
      $region19: #{_lambda_.8} parent=11 // pred_region
        %p152 = scmp.lt.s32.totalorder %s19, 0
        %s153 = scalar_select %p152, %s19, 0
        %s154 = scalar_lea.vmem %s2, %s153
      $region20: #{_lambda_.8} parent=11 // pred_fallthru
        _
    $region12: #{_lambda_.8} parent=5 // pred_fallthru
      _
    %p155 = scmp.lt.s32.totalorder %s9, 2
    // Predicated region
    $region21: #{_lambda_.8} parent=5 // pred_check
      %p156 = pneg %p155
    $region22: #{_lambda_.8} parent=5 // pred_check_branch
      %158 = sbr.rel (%p156) target = $region24
    $region23: #{_lambda_.8} parent=5 // pred_region
      // Predicated region
      $region25: #{_lambda_.8} parent=23 // pred_check
        %p159 = pneg %p41
      $region26: #{_lambda_.8} parent=23 // pred_check_branch
        %161 = sbr.rel (%p159) target = $region28
      $region27: #{_lambda_.8} parent=23 // pred_region
        %s162 = smul.u32 64, %s16
        %p163 = scmp.lt.s32.totalorder %s162, 127
        %s164 = scalar_select %p163, %s162, 127
        %s165 = smul.addr %s164, 4
        %s166 = scalar_lea.vmem %s0, %s165
        %s167 = smul.u32 64, %s16
      $region28: #{_lambda_.8} parent=23 // pred_fallthru
        _
    $region24: #{_lambda_.8} parent=5 // pred_fallthru
      _
    %p168 = scmp.le.s32.totalorder 1, %s9
    %p169 = scmp.lt.s32.totalorder %s9, 3
    %p170 = pnand %p168, %p169
    %p171 = pneg %p170
    // Predicated region
    $region29: #{_lambda_.8} parent=5 // pred_check
      _
    $region30: #{_lambda_.8} parent=5 // pred_check_branch
      %173 = sbr.rel (%p170) target = $region32
    $region31: #{_lambda_.8} parent=5 // pred_region
      %s174 = ssub.s32 %s9, 1
      %s175 = smul.u32 64, %s18
      %p176 = scmp.lt.s32.totalorder %s175, 127
      %s177 = scalar_select %p176, %s175, 127
      %s178 = smul.addr %s177, 4
      %s179 = scalar_lea.vmem %s0, %s178
      %p180 = pneg %p47
      %p181 = pneg %p44
      %p182 = scmp.lt.s32.totalorder %s19, 0
      %s183 = scalar_select %p182, %s19, 0
      %s184 = smul.addr %s183, 4
      %s185 = scalar_lea.vmem %s1, %s184
      %p186 = pneg %p73
      %p187 = pneg %p70
      %p188 = scmp.lt.s32.totalorder %s19, 0
      %s189 = scalar_select %p188, %s19, 0
      %s190 = scalar_lea.vmem %s2, %s189
      %p191 = pneg %p99
      %p192 = pneg %p96
      %p193 = pneg %p127
      %p194 = pneg %p124
      %s195 = smul.u32 64, %s18
      %p196 = scmp.lt.s32.totalorder %s195, 127
      %s197 = scalar_select %p196, %s195, 127
      %p198 = scmp.lt.s32.totalorder %s19, 0
      %s199 = scalar_select %p198, %s19, 0
      %s200 = sadd.s32 %s199, %s197
      %s201 = smul.addr %s200, 4
      %s202 = scalar_lea.vmem %s3, %s201
      %s203 = smul.u32 64, %s18
      %p204 = scmp.lt.s32.totalorder %s203, 127
      %s205 = scalar_select %p204, %s203, 127
      %s206 = smul.addr %s205, 4
      %s207 = scalar_lea.vmem %s0, %s206
      %s208 = smul.u32 64, %s18
      %p209 = scmp.lt.s32.totalorder %s19, 0
      %s210 = scalar_select %p209, %s19, 0
      %s211 = smul.addr %s210, 4
      %s212 = scalar_lea.vmem %s1, %s211
      %p213 = scmp.lt.s32.totalorder %s19, 0
      %s214 = scalar_select %p213, %s19, 0
      %s215 = scalar_lea.vmem %s2, %s214
      %s216 = smul.u32 64, %s18
      %p217 = scmp.lt.s32.totalorder %s216, 127
      %s218 = scalar_select %p217, %s216, 127
      %p219 = scmp.lt.s32.totalorder %s19, 0
      %s220 = scalar_select %p219, %s19, 0
      %s221 = sadd.s32 %s220, %s218
      %s222 = smul.addr %s221, 4
      %s223 = scalar_lea.vmem %s3, %s222
      %s224 = smul.u32 64, %s18
      %v226 = vld [vmem:[%s207] sm:$0xf]
      %v227 = vld [vmem:[%s207 + $0x4] sm:$0xf]
      %v228 = vld [vmem:[%s207 + $0x8] sm:$0xf]
      %v229 = vld [vmem:[%s207 + $0xc] sm:$0xf]
      %v230 = vld [vmem:[%s207 + $0x10] sm:$0xf]
      %v231 = vld [vmem:[%s207 + $0x14] sm:$0xf]
      %v232 = vld [vmem:[%s207 + $0x18] sm:$0xf]
      %v233 = vld [vmem:[%s207 + $0x1c] sm:$0xf]
      %v234 = vld [vmem:[%s207 + $0x20] sm:$0xf]
      %v235 = vld [vmem:[%s207 + $0x24] sm:$0xf]
      %v236 = vld [vmem:[%s207 + $0x28] sm:$0xf]
      %v237 = vld [vmem:[%s207 + $0x2c] sm:$0xf]
      %v238 = vld [vmem:[%s207 + $0x30] sm:$0xf]
      %v239 = vld [vmem:[%s207 + $0x34] sm:$0xf]
      %v240 = vld [vmem:[%s207 + $0x38] sm:$0xf]
      %v241 = vld [vmem:[%s207 + $0x3c] sm:$0xf]
      %v242 = vld [vmem:[%s207 + $0x40] sm:$0xf]
      %v243 = vld [vmem:[%s207 + $0x44] sm:$0xf]
      %v244 = vld [vmem:[%s207 + $0x48] sm:$0xf]
      %v245 = vld [vmem:[%s207 + $0x4c] sm:$0xf]
      %v246 = vld [vmem:[%s207 + $0x50] sm:$0xf]
      %v247 = vld [vmem:[%s207 + $0x54] sm:$0xf]
      %v248 = vld [vmem:[%s207 + $0x58] sm:$0xf]
      %v249 = vld [vmem:[%s207 + $0x5c] sm:$0xf]
      %v250 = vld [vmem:[%s207 + $0x60] sm:$0xf]
      %v251 = vld [vmem:[%s207 + $0x64] sm:$0xf]
      %v252 = vld [vmem:[%s207 + $0x68] sm:$0xf]
      %v253 = vld [vmem:[%s207 + $0x6c] sm:$0xf]
      %v254 = vld [vmem:[%s207 + $0x70] sm:$0xf]
      %v255 = vld [vmem:[%s207 + $0x74] sm:$0xf]
      %v256 = vld [vmem:[%s207 + $0x78] sm:$0xf]
      %v257 = vld [vmem:[%s207 + $0x7c] sm:$0xf]
      %v258 = vld [vmem:[%s207 + $0x80] sm:$0xf]
      %v259 = vld [vmem:[%s207 + $0x84] sm:$0xf]
      %v260 = vld [vmem:[%s207 + $0x88] sm:$0xf]
      %v261 = vld [vmem:[%s207 + $0x8c] sm:$0xf]
      %v262 = vld [vmem:[%s207 + $0x90] sm:$0xf]
      %v263 = vld [vmem:[%s207 + $0x94] sm:$0xf]
      %v264 = vld [vmem:[%s207 + $0x98] sm:$0xf]
      %v265 = vld [vmem:[%s207 + $0x9c] sm:$0xf]
      %v266 = vld [vmem:[%s207 + $0xa0] sm:$0xf]
      %v267 = vld [vmem:[%s207 + $0xa4] sm:$0xf]
      %v268 = vld [vmem:[%s207 + $0xa8] sm:$0xf]
      %v269 = vld [vmem:[%s207 + $0xac] sm:$0xf]
      %v270 = vld [vmem:[%s207 + $0xb0] sm:$0xf]
      %v271 = vld [vmem:[%s207 + $0xb4] sm:$0xf]
      %v272 = vld [vmem:[%s207 + $0xb8] sm:$0xf]
      %v273 = vld [vmem:[%s207 + $0xbc] sm:$0xf]
      %v274 = vld [vmem:[%s207 + $0xc0] sm:$0xf]
      %v275 = vld [vmem:[%s207 + $0xc4] sm:$0xf]
      %v276 = vld [vmem:[%s207 + $0xc8] sm:$0xf]
      %v277 = vld [vmem:[%s207 + $0xcc] sm:$0xf]
      %v278 = vld [vmem:[%s207 + $0xd0] sm:$0xf]
      %v279 = vld [vmem:[%s207 + $0xd4] sm:$0xf]
      %v280 = vld [vmem:[%s207 + $0xd8] sm:$0xf]
      %v281 = vld [vmem:[%s207 + $0xdc] sm:$0xf]
      %v282 = vld [vmem:[%s207 + $0xe0] sm:$0xf]
      %v283 = vld [vmem:[%s207 + $0xe4] sm:$0xf]
      %v284 = vld [vmem:[%s207 + $0xe8] sm:$0xf]
      %v285 = vld [vmem:[%s207 + $0xec] sm:$0xf]
      %v286 = vld [vmem:[%s207 + $0xf0] sm:$0xf]
      %v287 = vld [vmem:[%s207 + $0xf4] sm:$0xf]
      %v288 = vld [vmem:[%s207 + $0xf8] sm:$0xf]
      %v289 = vld [vmem:[%s207 + $0xfc] sm:$0xf]
      %v290 = vld [vmem:[%s212] sm:$0xf]
      %v291 = vld [vmem:[%s212 + $0x4] sm:$0xf]
      %v292 = vld [vmem:[%s212 + $0x8] sm:$0xf]
      %v293 = vld [vmem:[%s212 + $0xc] sm:$0xf]
      %v294 = vld [vmem:[%s212 + $0x10] sm:$0xf]
      %v295 = vld [vmem:[%s212 + $0x14] sm:$0xf]
      %v296 = vld [vmem:[%s212 + $0x18] sm:$0xf]
      %v297 = vld [vmem:[%s212 + $0x1c] sm:$0xf]
      %v298 = vld [vmem:[%s212 + $0x20] sm:$0xf]
      %v299 = vld [vmem:[%s212 + $0x24] sm:$0xf]
      %v300 = vld [vmem:[%s212 + $0x28] sm:$0xf]
      %v301 = vld [vmem:[%s212 + $0x2c] sm:$0xf]
      %v302 = vld [vmem:[%s212 + $0x30] sm:$0xf]
      %v303 = vld [vmem:[%s212 + $0x34] sm:$0xf]
      %v304 = vld [vmem:[%s212 + $0x38] sm:$0xf]
      %v305 = vld [vmem:[%s212 + $0x3c] sm:$0xf]
      %v306 = vld [vmem:[%s215] sm:$0x1]
      %v308 = vlaneseq
      %v309 = vshrl.u32 %v308, 7
      %v310 = vsub.s32 0, %v309
      %v311 = vrot.slane %v306, %v310
      %v377 = vunpack.c.l.b16 %v226
      %v378 = vunpack.c.l.b16 %v227
      %v379 = vunpack.c.l.b16 %v228
      %v380 = vunpack.c.l.b16 %v229
      %v381 = vunpack.c.l.b16 %v230
      %v382 = vunpack.c.l.b16 %v231
      %v383 = vunpack.c.l.b16 %v232
      %v384 = vunpack.c.l.b16 %v233
      %v385 = vunpack.c.l.b16 %v234
      %v386 = vunpack.c.l.b16 %v235
      %v387 = vunpack.c.l.b16 %v236
      %v388 = vunpack.c.l.b16 %v237
      %v389 = vunpack.c.l.b16 %v238
      %v390 = vunpack.c.l.b16 %v239
      %v391 = vunpack.c.l.b16 %v240
      %v392 = vunpack.c.l.b16 %v241
      %v393 = vunpack.c.l.b16 %v242
      %v394 = vunpack.c.l.b16 %v243
      %v395 = vunpack.c.l.b16 %v244
      %v396 = vunpack.c.l.b16 %v245
      %v397 = vunpack.c.l.b16 %v246
      %v398 = vunpack.c.l.b16 %v247
      %v399 = vunpack.c.l.b16 %v248
      %v400 = vunpack.c.l.b16 %v249
      %v401 = vunpack.c.l.b16 %v250
      %v402 = vunpack.c.l.b16 %v251
      %v403 = vunpack.c.l.b16 %v252
      %v404 = vunpack.c.l.b16 %v253
      %v405 = vunpack.c.l.b16 %v254
      %v406 = vunpack.c.l.b16 %v255
      %v407 = vunpack.c.l.b16 %v256
      %v408 = vunpack.c.l.b16 %v257
      %v409 = vunpack.c.l.b16 %v258
      %v410 = vunpack.c.l.b16 %v259
      %v411 = vunpack.c.l.b16 %v260
      %v412 = vunpack.c.l.b16 %v261
      %v413 = vunpack.c.l.b16 %v262
      %v414 = vunpack.c.l.b16 %v263
      %v415 = vunpack.c.l.b16 %v264
      %v416 = vunpack.c.l.b16 %v265
      %v417 = vunpack.c.l.b16 %v266
      %v418 = vunpack.c.l.b16 %v267
      %v419 = vunpack.c.l.b16 %v268
      %v420 = vunpack.c.l.b16 %v269
      %v421 = vunpack.c.l.b16 %v270
      %v422 = vunpack.c.l.b16 %v271
      %v423 = vunpack.c.l.b16 %v272
      %v424 = vunpack.c.l.b16 %v273
      %v425 = vunpack.c.l.b16 %v274
      %v426 = vunpack.c.l.b16 %v275
      %v427 = vunpack.c.l.b16 %v276
      %v428 = vunpack.c.l.b16 %v277
      %v429 = vunpack.c.l.b16 %v278
      %v430 = vunpack.c.l.b16 %v279
      %v431 = vunpack.c.l.b16 %v280
      %v432 = vunpack.c.l.b16 %v281
      %v433 = vunpack.c.l.b16 %v282
      %v434 = vunpack.c.l.b16 %v283
      %v435 = vunpack.c.l.b16 %v284
      %v436 = vunpack.c.l.b16 %v285
      %v437 = vunpack.c.l.b16 %v286
      %v438 = vunpack.c.l.b16 %v287
      %v439 = vunpack.c.l.b16 %v288
      %v440 = vunpack.c.l.b16 %v289
      %v441 = vpack.c.b16 %v378, %v377
      %v442 = vpack.c.b16 %v380, %v379
      %v443 = vpack.c.b16 %v382, %v381
      %v444 = vpack.c.b16 %v384, %v383
      %v445 = vpack.c.b16 %v386, %v385
      %v446 = vpack.c.b16 %v388, %v387
      %v447 = vpack.c.b16 %v390, %v389
      %v448 = vpack.c.b16 %v392, %v391
      %v449 = vpack.c.b16 %v394, %v393
      %v450 = vpack.c.b16 %v396, %v395
      %v451 = vpack.c.b16 %v398, %v397
      %v452 = vpack.c.b16 %v400, %v399
      %v453 = vpack.c.b16 %v402, %v401
      %v454 = vpack.c.b16 %v404, %v403
      %v455 = vpack.c.b16 %v406, %v405
      %v456 = vpack.c.b16 %v408, %v407
      %v457 = vpack.c.b16 %v410, %v409
      %v458 = vpack.c.b16 %v412, %v411
      %v459 = vpack.c.b16 %v414, %v413
      %v460 = vpack.c.b16 %v416, %v415
      %v461 = vpack.c.b16 %v418, %v417
      %v462 = vpack.c.b16 %v420, %v419
      %v463 = vpack.c.b16 %v422, %v421
      %v464 = vpack.c.b16 %v424, %v423
      %v465 = vpack.c.b16 %v426, %v425
      %v466 = vpack.c.b16 %v428, %v427
      %v467 = vpack.c.b16 %v430, %v429
      %v468 = vpack.c.b16 %v432, %v431
      %v469 = vpack.c.b16 %v434, %v433
      %v470 = vpack.c.b16 %v436, %v435
      %v471 = vpack.c.b16 %v438, %v437
      %v472 = vpack.c.b16 %v440, %v439
      %v521 = vunpack.c.l.b16 %v290
      %v522 = vunpack.c.l.b16 %v291
      %v523 = vunpack.c.l.b16 %v292
      %v524 = vunpack.c.l.b16 %v293
      %v525 = vunpack.c.l.b16 %v294
      %v526 = vunpack.c.l.b16 %v295
      %v527 = vunpack.c.l.b16 %v296
      %v528 = vunpack.c.l.b16 %v297
      %v529 = vunpack.c.l.b16 %v298
      %v530 = vunpack.c.l.b16 %v299
      %v531 = vunpack.c.l.b16 %v300
      %v532 = vunpack.c.l.b16 %v301
      %v533 = vunpack.c.l.b16 %v302
      %v534 = vunpack.c.l.b16 %v303
      %v535 = vunpack.c.l.b16 %v304
      %v536 = vunpack.c.l.b16 %v305
      %v537 = vpack.c.b16 %v522, %v521
      %v538 = vpack.c.b16 %v524, %v523
      %v539 = vpack.c.b16 %v526, %v525
      %v540 = vpack.c.b16 %v528, %v527
      %v541 = vpack.c.b16 %v530, %v529
      %v542 = vpack.c.b16 %v532, %v531
      %v543 = vpack.c.b16 %v534, %v533
      %v544 = vpack.c.b16 %v536, %v535
      %553 = vmatprep.subr.bf16.mxu0 0
      %554 = vmatpush1.bf16.msra.mxu0 %v544
      %555 = vmatprep.subr.bf16.mxu0 0
      %556 = vmatpush1.bf16.msra.mxu0 %v543
      %557 = vmatprep.subr.bf16.mxu0 0
      %558 = vmatpush1.bf16.msra.mxu0 %v542
      %559 = vmatprep.subr.bf16.mxu0 0
      %560 = vmatpush1.bf16.msra.mxu0 %v541
      %561 = vmatprep.subr.bf16.mxu0 0
      %562 = vmatpush1.bf16.msra.mxu0 %v540
      %563 = vmatprep.subr.bf16.mxu0 0
      %564 = vmatpush1.bf16.msra.mxu0 %v539
      %565 = vmatprep.subr.bf16.mxu0 0
      %566 = vmatpush1.bf16.msra.mxu0 %v538
      %567 = vmatprep.subr.bf16.mxu0 0
      %568 = vmatpush1.bf16.msra.mxu0 %v537
      %569 = vmatprep.subr.bf16.mxu0 0
      %570 = vmatpush2.bf16.msra.mxu0 0
      %571 = vmatprep.subr.bf16.mxu0 0
      %572 = vmatpush2.bf16.msra.mxu0 0
      %573 = vmatprep.subr.bf16.mxu0 0
      %574 = vmatpush2.bf16.msra.mxu0 0
      %575 = vmatprep.subr.bf16.mxu0 0
      %576 = vmatpush2.bf16.msra.mxu0 0
      %577 = vmatprep.subr.bf16.mxu0 0
      %578 = vmatpush2.bf16.msra.mxu0 0
      %579 = vmatprep.subr.bf16.mxu0 0
      %580 = vmatpush2.bf16.msra.mxu0 0
      %581 = vmatprep.subr.bf16.mxu0 0
      %582 = vmatpush2.bf16.msra.mxu0 0
      %583 = vmatprep.subr.bf16.mxu0 0
      %584 = vmatpush2.bf16.msra.mxu0 0
      %585 = vmatprep.mubr.bf16.mxu0 0
      %586 = vmatmul.mubr.bf16.gmra.mxu0 %v441
      %v587 = vpop.f32.mrf.mxu0
      %v588 = vadd.f32 %v311, %v587
      %v589 = vpop.f32.mrf.mxu0
      %v590 = vpop.f32.mrf.mxu0
      %v591 = vadd.f32 %v311, %v590
      %v592 = vpop.f32.mrf.mxu0
      %593 = vmatprep.mubr.bf16.mxu0 0
      %594 = vmatmul.mubr.bf16.gmra.mxu0 %v442
      %v595 = vpop.f32.mrf.mxu0
      %v596 = vadd.f32 %v311, %v595
      %v597 = vpop.f32.mrf.mxu0
      %v598 = vpop.f32.mrf.mxu0
      %v599 = vadd.f32 %v311, %v598
      %v600 = vpop.f32.mrf.mxu0
      %601 = vmatprep.mubr.bf16.mxu0 0
      %602 = vmatmul.mubr.bf16.gmra.mxu0 %v443
      %v603 = vpop.f32.mrf.mxu0
      %v604 = vadd.f32 %v311, %v603
      %v605 = vpop.f32.mrf.mxu0
      %v606 = vpop.f32.mrf.mxu0
      %v607 = vadd.f32 %v311, %v606
      %v608 = vpop.f32.mrf.mxu0
      %609 = vmatprep.mubr.bf16.mxu0 0
      %610 = vmatmul.mubr.bf16.gmra.mxu0 %v444
      %v611 = vpop.f32.mrf.mxu0
      %v612 = vadd.f32 %v311, %v611
      %v613 = vpop.f32.mrf.mxu0
      %v614 = vpop.f32.mrf.mxu0
      %v615 = vadd.f32 %v311, %v614
      %v616 = vpop.f32.mrf.mxu0
      %617 = vmatprep.mubr.bf16.mxu0 0
      %618 = vmatmul.mubr.bf16.gmra.mxu0 %v445
      %v619 = vpop.f32.mrf.mxu0
      %v620 = vadd.f32 %v311, %v619
      %v621 = vpop.f32.mrf.mxu0
      %v622 = vpop.f32.mrf.mxu0
      %v623 = vadd.f32 %v311, %v622
      %v624 = vpop.f32.mrf.mxu0
      %625 = vmatprep.mubr.bf16.mxu0 0
      %626 = vmatmul.mubr.bf16.gmra.mxu0 %v446
      %v627 = vpop.f32.mrf.mxu0
      %v628 = vadd.f32 %v311, %v627
      %v629 = vpop.f32.mrf.mxu0
      %v630 = vpop.f32.mrf.mxu0
      %v631 = vadd.f32 %v311, %v630
      %v632 = vpop.f32.mrf.mxu0
      %633 = vmatprep.mubr.bf16.mxu0 0
      %634 = vmatmul.mubr.bf16.gmra.mxu0 %v447
      %v635 = vpop.f32.mrf.mxu0
      %v636 = vadd.f32 %v311, %v635
      %v637 = vpop.f32.mrf.mxu0
      %v638 = vpop.f32.mrf.mxu0
      %v639 = vadd.f32 %v311, %v638
      %v640 = vpop.f32.mrf.mxu0
      %641 = vmatprep.mubr.bf16.mxu0 0
      %642 = vmatmul.mubr.bf16.gmra.mxu0 %v448
      %v643 = vpop.f32.mrf.mxu0
      %v644 = vadd.f32 %v311, %v643
      %v645 = vpop.f32.mrf.mxu0
      %v646 = vpop.f32.mrf.mxu0
      %v647 = vadd.f32 %v311, %v646
      %v648 = vpop.f32.mrf.mxu0
      %649 = vmatprep.mubr.bf16.mxu0 0
      %650 = vmatmul.mubr.bf16.gmra.mxu0 %v449
      %v651 = vpop.f32.mrf.mxu0
      %v652 = vadd.f32 %v311, %v651
      %v653 = vpop.f32.mrf.mxu0
      %v654 = vpop.f32.mrf.mxu0
      %v655 = vadd.f32 %v311, %v654
      %v656 = vpop.f32.mrf.mxu0
      %657 = vmatprep.mubr.bf16.mxu0 0
      %658 = vmatmul.mubr.bf16.gmra.mxu0 %v450
      %v659 = vpop.f32.mrf.mxu0
      %v660 = vadd.f32 %v311, %v659
      %v661 = vpop.f32.mrf.mxu0
      %v662 = vpop.f32.mrf.mxu0
      %v663 = vadd.f32 %v311, %v662
      %v664 = vpop.f32.mrf.mxu0
      %665 = vmatprep.mubr.bf16.mxu0 0
      %666 = vmatmul.mubr.bf16.gmra.mxu0 %v451
      %v667 = vpop.f32.mrf.mxu0
      %v668 = vadd.f32 %v311, %v667
      %v669 = vpop.f32.mrf.mxu0
      %v670 = vpop.f32.mrf.mxu0
      %v671 = vadd.f32 %v311, %v670
      %v672 = vpop.f32.mrf.mxu0
      %673 = vmatprep.mubr.bf16.mxu0 0
      %674 = vmatmul.mubr.bf16.gmra.mxu0 %v452
      %v675 = vpop.f32.mrf.mxu0
      %v676 = vadd.f32 %v311, %v675
      %v677 = vpop.f32.mrf.mxu0
      %v678 = vpop.f32.mrf.mxu0
      %v679 = vadd.f32 %v311, %v678
      %v680 = vpop.f32.mrf.mxu0
      %681 = vmatprep.mubr.bf16.mxu0 0
      %682 = vmatmul.mubr.bf16.gmra.mxu0 %v453
      %v683 = vpop.f32.mrf.mxu0
      %v684 = vadd.f32 %v311, %v683
      %v685 = vpop.f32.mrf.mxu0
      %v686 = vpop.f32.mrf.mxu0
      %v687 = vadd.f32 %v311, %v686
      %v688 = vpop.f32.mrf.mxu0
      %689 = vmatprep.mubr.bf16.mxu0 0
      %690 = vmatmul.mubr.bf16.gmra.mxu0 %v454
      %v691 = vpop.f32.mrf.mxu0
      %v692 = vadd.f32 %v311, %v691
      %v693 = vpop.f32.mrf.mxu0
      %v694 = vpop.f32.mrf.mxu0
      %v695 = vadd.f32 %v311, %v694
      %v696 = vpop.f32.mrf.mxu0
      %697 = vmatprep.mubr.bf16.mxu0 0
      %698 = vmatmul.mubr.bf16.gmra.mxu0 %v455
      %v699 = vpop.f32.mrf.mxu0
      %v700 = vadd.f32 %v311, %v699
      %v701 = vpop.f32.mrf.mxu0
      %v702 = vpop.f32.mrf.mxu0
      %v703 = vadd.f32 %v311, %v702
      %v704 = vpop.f32.mrf.mxu0
      %705 = vmatprep.mubr.bf16.mxu0 0
      %706 = vmatmul.mubr.bf16.gmra.mxu0 %v456
      %v707 = vpop.f32.mrf.mxu0
      %v708 = vadd.f32 %v311, %v707
      %v709 = vpop.f32.mrf.mxu0
      %v710 = vpop.f32.mrf.mxu0
      %v711 = vadd.f32 %v311, %v710
      %v712 = vpop.f32.mrf.mxu0
      %713 = vmatprep.mubr.bf16.mxu0 0
      %714 = vmatmul.mubr.bf16.gmra.mxu0 %v457
      %v715 = vpop.f32.mrf.mxu0
      %v716 = vadd.f32 %v311, %v715
      %v717 = vpop.f32.mrf.mxu0
      %v718 = vpop.f32.mrf.mxu0
      %v719 = vadd.f32 %v311, %v718
      %v720 = vpop.f32.mrf.mxu0
      %721 = vmatprep.mubr.bf16.mxu0 0
      %722 = vmatmul.mubr.bf16.gmra.mxu0 %v458
      %v723 = vpop.f32.mrf.mxu0
      %v724 = vadd.f32 %v311, %v723
      %v725 = vpop.f32.mrf.mxu0
      %v726 = vpop.f32.mrf.mxu0
      %v727 = vadd.f32 %v311, %v726
      %v728 = vpop.f32.mrf.mxu0
      %729 = vmatprep.mubr.bf16.mxu0 0
      %730 = vmatmul.mubr.bf16.gmra.mxu0 %v459
      %v731 = vpop.f32.mrf.mxu0
      %v732 = vadd.f32 %v311, %v731
      %v733 = vpop.f32.mrf.mxu0
      %v734 = vpop.f32.mrf.mxu0
      %v735 = vadd.f32 %v311, %v734
      %v736 = vpop.f32.mrf.mxu0
      %737 = vmatprep.mubr.bf16.mxu0 0
      %738 = vmatmul.mubr.bf16.gmra.mxu0 %v460
      %v739 = vpop.f32.mrf.mxu0
      %v740 = vadd.f32 %v311, %v739
      %v741 = vpop.f32.mrf.mxu0
      %v742 = vpop.f32.mrf.mxu0
      %v743 = vadd.f32 %v311, %v742
      %v744 = vpop.f32.mrf.mxu0
      %745 = vmatprep.mubr.bf16.mxu0 0
      %746 = vmatmul.mubr.bf16.gmra.mxu0 %v461
      %v747 = vpop.f32.mrf.mxu0
      %v748 = vadd.f32 %v311, %v747
      %v749 = vpop.f32.mrf.mxu0
      %v750 = vpop.f32.mrf.mxu0
      %v751 = vadd.f32 %v311, %v750
      %v752 = vpop.f32.mrf.mxu0
      %753 = vmatprep.mubr.bf16.mxu0 0
      %754 = vmatmul.mubr.bf16.gmra.mxu0 %v462
      %v755 = vpop.f32.mrf.mxu0
      %v756 = vadd.f32 %v311, %v755
      %v757 = vpop.f32.mrf.mxu0
      %v758 = vpop.f32.mrf.mxu0
      %v759 = vadd.f32 %v311, %v758
      %v760 = vpop.f32.mrf.mxu0
      %761 = vmatprep.mubr.bf16.mxu0 0
      %762 = vmatmul.mubr.bf16.gmra.mxu0 %v463
      %v763 = vpop.f32.mrf.mxu0
      %v764 = vadd.f32 %v311, %v763
      %v765 = vpop.f32.mrf.mxu0
      %v766 = vpop.f32.mrf.mxu0
      %v767 = vadd.f32 %v311, %v766
      %v768 = vpop.f32.mrf.mxu0
      %769 = vmatprep.mubr.bf16.mxu0 0
      %770 = vmatmul.mubr.bf16.gmra.mxu0 %v464
      %v771 = vpop.f32.mrf.mxu0
      %v772 = vadd.f32 %v311, %v771
      %v773 = vpop.f32.mrf.mxu0
      %v774 = vpop.f32.mrf.mxu0
      %v775 = vadd.f32 %v311, %v774
      %v776 = vpop.f32.mrf.mxu0
      %777 = vmatprep.mubr.bf16.mxu0 0
      %778 = vmatmul.mubr.bf16.gmra.mxu0 %v465
      %v779 = vpop.f32.mrf.mxu0
      %v780 = vadd.f32 %v311, %v779
      %v781 = vpop.f32.mrf.mxu0
      %v782 = vpop.f32.mrf.mxu0
      %v783 = vadd.f32 %v311, %v782
      %v784 = vpop.f32.mrf.mxu0
      %785 = vmatprep.mubr.bf16.mxu0 0
      %786 = vmatmul.mubr.bf16.gmra.mxu0 %v466
      %v787 = vpop.f32.mrf.mxu0
      %v788 = vadd.f32 %v311, %v787
      %v789 = vpop.f32.mrf.mxu0
      %v790 = vpop.f32.mrf.mxu0
      %v791 = vadd.f32 %v311, %v790
      %v792 = vpop.f32.mrf.mxu0
      %793 = vmatprep.mubr.bf16.mxu0 0
      %794 = vmatmul.mubr.bf16.gmra.mxu0 %v467
      %v795 = vpop.f32.mrf.mxu0
      %v796 = vadd.f32 %v311, %v795
      %v797 = vpop.f32.mrf.mxu0
      %v798 = vpop.f32.mrf.mxu0
      %v799 = vadd.f32 %v311, %v798
      %v800 = vpop.f32.mrf.mxu0
      %801 = vmatprep.mubr.bf16.mxu0 0
      %802 = vmatmul.mubr.bf16.gmra.mxu0 %v468
      %v803 = vpop.f32.mrf.mxu0
      %v804 = vadd.f32 %v311, %v803
      %v805 = vpop.f32.mrf.mxu0
      %v806 = vpop.f32.mrf.mxu0
      %v807 = vadd.f32 %v311, %v806
      %v808 = vpop.f32.mrf.mxu0
      %809 = vmatprep.mubr.bf16.mxu0 0
      %810 = vmatmul.mubr.bf16.gmra.mxu0 %v469
      %v811 = vpop.f32.mrf.mxu0
      %v812 = vadd.f32 %v311, %v811
      %v813 = vpop.f32.mrf.mxu0
      %v814 = vpop.f32.mrf.mxu0
      %v815 = vadd.f32 %v311, %v814
      %v816 = vpop.f32.mrf.mxu0
      %817 = vmatprep.mubr.bf16.mxu0 0
      %818 = vmatmul.mubr.bf16.gmra.mxu0 %v470
      %v819 = vpop.f32.mrf.mxu0
      %v820 = vadd.f32 %v311, %v819
      %v821 = vpop.f32.mrf.mxu0
      %v822 = vpop.f32.mrf.mxu0
      %v823 = vadd.f32 %v311, %v822
      %v824 = vpop.f32.mrf.mxu0
      %825 = vmatprep.mubr.bf16.mxu0 0
      %826 = vmatmul.mubr.bf16.gmra.mxu0 %v471
      %v827 = vpop.f32.mrf.mxu0
      %v828 = vadd.f32 %v311, %v827
      %v829 = vpop.f32.mrf.mxu0
      %v830 = vpop.f32.mrf.mxu0
      %v831 = vadd.f32 %v311, %v830
      %v832 = vpop.f32.mrf.mxu0
      %833 = vmatprep.mubr.bf16.mxu0 0
      %834 = vmatmul.mubr.bf16.gmra.mxu0 %v472
      %v835 = vpop.f32.mrf.mxu0
      %v836 = vadd.f32 %v311, %v835
      %v837 = vpop.f32.mrf.mxu0
      %v838 = vpop.f32.mrf.mxu0
      %v839 = vadd.f32 %v311, %v838
      %v840 = vpop.f32.mrf.mxu0
      %841 = vdwg.mxu0
      %v842 = vmax.f32 %v588, 0.0
      %v843 = vmax.f32 %v591, 0.0
      %v844 = vmax.f32 %v596, 0.0
      %v845 = vmax.f32 %v599, 0.0
      %v846 = vmax.f32 %v604, 0.0
      %v847 = vmax.f32 %v607, 0.0
      %v848 = vmax.f32 %v612, 0.0
      %v849 = vmax.f32 %v615, 0.0
      %v850 = vmax.f32 %v620, 0.0
      %v851 = vmax.f32 %v623, 0.0
      %v852 = vmax.f32 %v628, 0.0
      %v853 = vmax.f32 %v631, 0.0
      %v854 = vmax.f32 %v636, 0.0
      %v855 = vmax.f32 %v639, 0.0
      %v856 = vmax.f32 %v644, 0.0
      %v857 = vmax.f32 %v647, 0.0
      %v858 = vmax.f32 %v652, 0.0
      %v859 = vmax.f32 %v655, 0.0
      %v860 = vmax.f32 %v660, 0.0
      %v861 = vmax.f32 %v663, 0.0
      %v862 = vmax.f32 %v668, 0.0
      %v863 = vmax.f32 %v671, 0.0
      %v864 = vmax.f32 %v676, 0.0
      %v865 = vmax.f32 %v679, 0.0
      %v866 = vmax.f32 %v684, 0.0
      %v867 = vmax.f32 %v687, 0.0
      %v868 = vmax.f32 %v692, 0.0
      %v869 = vmax.f32 %v695, 0.0
      %v870 = vmax.f32 %v700, 0.0
      %v871 = vmax.f32 %v703, 0.0
      %v872 = vmax.f32 %v708, 0.0
      %v873 = vmax.f32 %v711, 0.0
      %v874 = vmax.f32 %v716, 0.0
      %v875 = vmax.f32 %v719, 0.0
      %v876 = vmax.f32 %v724, 0.0
      %v877 = vmax.f32 %v727, 0.0
      %v878 = vmax.f32 %v732, 0.0
      %v879 = vmax.f32 %v735, 0.0
      %v880 = vmax.f32 %v740, 0.0
      %v881 = vmax.f32 %v743, 0.0
      %v882 = vmax.f32 %v748, 0.0
      %v883 = vmax.f32 %v751, 0.0
      %v884 = vmax.f32 %v756, 0.0
      %v885 = vmax.f32 %v759, 0.0
      %v886 = vmax.f32 %v764, 0.0
      %v887 = vmax.f32 %v767, 0.0
      %v888 = vmax.f32 %v772, 0.0
      %v889 = vmax.f32 %v775, 0.0
      %v890 = vmax.f32 %v780, 0.0
      %v891 = vmax.f32 %v783, 0.0
      %v892 = vmax.f32 %v788, 0.0
      %v893 = vmax.f32 %v791, 0.0
      %v894 = vmax.f32 %v796, 0.0
      %v895 = vmax.f32 %v799, 0.0
      %v896 = vmax.f32 %v804, 0.0
      %v897 = vmax.f32 %v807, 0.0
      %v898 = vmax.f32 %v812, 0.0
      %v899 = vmax.f32 %v815, 0.0
      %v900 = vmax.f32 %v820, 0.0
      %v901 = vmax.f32 %v823, 0.0
      %v902 = vmax.f32 %v828, 0.0
      %v903 = vmax.f32 %v831, 0.0
      %v904 = vmax.f32 %v836, 0.0
      %v905 = vmax.f32 %v839, 0.0
      %v906 = vpack.c.bf16 %v843, %v842
      %v907 = vpack.c.bf16 %v845, %v844
      %v908 = vpack.c.bf16 %v847, %v846
      %v909 = vpack.c.bf16 %v849, %v848
      %v910 = vpack.c.bf16 %v851, %v850
      %v911 = vpack.c.bf16 %v853, %v852
      %v912 = vpack.c.bf16 %v855, %v854
      %v913 = vpack.c.bf16 %v857, %v856
      %v914 = vpack.c.bf16 %v859, %v858
      %v915 = vpack.c.bf16 %v861, %v860
      %v916 = vpack.c.bf16 %v863, %v862
      %v917 = vpack.c.bf16 %v865, %v864
      %v918 = vpack.c.bf16 %v867, %v866
      %v919 = vpack.c.bf16 %v869, %v868
      %v920 = vpack.c.bf16 %v871, %v870
      %v921 = vpack.c.bf16 %v873, %v872
      %v922 = vpack.c.bf16 %v875, %v874
      %v923 = vpack.c.bf16 %v877, %v876
      %v924 = vpack.c.bf16 %v879, %v878
      %v925 = vpack.c.bf16 %v881, %v880
      %v926 = vpack.c.bf16 %v883, %v882
      %v927 = vpack.c.bf16 %v885, %v884
      %v928 = vpack.c.bf16 %v887, %v886
      %v929 = vpack.c.bf16 %v889, %v888
      %v930 = vpack.c.bf16 %v891, %v890
      %v931 = vpack.c.bf16 %v893, %v892
      %v932 = vpack.c.bf16 %v895, %v894
      %v933 = vpack.c.bf16 %v897, %v896
      %v934 = vpack.c.bf16 %v899, %v898
      %v935 = vpack.c.bf16 %v901, %v900
      %v936 = vpack.c.bf16 %v903, %v902
      %v937 = vpack.c.bf16 %v905, %v904
      %v970 = vunpack.c.l.b16 %v906
      %v971 = vunpack.c.h.b16 %v906
      %v972 = vunpack.c.l.b16 %v907
      %v973 = vunpack.c.h.b16 %v907
      %v974 = vunpack.c.l.b16 %v908
      %v975 = vunpack.c.h.b16 %v908
      %v976 = vunpack.c.l.b16 %v909
      %v977 = vunpack.c.h.b16 %v909
      %v978 = vunpack.c.l.b16 %v910
      %v979 = vunpack.c.h.b16 %v910
      %v980 = vunpack.c.l.b16 %v911
      %v981 = vunpack.c.h.b16 %v911
      %v982 = vunpack.c.l.b16 %v912
      %v983 = vunpack.c.h.b16 %v912
      %v984 = vunpack.c.l.b16 %v913
      %v985 = vunpack.c.h.b16 %v913
      %v986 = vunpack.c.l.b16 %v914
      %v987 = vunpack.c.h.b16 %v914
      %v988 = vunpack.c.l.b16 %v915
      %v989 = vunpack.c.h.b16 %v915
      %v990 = vunpack.c.l.b16 %v916
      %v991 = vunpack.c.h.b16 %v916
      %v992 = vunpack.c.l.b16 %v917
      %v993 = vunpack.c.h.b16 %v917
      %v994 = vunpack.c.l.b16 %v918
      %v995 = vunpack.c.h.b16 %v918
      %v996 = vunpack.c.l.b16 %v919
      %v997 = vunpack.c.h.b16 %v919
      %v998 = vunpack.c.l.b16 %v920
      %v999 = vunpack.c.h.b16 %v920
      %v1000 = vunpack.c.l.b16 %v921
      %v1001 = vunpack.c.h.b16 %v921
      %v1002 = vunpack.c.l.b16 %v922
      %v1003 = vunpack.c.h.b16 %v922
      %v1004 = vunpack.c.l.b16 %v923
      %v1005 = vunpack.c.h.b16 %v923
      %v1006 = vunpack.c.l.b16 %v924
      %v1007 = vunpack.c.h.b16 %v924
      %v1008 = vunpack.c.l.b16 %v925
      %v1009 = vunpack.c.h.b16 %v925
      %v1010 = vunpack.c.l.b16 %v926
      %v1011 = vunpack.c.h.b16 %v926
      %v1012 = vunpack.c.l.b16 %v927
      %v1013 = vunpack.c.h.b16 %v927
      %v1014 = vunpack.c.l.b16 %v928
      %v1015 = vunpack.c.h.b16 %v928
      %v1016 = vunpack.c.l.b16 %v929
      %v1017 = vunpack.c.h.b16 %v929
      %v1018 = vunpack.c.l.b16 %v930
      %v1019 = vunpack.c.h.b16 %v930
      %v1020 = vunpack.c.l.b16 %v931
      %v1021 = vunpack.c.h.b16 %v931
      %v1022 = vunpack.c.l.b16 %v932
      %v1023 = vunpack.c.h.b16 %v932
      %v1024 = vunpack.c.l.b16 %v933
      %v1025 = vunpack.c.h.b16 %v933
      %v1026 = vunpack.c.l.b16 %v934
      %v1027 = vunpack.c.h.b16 %v934
      %v1028 = vunpack.c.l.b16 %v935
      %v1029 = vunpack.c.h.b16 %v935
      %v1030 = vunpack.c.l.b16 %v936
      %v1031 = vunpack.c.h.b16 %v936
      %v1032 = vunpack.c.l.b16 %v937
      %v1033 = vunpack.c.h.b16 %v937
      %v1034 = vpack.c.b16 %v970, %v970
      %v1035 = vpack.c.b16 %v971, %v971
      %v1036 = vpack.c.b16 %v972, %v972
      %v1037 = vpack.c.b16 %v973, %v973
      %v1038 = vpack.c.b16 %v974, %v974
      %v1039 = vpack.c.b16 %v975, %v975
      %v1040 = vpack.c.b16 %v976, %v976
      %v1041 = vpack.c.b16 %v977, %v977
      %v1042 = vpack.c.b16 %v978, %v978
      %v1043 = vpack.c.b16 %v979, %v979
      %v1044 = vpack.c.b16 %v980, %v980
      %v1045 = vpack.c.b16 %v981, %v981
      %v1046 = vpack.c.b16 %v982, %v982
      %v1047 = vpack.c.b16 %v983, %v983
      %v1048 = vpack.c.b16 %v984, %v984
      %v1049 = vpack.c.b16 %v985, %v985
      %v1050 = vpack.c.b16 %v986, %v986
      %v1051 = vpack.c.b16 %v987, %v987
      %v1052 = vpack.c.b16 %v988, %v988
      %v1053 = vpack.c.b16 %v989, %v989
      %v1054 = vpack.c.b16 %v990, %v990
      %v1055 = vpack.c.b16 %v991, %v991
      %v1056 = vpack.c.b16 %v992, %v992
      %v1057 = vpack.c.b16 %v993, %v993
      %v1058 = vpack.c.b16 %v994, %v994
      %v1059 = vpack.c.b16 %v995, %v995
      %v1060 = vpack.c.b16 %v996, %v996
      %v1061 = vpack.c.b16 %v997, %v997
      %v1062 = vpack.c.b16 %v998, %v998
      %v1063 = vpack.c.b16 %v999, %v999
      %v1064 = vpack.c.b16 %v1000, %v1000
      %v1065 = vpack.c.b16 %v1001, %v1001
      %v1066 = vpack.c.b16 %v1002, %v1002
      %v1067 = vpack.c.b16 %v1003, %v1003
      %v1068 = vpack.c.b16 %v1004, %v1004
      %v1069 = vpack.c.b16 %v1005, %v1005
      %v1070 = vpack.c.b16 %v1006, %v1006
      %v1071 = vpack.c.b16 %v1007, %v1007
      %v1072 = vpack.c.b16 %v1008, %v1008
      %v1073 = vpack.c.b16 %v1009, %v1009
      %v1074 = vpack.c.b16 %v1010, %v1010
      %v1075 = vpack.c.b16 %v1011, %v1011
      %v1076 = vpack.c.b16 %v1012, %v1012
      %v1077 = vpack.c.b16 %v1013, %v1013
      %v1078 = vpack.c.b16 %v1014, %v1014
      %v1079 = vpack.c.b16 %v1015, %v1015
      %v1080 = vpack.c.b16 %v1016, %v1016
      %v1081 = vpack.c.b16 %v1017, %v1017
      %v1082 = vpack.c.b16 %v1018, %v1018
      %v1083 = vpack.c.b16 %v1019, %v1019
      %v1084 = vpack.c.b16 %v1020, %v1020
      %v1085 = vpack.c.b16 %v1021, %v1021
      %v1086 = vpack.c.b16 %v1022, %v1022
      %v1087 = vpack.c.b16 %v1023, %v1023
      %v1088 = vpack.c.b16 %v1024, %v1024
      %v1089 = vpack.c.b16 %v1025, %v1025
      %v1090 = vpack.c.b16 %v1026, %v1026
      %v1091 = vpack.c.b16 %v1027, %v1027
      %v1092 = vpack.c.b16 %v1028, %v1028
      %v1093 = vpack.c.b16 %v1029, %v1029
      %v1094 = vpack.c.b16 %v1030, %v1030
      %v1095 = vpack.c.b16 %v1031, %v1031
      %v1096 = vpack.c.b16 %v1032, %v1032
      %v1097 = vpack.c.b16 %v1033, %v1033
      %1162 = vst [vmem:[%s223] sm:$0xf] %v1034
      %1163 = vst [vmem:[%s223 + $0x4] sm:$0xf] %v1035
      %1164 = vst [vmem:[%s223 + $0x8] sm:$0xf] %v1036
      %1165 = vst [vmem:[%s223 + $0xc] sm:$0xf] %v1037
      %1166 = vst [vmem:[%s223 + $0x10] sm:$0xf] %v1038
      %1167 = vst [vmem:[%s223 + $0x14] sm:$0xf] %v1039
      %1168 = vst [vmem:[%s223 + $0x18] sm:$0xf] %v1040
      %1169 = vst [vmem:[%s223 + $0x1c] sm:$0xf] %v1041
      %1170 = vst [vmem:[%s223 + $0x20] sm:$0xf] %v1042
      %1171 = vst [vmem:[%s223 + $0x24] sm:$0xf] %v1043
      %1172 = vst [vmem:[%s223 + $0x28] sm:$0xf] %v1044
      %1173 = vst [vmem:[%s223 + $0x2c] sm:$0xf] %v1045
      %1174 = vst [vmem:[%s223 + $0x30] sm:$0xf] %v1046
      %1175 = vst [vmem:[%s223 + $0x34] sm:$0xf] %v1047
      %1176 = vst [vmem:[%s223 + $0x38] sm:$0xf] %v1048
      %1177 = vst [vmem:[%s223 + $0x3c] sm:$0xf] %v1049
      %1178 = vst [vmem:[%s223 + $0x40] sm:$0xf] %v1050
      %1179 = vst [vmem:[%s223 + $0x44] sm:$0xf] %v1051
      %1180 = vst [vmem:[%s223 + $0x48] sm:$0xf] %v1052
      %1181 = vst [vmem:[%s223 + $0x4c] sm:$0xf] %v1053
      %1182 = vst [vmem:[%s223 + $0x50] sm:$0xf] %v1054
      %1183 = vst [vmem:[%s223 + $0x54] sm:$0xf] %v1055
      %1184 = vst [vmem:[%s223 + $0x58] sm:$0xf] %v1056
      %1185 = vst [vmem:[%s223 + $0x5c] sm:$0xf] %v1057
      %1186 = vst [vmem:[%s223 + $0x60] sm:$0xf] %v1058
      %1187 = vst [vmem:[%s223 + $0x64] sm:$0xf] %v1059
      %1188 = vst [vmem:[%s223 + $0x68] sm:$0xf] %v1060
      %1189 = vst [vmem:[%s223 + $0x6c] sm:$0xf] %v1061
      %1190 = vst [vmem:[%s223 + $0x70] sm:$0xf] %v1062
      %1191 = vst [vmem:[%s223 + $0x74] sm:$0xf] %v1063
      %1192 = vst [vmem:[%s223 + $0x78] sm:$0xf] %v1064
      %1193 = vst [vmem:[%s223 + $0x7c] sm:$0xf] %v1065
      %1194 = vst [vmem:[%s223 + $0x80] sm:$0xf] %v1066
      %1195 = vst [vmem:[%s223 + $0x84] sm:$0xf] %v1067
      %1196 = vst [vmem:[%s223 + $0x88] sm:$0xf] %v1068
      %1197 = vst [vmem:[%s223 + $0x8c] sm:$0xf] %v1069
      %1198 = vst [vmem:[%s223 + $0x90] sm:$0xf] %v1070
      %1199 = vst [vmem:[%s223 + $0x94] sm:$0xf] %v1071
      %1200 = vst [vmem:[%s223 + $0x98] sm:$0xf] %v1072
      %1201 = vst [vmem:[%s223 + $0x9c] sm:$0xf] %v1073
      %1202 = vst [vmem:[%s223 + $0xa0] sm:$0xf] %v1074
      %1203 = vst [vmem:[%s223 + $0xa4] sm:$0xf] %v1075
      %1204 = vst [vmem:[%s223 + $0xa8] sm:$0xf] %v1076
      %1205 = vst [vmem:[%s223 + $0xac] sm:$0xf] %v1077
      %1206 = vst [vmem:[%s223 + $0xb0] sm:$0xf] %v1078
      %1207 = vst [vmem:[%s223 + $0xb4] sm:$0xf] %v1079
      %1208 = vst [vmem:[%s223 + $0xb8] sm:$0xf] %v1080
      %1209 = vst [vmem:[%s223 + $0xbc] sm:$0xf] %v1081
      %1210 = vst [vmem:[%s223 + $0xc0] sm:$0xf] %v1082
      %1211 = vst [vmem:[%s223 + $0xc4] sm:$0xf] %v1083
      %1212 = vst [vmem:[%s223 + $0xc8] sm:$0xf] %v1084
      %1213 = vst [vmem:[%s223 + $0xcc] sm:$0xf] %v1085
      %1214 = vst [vmem:[%s223 + $0xd0] sm:$0xf] %v1086
      %1215 = vst [vmem:[%s223 + $0xd4] sm:$0xf] %v1087
      %1216 = vst [vmem:[%s223 + $0xd8] sm:$0xf] %v1088
      %1217 = vst [vmem:[%s223 + $0xdc] sm:$0xf] %v1089
      %1218 = vst [vmem:[%s223 + $0xe0] sm:$0xf] %v1090
      %1219 = vst [vmem:[%s223 + $0xe4] sm:$0xf] %v1091
      %1220 = vst [vmem:[%s223 + $0xe8] sm:$0xf] %v1092
      %1221 = vst [vmem:[%s223 + $0xec] sm:$0xf] %v1093
      %1222 = vst [vmem:[%s223 + $0xf0] sm:$0xf] %v1094
      %1223 = vst [vmem:[%s223 + $0xf4] sm:$0xf] %v1095
      %1224 = vst [vmem:[%s223 + $0xf8] sm:$0xf] %v1096
      %1225 = vst [vmem:[%s223 + $0xfc] sm:$0xf] %v1097
      %s1226 = smul.u32 64, %s18
      %p1227 = scmp.lt.s32.totalorder %s1226, 127
      %s1228 = scalar_select %p1227, %s1226, 127
      %p1229 = scmp.lt.s32.totalorder %s19, 0
      %s1230 = scalar_select %p1229, %s19, 0
      %s1231 = sadd.s32 %s1230, %s1228
      %s1232 = smul.addr %s1231, 4
      %s1233 = scalar_lea.vmem %s3, %s1232
      // Predicated region
      $region33: #{_lambda_.8} parent=31 // pred_check
        %p1234 = pneg %p124
      $region34: #{_lambda_.8} parent=31 // pred_check_branch
        %1236 = sbr.rel (%p1234) target = $region36
      $region35: #{_lambda_.8} parent=31 // pred_region
        %s1237 = smul.u32 64, %s18
      $region36: #{_lambda_.8} parent=31 // pred_fallthru
        _
    $region32: #{_lambda_.8} parent=5 // pred_fallthru
      _
    %p1238 = scmp.le.s32.totalorder 2, %s9
    // Predicated region
    $region37: #{_lambda_.8} parent=5 // pred_check
      %p1239 = pneg %p1238
    $region38: #{_lambda_.8} parent=5 // pred_check_branch
      %1241 = sbr.rel (%p1239) target = $region40
    $region39: #{_lambda_.8} parent=5 // pred_region
      %s1242 = ssub.s32 %s9, 2
      // Predicated region
      $region41: #{_lambda_.8} parent=39 // pred_check
        %p1243 = pneg %p130
      $region42: #{_lambda_.8} parent=39 // pred_check_branch
        %1245 = sbr.rel (%p1243) target = $region44
      $region43: #{_lambda_.8} parent=39 // pred_region
        %s1246 = smul.u32 64, %s20
        %p1247 = scmp.lt.s32.totalorder %s1246, 127
        %s1248 = scalar_select %p1247, %s1246, 127
        %p1249 = scmp.lt.s32.totalorder %s21, 0
        %s1250 = scalar_select %p1249, %s21, 0
        %s1251 = sadd.s32 %s1250, %s1248
        %s1252 = smul.addr %s1251, 4
        %s1253 = scalar_lea.vmem %s3, %s1252
      $region44: #{_lambda_.8} parent=39 // pred_fallthru
        _
    $region40: #{_lambda_.8} parent=5 // pred_fallthru
      _
  $region6: #{_lambda_.8} parent=0 // loop_footer
    %s13 = sadd.s32 1, %s9
  $region7: #{_lambda_.8} parent=0 // loop_footer_branch
    %8 = sbr.rel target = $region3
  $region8: #{_lambda_.8} parent=0 // loop_exit
    _

// kernel: _lambda_.11
$region0: #{_lambda_.11}
  #allocation0 [shape = 'u32[]', space=smem, size = 0x4, offset = 0x4, fixed_abs, tag = 'smem constant byte address 0x4 - core index']
  #allocation1 [shape = 'u32[144,128]{1,0:T(1,128)}', space=vmem, size = 0x12000, scoped, tag = 'internal scratch']
  %s0 = inlined_call_operand.vmem [shape: bf16[16,128], index: 0, kind: input, shape index: {}]
  %s1 = inlined_call_operand.vmem [shape: bf16[128,128], index: 1, kind: input, shape index: {}]
  %s2 = inlined_call_operand.vmem [shape: f32[1,128], index: 2, kind: input, shape index: {}]
  %s3 = inlined_call_operand.vmem [shape: bf16[16,128], index: 3, kind: output, shape index: {}]
  %s4 = sld [smem:[#allocation0]]
  $region22: #{_lambda_.11} parent=0
    _
  %s6 = ssub.s32 1, %s4
  %s7 = scalar_select 0, %s6, %s4
  // Predicated region
  $region2: #{_lambda_.11} parent=0 // pred_check
    _
  $region3: #{_lambda_.11} parent=0 // pred_check_branch
    %9 = sbr.rel (0) target = $region5
  $region4: #{_lambda_.11} parent=0 // pred_region
    _
  $region5: #{_lambda_.11} parent=0 // pred_fallthru
    _
  // Predicated region
  $region6: #{_lambda_.11} parent=0 // pred_check
    _
  $region7: #{_lambda_.11} parent=0 // pred_check_branch
    %11 = sbr.rel (0) target = $region9
  $region8: #{_lambda_.11} parent=0 // pred_region
    _
  $region9: #{_lambda_.11} parent=0 // pred_fallthru
    _
  // Predicated region
  $region10: #{_lambda_.11} parent=0 // pred_check
    _
  $region11: #{_lambda_.11} parent=0 // pred_check_branch
    %13 = sbr.rel (0) target = $region13
  $region12: #{_lambda_.11} parent=0 // pred_region
    _
  $region13: #{_lambda_.11} parent=0 // pred_fallthru
    _
  %v15 = vld [vmem:[%s0] sm:$0xf]
  %v16 = vld [vmem:[%s0 + $0x4] sm:$0xf]
  %v17 = vld [vmem:[%s1] sm:$0xf]
  %v18 = vld [vmem:[%s1 + $0x4] sm:$0xf]
  %v19 = vld [vmem:[%s1 + $0x8] sm:$0xf]
  %v20 = vld [vmem:[%s1 + $0xc] sm:$0xf]
  %v21 = vld [vmem:[%s1 + $0x10] sm:$0xf]
  %v22 = vld [vmem:[%s1 + $0x14] sm:$0xf]
  %v23 = vld [vmem:[%s1 + $0x18] sm:$0xf]
  %v24 = vld [vmem:[%s1 + $0x1c] sm:$0xf]
  %v25 = vld [vmem:[%s1 + $0x20] sm:$0xf]
  %v26 = vld [vmem:[%s1 + $0x24] sm:$0xf]
  %v27 = vld [vmem:[%s1 + $0x28] sm:$0xf]
  %v28 = vld [vmem:[%s1 + $0x2c] sm:$0xf]
  %v29 = vld [vmem:[%s1 + $0x30] sm:$0xf]
  %v30 = vld [vmem:[%s1 + $0x34] sm:$0xf]
  %v31 = vld [vmem:[%s1 + $0x38] sm:$0xf]
  %v32 = vld [vmem:[%s1 + $0x3c] sm:$0xf]
  %v33 = vld [vmem:[%s2] sm:$0x1]
  %v35 = vlaneseq
  %v36 = vshrl.u32 %v35, 7
  %v37 = vsub.s32 0, %v36
  %v38 = vrot.slane %v33, %v37
  %v42 = vunpack.c.l.b16 %v15
  %v43 = vunpack.c.l.b16 %v16
  %v44 = vpack.c.b16 %v43, %v42
  %v62 = vunpack.c.l.b16 %v17
  %v63 = vunpack.c.l.b16 %v18
  %v64 = vunpack.c.l.b16 %v19
  %v65 = vunpack.c.l.b16 %v20
  %v66 = vunpack.c.l.b16 %v21
  %v67 = vunpack.c.l.b16 %v22
  %v68 = vunpack.c.l.b16 %v23
  %v69 = vunpack.c.l.b16 %v24
  %v70 = vunpack.c.l.b16 %v25
  %v71 = vunpack.c.l.b16 %v26
  %v72 = vunpack.c.l.b16 %v27
  %v73 = vunpack.c.l.b16 %v28
  %v74 = vunpack.c.l.b16 %v29
  %v75 = vunpack.c.l.b16 %v30
  %v76 = vunpack.c.l.b16 %v31
  %v77 = vunpack.c.l.b16 %v32
  %v78 = vpack.c.b16 %v63, %v62
  %v79 = vpack.c.b16 %v65, %v64
  %v80 = vpack.c.b16 %v67, %v66
  %v81 = vpack.c.b16 %v69, %v68
  %v82 = vpack.c.b16 %v71, %v70
  %v83 = vpack.c.b16 %v73, %v72
  %v84 = vpack.c.b16 %v75, %v74
  %v85 = vpack.c.b16 %v77, %v76
  %94 = vmatprep.subr.bf16.mxu0 0
  %95 = vmatpush1.bf16.msra.mxu0 %v85
  %96 = vmatprep.subr.bf16.mxu0 0
  %97 = vmatpush1.bf16.msra.mxu0 %v84
  %98 = vmatprep.subr.bf16.mxu0 0
  %99 = vmatpush1.bf16.msra.mxu0 %v83
  %100 = vmatprep.subr.bf16.mxu0 0
  %101 = vmatpush1.bf16.msra.mxu0 %v82
  %102 = vmatprep.subr.bf16.mxu0 0
  %103 = vmatpush1.bf16.msra.mxu0 %v81
  %104 = vmatprep.subr.bf16.mxu0 0
  %105 = vmatpush1.bf16.msra.mxu0 %v80
  %106 = vmatprep.subr.bf16.mxu0 0
  %107 = vmatpush1.bf16.msra.mxu0 %v79
  %108 = vmatprep.subr.bf16.mxu0 0
  %109 = vmatpush1.bf16.msra.mxu0 %v78
  %110 = vmatprep.subr.bf16.mxu0 0
  %111 = vmatpush2.bf16.msra.mxu0 0
  %112 = vmatprep.subr.bf16.mxu0 0
  %113 = vmatpush2.bf16.msra.mxu0 0
  %114 = vmatprep.subr.bf16.mxu0 0
  %115 = vmatpush2.bf16.msra.mxu0 0
  %116 = vmatprep.subr.bf16.mxu0 0
  %117 = vmatpush2.bf16.msra.mxu0 0
  %118 = vmatprep.subr.bf16.mxu0 0
  %119 = vmatpush2.bf16.msra.mxu0 0
  %120 = vmatprep.subr.bf16.mxu0 0
  %121 = vmatpush2.bf16.msra.mxu0 0
  %122 = vmatprep.subr.bf16.mxu0 0
  %123 = vmatpush2.bf16.msra.mxu0 0
  %124 = vmatprep.subr.bf16.mxu0 0
  %125 = vmatpush2.bf16.msra.mxu0 0
  %126 = vmatprep.mubr.bf16.mxu0 0
  %127 = vmatmul.mubr.bf16.gmra.mxu0 %v44
  %v128 = vpop.f32.mrf.mxu0
  %v129 = vadd.f32 %v38, %v128
  %v130 = vpop.f32.mrf.mxu0
  %v131 = vpop.f32.mrf.mxu0
  %v132 = vadd.f32 %v38, %v131
  %v133 = vpop.f32.mrf.mxu0
  %134 = vdwg.mxu0
  %v135 = vmax.f32 %v129, 0.0
  %v136 = vmax.f32 %v132, 0.0
  %v137 = vpack.c.bf16 %v136, %v135
  %v139 = vunpack.c.l.b16 %v137
  %v140 = vunpack.c.h.b16 %v137
  %v141 = vpack.c.b16 %v139, %v139
  %v142 = vpack.c.b16 %v140, %v140
  %145 = vst [vmem:[%s3] sm:$0xf] %v141
  %146 = vst [vmem:[%s3 + $0x4] sm:$0xf] %v142
  // Predicated region
  $region14: #{_lambda_.11} parent=0 // pred_check
    _
  $region15: #{_lambda_.11} parent=0 // pred_check_branch
    %148 = sbr.rel (0) target = $region17
  $region16: #{_lambda_.11} parent=0 // pred_region
    _
  $region17: #{_lambda_.11} parent=0 // pred_fallthru
    _
  // Predicated region
  $region18: #{_lambda_.11} parent=0 // pred_check
    _
  $region19: #{_lambda_.11} parent=0 // pred_check_branch
    %150 = sbr.rel (0) target = $region21
  $region20: #{_lambda_.11} parent=0 // pred_region
    _
  $region21: #{_lambda_.11} parent=0 // pred_fallthru
    _

// kernel: _lambda_.10
$region0: #{_lambda_.10}
  #allocation0 [shape = 'u32[]', space=smem, size = 0x4, offset = 0x4, fixed_abs, tag = 'smem constant byte address 0x4 - core index']
  #allocation1 [shape = 'u32[144,128]{1,0:T(1,128)}', space=vmem, size = 0x12000, scoped, tag = 'internal scratch']
  %s0 = inlined_call_operand.vmem [shape: bf16[2,8,4], index: 0, kind: input, shape index: {}]
  %s1 = inlined_call_operand.vmem [shape: f32[1,1,4], index: 1, kind: input, shape index: {}]
  %s2 = inlined_call_operand.vmem [shape: f32[1,1,4], index: 2, kind: input, shape index: {}]
  %s3 = inlined_call_operand.vmem [shape: bf16[2,8,4], index: 3, kind: output, shape index: {}]
  %s4 = sld [smem:[#allocation0]]
  $region22: #{_lambda_.10} parent=0
    _
  %s6 = ssub.s32 1, %s4
  %s7 = scalar_select 0, %s6, %s4
  // Predicated region
  $region2: #{_lambda_.10} parent=0 // pred_check
    _
  $region3: #{_lambda_.10} parent=0 // pred_check_branch
    %9 = sbr.rel (0) target = $region5
  $region4: #{_lambda_.10} parent=0 // pred_region
    _
  $region5: #{_lambda_.10} parent=0 // pred_fallthru
    _
  // Predicated region
  $region6: #{_lambda_.10} parent=0 // pred_check
    _
  $region7: #{_lambda_.10} parent=0 // pred_check_branch
    %11 = sbr.rel (0) target = $region9
  $region8: #{_lambda_.10} parent=0 // pred_region
    _
  $region9: #{_lambda_.10} parent=0 // pred_fallthru
    _
  // Predicated region
  $region10: #{_lambda_.10} parent=0 // pred_check
    _
  $region11: #{_lambda_.10} parent=0 // pred_check_branch
    %13 = sbr.rel (0) target = $region13
  $region12: #{_lambda_.10} parent=0 // pred_region
    _
  $region13: #{_lambda_.10} parent=0 // pred_fallthru
    _
  %v14 = vld [vmem:[%s0] sm:$0xf]
  %v15 = vld [vmem:[%s0 + $0x4] sm:$0xf]
  %v16 = vunpack.c.l.bf16 %v14
  %v17 = vunpack.c.l.bf16 %v15
  %v18 = vlaneseq
  %v19 = vand.u32 %v18, 127
  %vm20 = vcmask 15360
  %v21 = vsel %vm20, %v16, 0.0
  %22 = vadd.xlane.f32.xlu0 %v21
  %v23 = vpop.xlane.xlu0 %22
  %v24 = vsel %vm20, %v17, 0.0
  %25 = vadd.xlane.f32.xlu0 %v24
  %v26 = vpop.xlane.xlu0 %25
  %v27 = vrot.slane %v23, 4
  %v28 = vadd.f32 %v23, %v27
  %v29 = vrot.slane %v28, 2
  %v30 = vadd.f32 %v28, %v29
  %v31 = vrot.slane %v30, 1
  %v32 = vadd.f32 %v30, %v31
  %v33 = vrot.slane %v26, 4
  %v34 = vadd.f32 %v26, %v33
  %v35 = vrot.slane %v34, 2
  %v36 = vadd.f32 %v34, %v35
  %v37 = vrot.slane %v36, 1
  %v38 = vadd.f32 %v36, %v37
  %v39 = vmul.f32 %v32, 0.0625
  %v40 = vmul.f32 %v38, 0.0625
  %v41 = vmul.f32 %v16, %v16
  %v42 = vmul.f32 %v17, %v17
  %v43 = vsel %vm20, %v41, 0.0
  %44 = vadd.xlane.f32.xlu0 %v43
  %v45 = vpop.xlane.xlu0 %44
  %v46 = vsel %vm20, %v42, 0.0
  %47 = vadd.xlane.f32.xlu0 %v46
  %v48 = vpop.xlane.xlu0 %47
  %v49 = vrot.slane %v45, 4
  %v50 = vadd.f32 %v45, %v49
  %v51 = vrot.slane %v50, 2
  %v52 = vadd.f32 %v50, %v51
  %v53 = vrot.slane %v52, 1
  %v54 = vadd.f32 %v52, %v53
  %v55 = vrot.slane %v48, 4
  %v56 = vadd.f32 %v48, %v55
  %v57 = vrot.slane %v56, 2
  %v58 = vadd.f32 %v56, %v57
  %v59 = vrot.slane %v58, 1
  %v60 = vadd.f32 %v58, %v59
  %v61 = vmul.f32 %v54, 0.0625
  %v62 = vmul.f32 %v60, 0.0625
  %v63 = vmul.f32 %v39, %v39
  %v64 = vmul.f32 %v40, %v40
  %v65 = vsub.f32 %v61, %v63
  %v66 = vsub.f32 %v62, %v64
  %v67 = vadd.f32 %v65, 1e-05
  %v68 = vadd.f32 %v66, 1e-05
  %v69 = vrsqrt.pop %v67
  %v70 = vrsqrt.pop %v68
  %vm71 = vcmp.ge.s32.totalorder %v19, 0
  %vm72 = vcmp.lt.s32.totalorder %v19, 2
  %vm73 = vmand %vm71, %vm72
  %v74 = vsel %vm73, 1, 0
  %vm75 = vcmp.eq.s32.totalorder %v74, 1
  %v76 = vsel %vm75, %v39, 0.0
  %v77 = vsel %vm75, %v40, 0.0
  %v78 = vadd.f32 %v76, 0.0
  %v79 = vadd.f32 %v77, 0.0
  %v80 = vsel %vm75, %v69, 0.0
  %v81 = vsel %vm75, %v70, 0.0
  %v82 = vadd.f32 %v80, 0.0
  %v83 = vadd.f32 %v81, 0.0
  %86 = vrot.lane.b32.xlu0 %v16, 126
  %v87 = vpop.permute.xlu0 %86
  %88 = vrot.lane.b32.xlu0 %v17, 126
  %v89 = vpop.permute.xlu0 %88
  %v92 = vsel %vm20, %v87, 0.0
  %93 = vadd.xlane.f32.xlu0 %v92
  %v94 = vpop.xlane.xlu0 %93
  %v95 = vsel %vm20, %v89, 0.0
  %96 = vadd.xlane.f32.xlu0 %v95
  %v97 = vpop.xlane.xlu0 %96
  %v98 = vrot.slane %v94, 4
  %v99 = vadd.f32 %v94, %v98
  %v100 = vrot.slane %v99, 2
  %v101 = vadd.f32 %v99, %v100
  %v102 = vrot.slane %v101, 1
  %v103 = vadd.f32 %v101, %v102
  %v104 = vrot.slane %v97, 4
  %v105 = vadd.f32 %v97, %v104
  %v106 = vrot.slane %v105, 2
  %v107 = vadd.f32 %v105, %v106
  %v108 = vrot.slane %v107, 1
  %v109 = vadd.f32 %v107, %v108
  %v110 = vmul.f32 %v103, 0.0625
  %v111 = vmul.f32 %v109, 0.0625
  %114 = vrot.lane.b32.xlu0 %v41, 126
  %v115 = vpop.permute.xlu0 %114
  %116 = vrot.lane.b32.xlu0 %v42, 126
  %v117 = vpop.permute.xlu0 %116
  %v120 = vsel %vm20, %v115, 0.0
  %121 = vadd.xlane.f32.xlu0 %v120
  %v122 = vpop.xlane.xlu0 %121
  %v123 = vsel %vm20, %v117, 0.0
  %124 = vadd.xlane.f32.xlu0 %v123
  %v125 = vpop.xlane.xlu0 %124
  %v126 = vrot.slane %v122, 4
  %v127 = vadd.f32 %v122, %v126
  %v128 = vrot.slane %v127, 2
  %v129 = vadd.f32 %v127, %v128
  %v130 = vrot.slane %v129, 1
  %v131 = vadd.f32 %v129, %v130
  %v132 = vrot.slane %v125, 4
  %v133 = vadd.f32 %v125, %v132
  %v134 = vrot.slane %v133, 2
  %v135 = vadd.f32 %v133, %v134
  %v136 = vrot.slane %v135, 1
  %v137 = vadd.f32 %v135, %v136
  %v138 = vmul.f32 %v131, 0.0625
  %v139 = vmul.f32 %v137, 0.0625
  %v140 = vmul.f32 %v110, %v110
  %v141 = vmul.f32 %v111, %v111
  %v142 = vsub.f32 %v138, %v140
  %v143 = vsub.f32 %v139, %v141
  %v144 = vadd.f32 %v142, 1e-05
  %v145 = vadd.f32 %v143, 1e-05
  %v146 = vrsqrt.pop %v144
  %v147 = vrsqrt.pop %v145
  %vm148 = vcmp.ge.s32.totalorder %v19, 2
  %vm149 = vcmp.lt.s32.totalorder %v19, 4
  %vm150 = vmand %vm148, %vm149
  %v151 = vsel %vm150, 1, 0
  %vm152 = vcmp.eq.s32.totalorder %v151, 1
  %v153 = vsel %vm152, %v110, 0.0
  %v154 = vsel %vm152, %v111, 0.0
  %v155 = vadd.f32 %v78, %v153
  %v156 = vadd.f32 %v79, %v154
  %v157 = vsel %vm152, %v146, 0.0
  %v158 = vsel %vm152, %v147, 0.0
  %v159 = vadd.f32 %v82, %v157
  %v160 = vadd.f32 %v83, %v158
  %v161 = vld [vmem:[%s1] sm:$0x1]
  %v162 = vmul.f32 %v161, %v159
  %v163 = vmul.f32 %v161, %v160
  %v164 = vld [vmem:[%s2] sm:$0x1]
  %v165 = vmul.f32 %v155, %v162
  %v166 = vmul.f32 %v156, %v163
  %v167 = vsub.f32 %v164, %v165
  %v168 = vsub.f32 %v164, %v166
  %v171 = vlaneseq
  %v172 = vshrl.u32 %v171, 7
  %v173 = vsub.s32 0, %v172
  %v174 = vrot.slane %v162, %v173
  %v175 = vlaneseq
  %v176 = vshrl.u32 %v175, 7
  %v177 = vsub.s32 0, %v176
  %v178 = vrot.slane %v163, %v177
  %v181 = vmul.f32 %v16, %v174
  %v182 = vmul.f32 %v17, %v178
  %v185 = vlaneseq
  %v186 = vshrl.u32 %v185, 7
  %v187 = vsub.s32 0, %v186
  %v188 = vrot.slane %v167, %v187
  %v189 = vlaneseq
  %v190 = vshrl.u32 %v189, 7
  %v191 = vsub.s32 0, %v190
  %v192 = vrot.slane %v168, %v191
  %v195 = vadd.f32 %v181, %v188
  %v196 = vadd.f32 %v182, %v192
  %v197 = vpack.c.bf16 %v195, %v195
  %v198 = vpack.c.bf16 %v196, %v196
  %vm199 = vcmask 27648
  %200 = vst.msk [vmem:[%s3] sm:$0xf] %vm199, %v197
  %201 = vst.msk [vmem:[%s3 + $0x4] sm:$0xf] %vm199, %v198
  // Predicated region
  $region14: #{_lambda_.10} parent=0 // pred_check
    _
  $region15: #{_lambda_.10} parent=0 // pred_check_branch
    %203 = sbr.rel (0) target = $region17
  $region16: #{_lambda_.10} parent=0 // pred_region
    _
  $region17: #{_lambda_.10} parent=0 // pred_fallthru
    _
  // Predicated region
  $region18: #{_lambda_.10} parent=0 // pred_check
    _
  $region19: #{_lambda_.10} parent=0 // pred_check_branch
    %205 = sbr.rel (0) target = $region21
  $region20: #{_lambda_.10} parent=0 // pred_region
    _
  $region21: #{_lambda_.10} parent=0 // pred_fallthru
    _

// kernel: _lambda_.9
$region0: #{_lambda_.9}
  #allocation0 [shape = 'u32[]', space=smem, size = 0x4, offset = 0x4, fixed_abs, tag = 'smem constant byte address 0x4 - core index']
  #allocation1 [shape = 'u32[144,128]{1,0:T(1,128)}', space=vmem, size = 0x12000, scoped, tag = 'internal scratch']
  %s0 = inlined_call_operand.vmem [shape: bf16[128,128], index: 0, kind: input, shape index: {}]
  %s1 = inlined_call_operand.vmem [shape: bf16[128,128], index: 1, kind: input, shape index: {}]
  %s2 = inlined_call_operand.vmem [shape: f32[1,128], index: 2, kind: input, shape index: {}]
  %s3 = inlined_call_operand.vmem [shape: bf16[16,128], index: 3, kind: output, shape index: {}]
  %s4 = sld [smem:[#allocation0]]
  $region22: #{_lambda_.9} parent=0
    _
  %s6 = ssub.s32 1, %s4
  %s7 = scalar_select 0, %s6, %s4
  // Predicated region
  $region2: #{_lambda_.9} parent=0 // pred_check
    _
  $region3: #{_lambda_.9} parent=0 // pred_check_branch
    %9 = sbr.rel (0) target = $region5
  $region4: #{_lambda_.9} parent=0 // pred_region
    _
  $region5: #{_lambda_.9} parent=0 // pred_fallthru
    _
  // Predicated region
  $region6: #{_lambda_.9} parent=0 // pred_check
    _
  $region7: #{_lambda_.9} parent=0 // pred_check_branch
    %11 = sbr.rel (0) target = $region9
  $region8: #{_lambda_.9} parent=0 // pred_region
    _
  $region9: #{_lambda_.9} parent=0 // pred_fallthru
    _
  // Predicated region
  $region10: #{_lambda_.9} parent=0 // pred_check
    _
  $region11: #{_lambda_.9} parent=0 // pred_check_branch
    %13 = sbr.rel (0) target = $region13
  $region12: #{_lambda_.9} parent=0 // pred_region
    _
  $region13: #{_lambda_.9} parent=0 // pred_fallthru
    _
  %v15 = vld [vmem:[%s0] sm:$0xf]
  %v16 = vld [vmem:[%s0 + $0x4] sm:$0xf]
  %v17 = vld [vmem:[%s0 + $0x8] sm:$0xf]
  %v18 = vld [vmem:[%s0 + $0xc] sm:$0xf]
  %v19 = vld [vmem:[%s0 + $0x10] sm:$0xf]
  %v20 = vld [vmem:[%s0 + $0x14] sm:$0xf]
  %v21 = vld [vmem:[%s0 + $0x18] sm:$0xf]
  %v22 = vld [vmem:[%s0 + $0x1c] sm:$0xf]
  %v23 = vld [vmem:[%s0 + $0x20] sm:$0xf]
  %v24 = vld [vmem:[%s0 + $0x24] sm:$0xf]
  %v25 = vld [vmem:[%s0 + $0x28] sm:$0xf]
  %v26 = vld [vmem:[%s0 + $0x2c] sm:$0xf]
  %v27 = vld [vmem:[%s0 + $0x30] sm:$0xf]
  %v28 = vld [vmem:[%s0 + $0x34] sm:$0xf]
  %v29 = vld [vmem:[%s0 + $0x38] sm:$0xf]
  %v30 = vld [vmem:[%s0 + $0x3c] sm:$0xf]
  %v31 = vld [vmem:[%s1] sm:$0xf]
  %v32 = vld [vmem:[%s1 + $0x4] sm:$0xf]
  %v33 = vld [vmem:[%s1 + $0x8] sm:$0xf]
  %v34 = vld [vmem:[%s1 + $0xc] sm:$0xf]
  %v35 = vld [vmem:[%s1 + $0x10] sm:$0xf]
  %v36 = vld [vmem:[%s1 + $0x14] sm:$0xf]
  %v37 = vld [vmem:[%s1 + $0x18] sm:$0xf]
  %v38 = vld [vmem:[%s1 + $0x1c] sm:$0xf]
  %v39 = vld [vmem:[%s1 + $0x20] sm:$0xf]
  %v40 = vld [vmem:[%s1 + $0x24] sm:$0xf]
  %v41 = vld [vmem:[%s1 + $0x28] sm:$0xf]
  %v42 = vld [vmem:[%s1 + $0x2c] sm:$0xf]
  %v43 = vld [vmem:[%s1 + $0x30] sm:$0xf]
  %v44 = vld [vmem:[%s1 + $0x34] sm:$0xf]
  %v45 = vld [vmem:[%s1 + $0x38] sm:$0xf]
  %v46 = vld [vmem:[%s1 + $0x3c] sm:$0xf]
  %v47 = vld [vmem:[%s2] sm:$0x1]
  %v49 = vlaneseq
  %v50 = vshrl.u32 %v49, 7
  %v51 = vsub.s32 0, %v50
  %v52 = vrot.slane %v47, %v51
  %v70 = vunpack.c.l.b16 %v15
  %v71 = vunpack.c.l.b16 %v16
  %v72 = vunpack.c.l.b16 %v17
  %v73 = vunpack.c.l.b16 %v18
  %v74 = vunpack.c.l.b16 %v19
  %v75 = vunpack.c.l.b16 %v20
  %v76 = vunpack.c.l.b16 %v21
  %v77 = vunpack.c.l.b16 %v22
  %v78 = vunpack.c.l.b16 %v23
  %v79 = vunpack.c.l.b16 %v24
  %v80 = vunpack.c.l.b16 %v25
  %v81 = vunpack.c.l.b16 %v26
  %v82 = vunpack.c.l.b16 %v27
  %v83 = vunpack.c.l.b16 %v28
  %v84 = vunpack.c.l.b16 %v29
  %v85 = vunpack.c.l.b16 %v30
  %v86 = vpack.c.b16 %v71, %v70
  %v87 = vpack.c.b16 %v73, %v72
  %v88 = vpack.c.b16 %v75, %v74
  %v89 = vpack.c.b16 %v77, %v76
  %v90 = vpack.c.b16 %v79, %v78
  %v91 = vpack.c.b16 %v81, %v80
  %v92 = vpack.c.b16 %v83, %v82
  %v93 = vpack.c.b16 %v85, %v84
  %v118 = vunpack.c.l.b16 %v31
  %v119 = vunpack.c.l.b16 %v32
  %v120 = vunpack.c.l.b16 %v33
  %v121 = vunpack.c.l.b16 %v34
  %v122 = vunpack.c.l.b16 %v35
  %v123 = vunpack.c.l.b16 %v36
  %v124 = vunpack.c.l.b16 %v37
  %v125 = vunpack.c.l.b16 %v38
  %v126 = vunpack.c.l.b16 %v39
  %v127 = vunpack.c.l.b16 %v40
  %v128 = vunpack.c.l.b16 %v41
  %v129 = vunpack.c.l.b16 %v42
  %v130 = vunpack.c.l.b16 %v43
  %v131 = vunpack.c.l.b16 %v44
  %v132 = vunpack.c.l.b16 %v45
  %v133 = vunpack.c.l.b16 %v46
  %v134 = vpack.c.b16 %v119, %v118
  %v135 = vpack.c.b16 %v121, %v120
  %v136 = vpack.c.b16 %v123, %v122
  %v137 = vpack.c.b16 %v125, %v124
  %v138 = vpack.c.b16 %v127, %v126
  %v139 = vpack.c.b16 %v129, %v128
  %v140 = vpack.c.b16 %v131, %v130
  %v141 = vpack.c.b16 %v133, %v132
  %150 = vmatprep.subr.bf16.mxu0 0
  %151 = vmatpush1.bf16.msra.mxu0 %v141
  %152 = vmatprep.subr.bf16.mxu0 0
  %153 = vmatpush1.bf16.msra.mxu0 %v140
  %154 = vmatprep.subr.bf16.mxu0 0
  %155 = vmatpush1.bf16.msra.mxu0 %v139
  %156 = vmatprep.subr.bf16.mxu0 0
  %157 = vmatpush1.bf16.msra.mxu0 %v138
  %158 = vmatprep.subr.bf16.mxu0 0
  %159 = vmatpush1.bf16.msra.mxu0 %v137
  %160 = vmatprep.subr.bf16.mxu0 0
  %161 = vmatpush1.bf16.msra.mxu0 %v136
  %162 = vmatprep.subr.bf16.mxu0 0
  %163 = vmatpush1.bf16.msra.mxu0 %v135
  %164 = vmatprep.subr.bf16.mxu0 0
  %165 = vmatpush1.bf16.msra.mxu0 %v134
  %166 = vmatprep.subr.bf16.mxu0 0
  %167 = vmatpush2.bf16.msra.mxu0 0
  %168 = vmatprep.subr.bf16.mxu0 0
  %169 = vmatpush2.bf16.msra.mxu0 0
  %170 = vmatprep.subr.bf16.mxu0 0
  %171 = vmatpush2.bf16.msra.mxu0 0
  %172 = vmatprep.subr.bf16.mxu0 0
  %173 = vmatpush2.bf16.msra.mxu0 0
  %174 = vmatprep.subr.bf16.mxu0 0
  %175 = vmatpush2.bf16.msra.mxu0 0
  %176 = vmatprep.subr.bf16.mxu0 0
  %177 = vmatpush2.bf16.msra.mxu0 0
  %178 = vmatprep.subr.bf16.mxu0 0
  %179 = vmatpush2.bf16.msra.mxu0 0
  %180 = vmatprep.subr.bf16.mxu0 0
  %181 = vmatpush2.bf16.msra.mxu0 0
  %182 = vmatprep.mubr.bf16.mxu0 0
  %183 = vmatmul.mubr.bf16.gmra.mxu0 %v86
  %v184 = vpop.f32.mrf.mxu0
  %v185 = vadd.f32 %v52, %v184
  %v186 = vpop.f32.mrf.mxu0
  %v187 = vpop.f32.mrf.mxu0
  %v188 = vadd.f32 %v52, %v187
  %v189 = vpop.f32.mrf.mxu0
  %190 = vmatprep.mubr.bf16.mxu0 0
  %191 = vmatmul.mubr.bf16.gmra.mxu0 %v87
  %v192 = vpop.f32.mrf.mxu0
  %v193 = vadd.f32 %v52, %v192
  %v194 = vpop.f32.mrf.mxu0
  %v195 = vpop.f32.mrf.mxu0
  %v196 = vadd.f32 %v52, %v195
  %v197 = vpop.f32.mrf.mxu0
  %198 = vmatprep.mubr.bf16.mxu0 0
  %199 = vmatmul.mubr.bf16.gmra.mxu0 %v88
  %v200 = vpop.f32.mrf.mxu0
  %v201 = vadd.f32 %v52, %v200
  %v202 = vpop.f32.mrf.mxu0
  %v203 = vpop.f32.mrf.mxu0
  %v204 = vadd.f32 %v52, %v203
  %v205 = vpop.f32.mrf.mxu0
  %206 = vmatprep.mubr.bf16.mxu0 0
  %207 = vmatmul.mubr.bf16.gmra.mxu0 %v89
  %v208 = vpop.f32.mrf.mxu0
  %v209 = vadd.f32 %v52, %v208
  %v210 = vpop.f32.mrf.mxu0
  %v211 = vpop.f32.mrf.mxu0
  %v212 = vadd.f32 %v52, %v211
  %v213 = vpop.f32.mrf.mxu0
  %214 = vmatprep.mubr.bf16.mxu0 0
  %215 = vmatmul.mubr.bf16.gmra.mxu0 %v90
  %v216 = vpop.f32.mrf.mxu0
  %v217 = vadd.f32 %v52, %v216
  %v218 = vpop.f32.mrf.mxu0
  %v219 = vpop.f32.mrf.mxu0
  %v220 = vadd.f32 %v52, %v219
  %v221 = vpop.f32.mrf.mxu0
  %222 = vmatprep.mubr.bf16.mxu0 0
  %223 = vmatmul.mubr.bf16.gmra.mxu0 %v91
  %v224 = vpop.f32.mrf.mxu0
  %v225 = vadd.f32 %v52, %v224
  %v226 = vpop.f32.mrf.mxu0
  %v227 = vpop.f32.mrf.mxu0
  %v228 = vadd.f32 %v52, %v227
  %v229 = vpop.f32.mrf.mxu0
  %230 = vmatprep.mubr.bf16.mxu0 0
  %231 = vmatmul.mubr.bf16.gmra.mxu0 %v92
  %v232 = vpop.f32.mrf.mxu0
  %v233 = vadd.f32 %v52, %v232
  %v234 = vpop.f32.mrf.mxu0
  %v235 = vpop.f32.mrf.mxu0
  %v236 = vadd.f32 %v52, %v235
  %v237 = vpop.f32.mrf.mxu0
  %238 = vmatprep.mubr.bf16.mxu0 0
  %239 = vmatmul.mubr.bf16.gmra.mxu0 %v93
  %v240 = vpop.f32.mrf.mxu0
  %v241 = vadd.f32 %v52, %v240
  %v242 = vpop.f32.mrf.mxu0
  %v243 = vpop.f32.mrf.mxu0
  %v244 = vadd.f32 %v52, %v243
  %v245 = vpop.f32.mrf.mxu0
  %246 = vdwg.mxu0
  %v247 = vrot.slane %v185, 4
  %v248 = vadd.f32 %v185, %v247
  %v249 = vrot.slane %v248, 2
  %v250 = vadd.f32 %v248, %v249
  %v251 = vrot.slane %v250, 1
  %v252 = vadd.f32 %v250, %v251
  %v253 = vrot.slane %v188, 4
  %v254 = vadd.f32 %v188, %v253
  %v255 = vrot.slane %v254, 2
  %v256 = vadd.f32 %v254, %v255
  %v257 = vrot.slane %v256, 1
  %v258 = vadd.f32 %v256, %v257
  %v259 = vrot.slane %v193, 4
  %v260 = vadd.f32 %v193, %v259
  %v261 = vrot.slane %v260, 2
  %v262 = vadd.f32 %v260, %v261
  %v263 = vrot.slane %v262, 1
  %v264 = vadd.f32 %v262, %v263
  %v265 = vrot.slane %v196, 4
  %v266 = vadd.f32 %v196, %v265
  %v267 = vrot.slane %v266, 2
  %v268 = vadd.f32 %v266, %v267
  %v269 = vrot.slane %v268, 1
  %v270 = vadd.f32 %v268, %v269
  %v271 = vrot.slane %v201, 4
  %v272 = vadd.f32 %v201, %v271
  %v273 = vrot.slane %v272, 2
  %v274 = vadd.f32 %v272, %v273
  %v275 = vrot.slane %v274, 1
  %v276 = vadd.f32 %v274, %v275
  %v277 = vrot.slane %v204, 4
  %v278 = vadd.f32 %v204, %v277
  %v279 = vrot.slane %v278, 2
  %v280 = vadd.f32 %v278, %v279
  %v281 = vrot.slane %v280, 1
  %v282 = vadd.f32 %v280, %v281
  %v283 = vrot.slane %v209, 4
  %v284 = vadd.f32 %v209, %v283
  %v285 = vrot.slane %v284, 2
  %v286 = vadd.f32 %v284, %v285
  %v287 = vrot.slane %v286, 1
  %v288 = vadd.f32 %v286, %v287
  %v289 = vrot.slane %v212, 4
  %v290 = vadd.f32 %v212, %v289
  %v291 = vrot.slane %v290, 2
  %v292 = vadd.f32 %v290, %v291
  %v293 = vrot.slane %v292, 1
  %v294 = vadd.f32 %v292, %v293
  %v295 = vrot.slane %v217, 4
  %v296 = vadd.f32 %v217, %v295
  %v297 = vrot.slane %v296, 2
  %v298 = vadd.f32 %v296, %v297
  %v299 = vrot.slane %v298, 1
  %v300 = vadd.f32 %v298, %v299
  %v301 = vrot.slane %v220, 4
  %v302 = vadd.f32 %v220, %v301
  %v303 = vrot.slane %v302, 2
  %v304 = vadd.f32 %v302, %v303
  %v305 = vrot.slane %v304, 1
  %v306 = vadd.f32 %v304, %v305
  %v307 = vrot.slane %v225, 4
  %v308 = vadd.f32 %v225, %v307
  %v309 = vrot.slane %v308, 2
  %v310 = vadd.f32 %v308, %v309
  %v311 = vrot.slane %v310, 1
  %v312 = vadd.f32 %v310, %v311
  %v313 = vrot.slane %v228, 4
  %v314 = vadd.f32 %v228, %v313
  %v315 = vrot.slane %v314, 2
  %v316 = vadd.f32 %v314, %v315
  %v317 = vrot.slane %v316, 1
  %v318 = vadd.f32 %v316, %v317
  %v319 = vrot.slane %v233, 4
  %v320 = vadd.f32 %v233, %v319
  %v321 = vrot.slane %v320, 2
  %v322 = vadd.f32 %v320, %v321
  %v323 = vrot.slane %v322, 1
  %v324 = vadd.f32 %v322, %v323
  %v325 = vrot.slane %v236, 4
  %v326 = vadd.f32 %v236, %v325
  %v327 = vrot.slane %v326, 2
  %v328 = vadd.f32 %v326, %v327
  %v329 = vrot.slane %v328, 1
  %v330 = vadd.f32 %v328, %v329
  %v331 = vrot.slane %v241, 4
  %v332 = vadd.f32 %v241, %v331
  %v333 = vrot.slane %v332, 2
  %v334 = vadd.f32 %v332, %v333
  %v335 = vrot.slane %v334, 1
  %v336 = vadd.f32 %v334, %v335
  %v337 = vrot.slane %v244, 4
  %v338 = vadd.f32 %v244, %v337
  %v339 = vrot.slane %v338, 2
  %v340 = vadd.f32 %v338, %v339
  %v341 = vrot.slane %v340, 1
  %v342 = vadd.f32 %v340, %v341
  %v343 = vrcp.pop 8.0
  %v344 = vmul.f32 %v252, %v343
  %v345 = vmul.f32 %v258, %v343
  %v346 = vmul.f32 %v264, %v343
  %v347 = vmul.f32 %v270, %v343
  %v348 = vmul.f32 %v276, %v343
  %v349 = vmul.f32 %v282, %v343
  %v350 = vmul.f32 %v288, %v343
  %v351 = vmul.f32 %v294, %v343
  %v352 = vmul.f32 %v300, %v343
  %v353 = vmul.f32 %v306, %v343
  %v354 = vmul.f32 %v312, %v343
  %v355 = vmul.f32 %v318, %v343
  %v356 = vmul.f32 %v324, %v343
  %v357 = vmul.f32 %v330, %v343
  %v358 = vmul.f32 %v336, %v343
  %v359 = vmul.f32 %v342, %v343
  %v360 = vmax.f32 %v344, 0.0
  %v361 = vmax.f32 %v345, 0.0
  %v362 = vmax.f32 %v346, 0.0
  %v363 = vmax.f32 %v347, 0.0
  %v364 = vmax.f32 %v348, 0.0
  %v365 = vmax.f32 %v349, 0.0
  %v366 = vmax.f32 %v350, 0.0
  %v367 = vmax.f32 %v351, 0.0
  %v368 = vmax.f32 %v352, 0.0
  %v369 = vmax.f32 %v353, 0.0
  %v370 = vmax.f32 %v354, 0.0
  %v371 = vmax.f32 %v355, 0.0
  %v372 = vmax.f32 %v356, 0.0
  %v373 = vmax.f32 %v357, 0.0
  %v374 = vmax.f32 %v358, 0.0
  %v375 = vmax.f32 %v359, 0.0
  %v376 = vpack.c.bf16 %v360, %v360
  %v377 = vpack.c.bf16 %v361, %v361
  %v378 = vpack.c.bf16 %v362, %v362
  %v379 = vpack.c.bf16 %v363, %v363
  %v380 = vpack.c.bf16 %v364, %v364
  %v381 = vpack.c.bf16 %v365, %v365
  %v382 = vpack.c.bf16 %v366, %v366
  %v383 = vpack.c.bf16 %v367, %v367
  %v384 = vpack.c.bf16 %v368, %v368
  %v385 = vpack.c.bf16 %v369, %v369
  %v386 = vpack.c.bf16 %v370, %v370
  %v387 = vpack.c.bf16 %v371, %v371
  %v388 = vpack.c.bf16 %v372, %v372
  %v389 = vpack.c.bf16 %v373, %v373
  %v390 = vpack.c.bf16 %v374, %v374
  %v391 = vpack.c.bf16 %v375, %v375
  %v408 = vunpack.c.l.b16 %v376
  %v409 = vunpack.c.l.b16 %v377
  %v410 = vunpack.c.l.b16 %v378
  %v411 = vunpack.c.l.b16 %v379
  %v412 = vunpack.c.l.b16 %v380
  %v413 = vunpack.c.l.b16 %v381
  %v414 = vunpack.c.l.b16 %v382
  %v415 = vunpack.c.l.b16 %v383
  %v416 = vunpack.c.l.b16 %v384
  %v417 = vunpack.c.l.b16 %v385
  %v418 = vunpack.c.l.b16 %v386
  %v419 = vunpack.c.l.b16 %v387
  %v420 = vunpack.c.l.b16 %v388
  %v421 = vunpack.c.l.b16 %v389
  %v422 = vunpack.c.l.b16 %v390
  %v423 = vunpack.c.l.b16 %v391
  %v424 = vpack.c.b16 %v408, %v408
  %v425 = vpack.c.b16 %v409, %v409
  %v426 = vpack.c.b16 %v410, %v410
  %v427 = vpack.c.b16 %v411, %v411
  %v428 = vpack.c.b16 %v412, %v412
  %v429 = vpack.c.b16 %v413, %v413
  %v430 = vpack.c.b16 %v414, %v414
  %v431 = vpack.c.b16 %v415, %v415
  %v432 = vpack.c.b16 %v416, %v416
  %v433 = vpack.c.b16 %v417, %v417
  %v434 = vpack.c.b16 %v418, %v418
  %v435 = vpack.c.b16 %v419, %v419
  %v436 = vpack.c.b16 %v420, %v420
  %v437 = vpack.c.b16 %v421, %v421
  %v438 = vpack.c.b16 %v422, %v422
  %v439 = vpack.c.b16 %v423, %v423
  %v440 = vunpack.c.l.b16 %v424
  %v441 = vunpack.c.l.b16 %v425
  %v442 = vunpack.c.l.b16 %v426
  %v443 = vunpack.c.l.b16 %v427
  %v444 = vunpack.c.l.b16 %v428
  %v445 = vunpack.c.l.b16 %v429
  %v446 = vunpack.c.l.b16 %v430
  %v447 = vunpack.c.l.b16 %v431
  %v448 = vunpack.c.l.b16 %v432
  %v449 = vunpack.c.l.b16 %v433
  %v450 = vunpack.c.l.b16 %v434
  %v451 = vunpack.c.l.b16 %v435
  %v452 = vunpack.c.l.b16 %v436
  %v453 = vunpack.c.l.b16 %v437
  %v454 = vunpack.c.l.b16 %v438
  %v455 = vunpack.c.l.b16 %v439
  %vm456 = vcmask 1041409
  %v457 = vsel %vm456, %v441, %v440
  %vm458 = vcmask 1042434
  %v459 = vsel %vm458, %v442, %v457
  %vm460 = vcmask 1043459
  %v461 = vsel %vm460, %v443, %v459
  %vm462 = vcmask 1044484
  %v463 = vsel %vm462, %v444, %v461
  %vm464 = vcmask 1045509
  %v465 = vsel %vm464, %v445, %v463
  %vm466 = vcmask 1046534
  %v467 = vsel %vm466, %v446, %v465
  %vm468 = vcmask 1047559
  %v469 = vsel %vm468, %v447, %v467
  %v470 = vsel %vm456, %v449, %v448
  %v471 = vsel %vm458, %v450, %v470
  %v472 = vsel %vm460, %v451, %v471
  %v473 = vsel %vm462, %v452, %v472
  %v474 = vsel %vm464, %v453, %v473
  %v475 = vsel %vm466, %v454, %v474
  %v476 = vsel %vm468, %v455, %v475
  %v477 = vpack.c.b16 %v469, %v469
  %v478 = vpack.c.b16 %v476, %v476
  %481 = vst [vmem:[%s3] sm:$0xf] %v477
  %482 = vst [vmem:[%s3 + $0x4] sm:$0xf] %v478
  // Predicated region
  $region14: #{_lambda_.9} parent=0 // pred_check
    _
  $region15: #{_lambda_.9} parent=0 // pred_check_branch
    %484 = sbr.rel (0) target = $region17
  $region16: #{_lambda_.9} parent=0 // pred_region
    _
  $region17: #{_lambda_.9} parent=0 // pred_fallthru
    _
  // Predicated region
  $region18: #{_lambda_.9} parent=0 // pred_check
    _
  $region19: #{_lambda_.9} parent=0 // pred_check_branch
    %486 = sbr.rel (0) target = $region21
  $region20: #{_lambda_.9} parent=0 // pred_region
    _
  $region21: #{_lambda_.9} parent=0 // pred_fallthru
    _

// kernel: _lambda_.12
$region0: #{_lambda_.12}
  #allocation0 [shape = 'u32[]', space=smem, size = 0x4, offset = 0x4, fixed_abs, tag = 'smem constant byte address 0x4 - core index']
  #allocation1 [shape = 'u32[144,128]{1,0:T(1,128)}', space=vmem, size = 0x12000, scoped, tag = 'internal scratch']
  %s0 = inlined_call_operand.vmem [shape: bf16[2,8,8], index: 0, kind: input, shape index: {}]
  %s1 = inlined_call_operand.vmem [shape: f32[1,1,8], index: 1, kind: input, shape index: {}]
  %s2 = inlined_call_operand.vmem [shape: f32[1,1,8], index: 2, kind: input, shape index: {}]
  %s3 = inlined_call_operand.vmem [shape: bf16[2,8,8], index: 3, kind: output, shape index: {}]
  %s4 = sld [smem:[#allocation0]]
  $region22: #{_lambda_.12} parent=0
    _
  %s6 = ssub.s32 1, %s4
  %s7 = scalar_select 0, %s6, %s4
  // Predicated region
  $region2: #{_lambda_.12} parent=0 // pred_check
    _
  $region3: #{_lambda_.12} parent=0 // pred_check_branch
    %9 = sbr.rel (0) target = $region5
  $region4: #{_lambda_.12} parent=0 // pred_region
    _
  $region5: #{_lambda_.12} parent=0 // pred_fallthru
    _
  // Predicated region
  $region6: #{_lambda_.12} parent=0 // pred_check
    _
  $region7: #{_lambda_.12} parent=0 // pred_check_branch
    %11 = sbr.rel (0) target = $region9
  $region8: #{_lambda_.12} parent=0 // pred_region
    _
  $region9: #{_lambda_.12} parent=0 // pred_fallthru
    _
  // Predicated region
  $region10: #{_lambda_.12} parent=0 // pred_check
    _
  $region11: #{_lambda_.12} parent=0 // pred_check_branch
    %13 = sbr.rel (0) target = $region13
  $region12: #{_lambda_.12} parent=0 // pred_region
    _
  $region13: #{_lambda_.12} parent=0 // pred_fallthru
    _
  %v14 = vld [vmem:[%s0] sm:$0xf]
  %v15 = vld [vmem:[%s0 + $0x4] sm:$0xf]
  %v16 = vunpack.c.l.bf16 %v14
  %v17 = vunpack.c.l.bf16 %v15
  %v18 = vlaneseq
  %v19 = vand.u32 %v18, 127
  %vm20 = vcmask 31744
  %v21 = vsel %vm20, %v16, 0.0
  %22 = vadd.xlane.f32.xlu0 %v21
  %v23 = vpop.xlane.xlu0 %22
  %v24 = vsel %vm20, %v17, 0.0
  %25 = vadd.xlane.f32.xlu0 %v24
  %v26 = vpop.xlane.xlu0 %25
  %v27 = vrot.slane %v23, 4
  %v28 = vadd.f32 %v23, %v27
  %v29 = vrot.slane %v28, 2
  %v30 = vadd.f32 %v28, %v29
  %v31 = vrot.slane %v30, 1
  %v32 = vadd.f32 %v30, %v31
  %v33 = vrot.slane %v26, 4
  %v34 = vadd.f32 %v26, %v33
  %v35 = vrot.slane %v34, 2
  %v36 = vadd.f32 %v34, %v35
  %v37 = vrot.slane %v36, 1
  %v38 = vadd.f32 %v36, %v37
  %v39 = vmul.f32 %v32, 0.03125
  %v40 = vmul.f32 %v38, 0.03125
  %v41 = vmul.f32 %v16, %v16
  %v42 = vmul.f32 %v17, %v17
  %v43 = vsel %vm20, %v41, 0.0
  %44 = vadd.xlane.f32.xlu0 %v43
  %v45 = vpop.xlane.xlu0 %44
  %v46 = vsel %vm20, %v42, 0.0
  %47 = vadd.xlane.f32.xlu0 %v46
  %v48 = vpop.xlane.xlu0 %47
  %v49 = vrot.slane %v45, 4
  %v50 = vadd.f32 %v45, %v49
  %v51 = vrot.slane %v50, 2
  %v52 = vadd.f32 %v50, %v51
  %v53 = vrot.slane %v52, 1
  %v54 = vadd.f32 %v52, %v53
  %v55 = vrot.slane %v48, 4
  %v56 = vadd.f32 %v48, %v55
  %v57 = vrot.slane %v56, 2
  %v58 = vadd.f32 %v56, %v57
  %v59 = vrot.slane %v58, 1
  %v60 = vadd.f32 %v58, %v59
  %v61 = vmul.f32 %v54, 0.03125
  %v62 = vmul.f32 %v60, 0.03125
  %v63 = vmul.f32 %v39, %v39
  %v64 = vmul.f32 %v40, %v40
  %v65 = vsub.f32 %v61, %v63
  %v66 = vsub.f32 %v62, %v64
  %v67 = vadd.f32 %v65, 1e-05
  %v68 = vadd.f32 %v66, 1e-05
  %v69 = vrsqrt.pop %v67
  %v70 = vrsqrt.pop %v68
  %vm71 = vcmp.ge.s32.totalorder %v19, 0
  %vm72 = vcmp.lt.s32.totalorder %v19, 4
  %vm73 = vmand %vm71, %vm72
  %v74 = vsel %vm73, 1, 0
  %vm75 = vcmp.eq.s32.totalorder %v74, 1
  %v76 = vsel %vm75, %v39, 0.0
  %v77 = vsel %vm75, %v40, 0.0
  %v78 = vadd.f32 %v76, 0.0
  %v79 = vadd.f32 %v77, 0.0
  %v80 = vsel %vm75, %v69, 0.0
  %v81 = vsel %vm75, %v70, 0.0
  %v82 = vadd.f32 %v80, 0.0
  %v83 = vadd.f32 %v81, 0.0
  %86 = vrot.lane.b32.xlu0 %v16, 124
  %v87 = vpop.permute.xlu0 %86
  %88 = vrot.lane.b32.xlu0 %v17, 124
  %v89 = vpop.permute.xlu0 %88
  %v92 = vsel %vm20, %v87, 0.0
  %93 = vadd.xlane.f32.xlu0 %v92
  %v94 = vpop.xlane.xlu0 %93
  %v95 = vsel %vm20, %v89, 0.0
  %96 = vadd.xlane.f32.xlu0 %v95
  %v97 = vpop.xlane.xlu0 %96
  %v98 = vrot.slane %v94, 4
  %v99 = vadd.f32 %v94, %v98
  %v100 = vrot.slane %v99, 2
  %v101 = vadd.f32 %v99, %v100
  %v102 = vrot.slane %v101, 1
  %v103 = vadd.f32 %v101, %v102
  %v104 = vrot.slane %v97, 4
  %v105 = vadd.f32 %v97, %v104
  %v106 = vrot.slane %v105, 2
  %v107 = vadd.f32 %v105, %v106
  %v108 = vrot.slane %v107, 1
  %v109 = vadd.f32 %v107, %v108
  %v110 = vmul.f32 %v103, 0.03125
  %v111 = vmul.f32 %v109, 0.03125
  %114 = vrot.lane.b32.xlu0 %v41, 124
  %v115 = vpop.permute.xlu0 %114
  %116 = vrot.lane.b32.xlu0 %v42, 124
  %v117 = vpop.permute.xlu0 %116
  %v120 = vsel %vm20, %v115, 0.0
  %121 = vadd.xlane.f32.xlu0 %v120
  %v122 = vpop.xlane.xlu0 %121
  %v123 = vsel %vm20, %v117, 0.0
  %124 = vadd.xlane.f32.xlu0 %v123
  %v125 = vpop.xlane.xlu0 %124
  %v126 = vrot.slane %v122, 4
  %v127 = vadd.f32 %v122, %v126
  %v128 = vrot.slane %v127, 2
  %v129 = vadd.f32 %v127, %v128
  %v130 = vrot.slane %v129, 1
  %v131 = vadd.f32 %v129, %v130
  %v132 = vrot.slane %v125, 4
  %v133 = vadd.f32 %v125, %v132
  %v134 = vrot.slane %v133, 2
  %v135 = vadd.f32 %v133, %v134
  %v136 = vrot.slane %v135, 1
  %v137 = vadd.f32 %v135, %v136
  %v138 = vmul.f32 %v131, 0.03125
  %v139 = vmul.f32 %v137, 0.03125
  %v140 = vmul.f32 %v110, %v110
  %v141 = vmul.f32 %v111, %v111
  %v142 = vsub.f32 %v138, %v140
  %v143 = vsub.f32 %v139, %v141
  %v144 = vadd.f32 %v142, 1e-05
  %v145 = vadd.f32 %v143, 1e-05
  %v146 = vrsqrt.pop %v144
  %v147 = vrsqrt.pop %v145
  %vm148 = vcmp.ge.s32.totalorder %v19, 4
  %vm149 = vcmp.lt.s32.totalorder %v19, 8
  %vm150 = vmand %vm148, %vm149
  %v151 = vsel %vm150, 1, 0
  %vm152 = vcmp.eq.s32.totalorder %v151, 1
  %v153 = vsel %vm152, %v110, 0.0
  %v154 = vsel %vm152, %v111, 0.0
  %v155 = vadd.f32 %v78, %v153
  %v156 = vadd.f32 %v79, %v154
  %v157 = vsel %vm152, %v146, 0.0
  %v158 = vsel %vm152, %v147, 0.0
  %v159 = vadd.f32 %v82, %v157
  %v160 = vadd.f32 %v83, %v158
  %v161 = vld [vmem:[%s1] sm:$0x1]
  %v162 = vmul.f32 %v161, %v159
  %v163 = vmul.f32 %v161, %v160
  %v164 = vld [vmem:[%s2] sm:$0x1]
  %v165 = vmul.f32 %v155, %v162
  %v166 = vmul.f32 %v156, %v163
  %v167 = vsub.f32 %v164, %v165
  %v168 = vsub.f32 %v164, %v166
  %v171 = vlaneseq
  %v172 = vshrl.u32 %v171, 7
  %v173 = vsub.s32 0, %v172
  %v174 = vrot.slane %v162, %v173
  %v175 = vlaneseq
  %v176 = vshrl.u32 %v175, 7
  %v177 = vsub.s32 0, %v176
  %v178 = vrot.slane %v163, %v177
  %v181 = vmul.f32 %v16, %v174
  %v182 = vmul.f32 %v17, %v178
  %v185 = vlaneseq
  %v186 = vshrl.u32 %v185, 7
  %v187 = vsub.s32 0, %v186
  %v188 = vrot.slane %v167, %v187
  %v189 = vlaneseq
  %v190 = vshrl.u32 %v189, 7
  %v191 = vsub.s32 0, %v190
  %v192 = vrot.slane %v168, %v191
  %v195 = vadd.f32 %v181, %v188
  %v196 = vadd.f32 %v182, %v192
  %v197 = vpack.c.bf16 %v195, %v195
  %v198 = vpack.c.bf16 %v196, %v196
  %vm199 = vcmask 60416
  %200 = vst.msk [vmem:[%s3] sm:$0xf] %vm199, %v197
  %201 = vst.msk [vmem:[%s3 + $0x4] sm:$0xf] %vm199, %v198
  // Predicated region
  $region14: #{_lambda_.12} parent=0 // pred_check
    _
  $region15: #{_lambda_.12} parent=0 // pred_check_branch
    %203 = sbr.rel (0) target = $region17
  $region16: #{_lambda_.12} parent=0 // pred_region
    _
  $region17: #{_lambda_.12} parent=0 // pred_fallthru
    _
  // Predicated region
  $region18: #{_lambda_.12} parent=0 // pred_check
    _
  $region19: #{_lambda_.12} parent=0 // pred_check_branch
    %205 = sbr.rel (0) target = $region21
  $region20: #{_lambda_.12} parent=0 // pred_region
    _
  $region21: #{_lambda_.12} parent=0 // pred_fallthru
    _

// kernel: _lambda_.13
$region0: #{_lambda_.13}
  #allocation0 [shape = 'u32[]', space=smem, size = 0x4, offset = 0x4, fixed_abs, tag = 'smem constant byte address 0x4 - core index']
  #allocation1 [shape = 'u32[144,128]{1,0:T(1,128)}', space=vmem, size = 0x12000, scoped, tag = 'internal scratch']
  %s0 = inlined_call_operand.vmem [shape: bf16[16,256], index: 0, kind: input, shape index: {}]
  %s1 = inlined_call_operand.vmem [shape: bf16[256,128], index: 1, kind: input, shape index: {}]
  %s2 = inlined_call_operand.vmem [shape: f32[1,128], index: 2, kind: input, shape index: {}]
  %s3 = inlined_call_operand.vmem [shape: bf16[16,128], index: 3, kind: input, shape index: {}]
  %s4 = inlined_call_operand.vmem [shape: bf16[128,128], index: 4, kind: input, shape index: {}]
  %s5 = inlined_call_operand.vmem [shape: f32[1,128], index: 5, kind: input, shape index: {}]
  %s6 = inlined_call_operand.vmem [shape: bf16[16,128], index: 6, kind: output, shape index: {}]
  %s7 = sld [smem:[#allocation0]]
  $region34: #{_lambda_.13} parent=0
    _
  %s9 = ssub.s32 1, %s7
  %s10 = scalar_select 0, %s9, %s7
  // Predicated region
  $region2: #{_lambda_.13} parent=0 // pred_check
    _
  $region3: #{_lambda_.13} parent=0 // pred_check_branch
    %12 = sbr.rel (0) target = $region5
  $region4: #{_lambda_.13} parent=0 // pred_region
    _
  $region5: #{_lambda_.13} parent=0 // pred_fallthru
    _
  // Predicated region
  $region6: #{_lambda_.13} parent=0 // pred_check
    _
  $region7: #{_lambda_.13} parent=0 // pred_check_branch
    %14 = sbr.rel (0) target = $region9
  $region8: #{_lambda_.13} parent=0 // pred_region
    _
  $region9: #{_lambda_.13} parent=0 // pred_fallthru
    _
  // Predicated region
  $region10: #{_lambda_.13} parent=0 // pred_check
    _
  $region11: #{_lambda_.13} parent=0 // pred_check_branch
    %16 = sbr.rel (0) target = $region13
  $region12: #{_lambda_.13} parent=0 // pred_region
    _
  $region13: #{_lambda_.13} parent=0 // pred_fallthru
    _
  // Predicated region
  $region14: #{_lambda_.13} parent=0 // pred_check
    _
  $region15: #{_lambda_.13} parent=0 // pred_check_branch
    %18 = sbr.rel (0) target = $region17
  $region16: #{_lambda_.13} parent=0 // pred_region
    _
  $region17: #{_lambda_.13} parent=0 // pred_fallthru
    _
  // Predicated region
  $region18: #{_lambda_.13} parent=0 // pred_check
    _
  $region19: #{_lambda_.13} parent=0 // pred_check_branch
    %20 = sbr.rel (0) target = $region21
  $region20: #{_lambda_.13} parent=0 // pred_region
    _
  $region21: #{_lambda_.13} parent=0 // pred_fallthru
    _
  // Predicated region
  $region22: #{_lambda_.13} parent=0 // pred_check
    _
  $region23: #{_lambda_.13} parent=0 // pred_check_branch
    %22 = sbr.rel (0) target = $region25
  $region24: #{_lambda_.13} parent=0 // pred_region
    _
  $region25: #{_lambda_.13} parent=0 // pred_fallthru
    _
  %v24 = vld [vmem:[%s0] sm:$0xff]
  %v25 = vld [vmem:[%s0 + $0x8] sm:$0xff]
  %v26 = vld [vmem:[%s1] sm:$0xf]
  %v27 = vld [vmem:[%s1 + $0x4] sm:$0xf]
  %v28 = vld [vmem:[%s1 + $0x8] sm:$0xf]
  %v29 = vld [vmem:[%s1 + $0xc] sm:$0xf]
  %v30 = vld [vmem:[%s1 + $0x10] sm:$0xf]
  %v31 = vld [vmem:[%s1 + $0x14] sm:$0xf]
  %v32 = vld [vmem:[%s1 + $0x18] sm:$0xf]
  %v33 = vld [vmem:[%s1 + $0x1c] sm:$0xf]
  %v34 = vld [vmem:[%s1 + $0x20] sm:$0xf]
  %v35 = vld [vmem:[%s1 + $0x24] sm:$0xf]
  %v36 = vld [vmem:[%s1 + $0x28] sm:$0xf]
  %v37 = vld [vmem:[%s1 + $0x2c] sm:$0xf]
  %v38 = vld [vmem:[%s1 + $0x30] sm:$0xf]
  %v39 = vld [vmem:[%s1 + $0x34] sm:$0xf]
  %v40 = vld [vmem:[%s1 + $0x38] sm:$0xf]
  %v41 = vld [vmem:[%s1 + $0x3c] sm:$0xf]
  %v42 = vld [vmem:[%s1 + $0x40] sm:$0xf]
  %v43 = vld [vmem:[%s1 + $0x44] sm:$0xf]
  %v44 = vld [vmem:[%s1 + $0x48] sm:$0xf]
  %v45 = vld [vmem:[%s1 + $0x4c] sm:$0xf]
  %v46 = vld [vmem:[%s1 + $0x50] sm:$0xf]
  %v47 = vld [vmem:[%s1 + $0x54] sm:$0xf]
  %v48 = vld [vmem:[%s1 + $0x58] sm:$0xf]
  %v49 = vld [vmem:[%s1 + $0x5c] sm:$0xf]
  %v50 = vld [vmem:[%s1 + $0x60] sm:$0xf]
  %v51 = vld [vmem:[%s1 + $0x64] sm:$0xf]
  %v52 = vld [vmem:[%s1 + $0x68] sm:$0xf]
  %v53 = vld [vmem:[%s1 + $0x6c] sm:$0xf]
  %v54 = vld [vmem:[%s1 + $0x70] sm:$0xf]
  %v55 = vld [vmem:[%s1 + $0x74] sm:$0xf]
  %v56 = vld [vmem:[%s1 + $0x78] sm:$0xf]
  %v57 = vld [vmem:[%s1 + $0x7c] sm:$0xf]
  %v58 = vld [vmem:[%s2] sm:$0x1]
  %v60 = vlaneseq
  %v61 = vshrl.u32 %v60, 7
  %v62 = vsub.s32 0, %v61
  %v63 = vrot.slane %v58, %v62
  %v67 = vunpack.c.l.b16 %v24
  %v68 = vunpack.c.h.b16 %v24
  %v69 = vunpack.c.l.b16 %v25
  %v70 = vunpack.c.h.b16 %v25
  %v71 = vpack.c.b16 %v69, %v67
  %v72 = vpack.c.b16 %v70, %v68
  %v107 = vunpack.c.l.b16 %v26
  %v108 = vunpack.c.l.b16 %v27
  %v109 = vunpack.c.l.b16 %v28
  %v110 = vunpack.c.l.b16 %v29
  %v111 = vunpack.c.l.b16 %v30
  %v112 = vunpack.c.l.b16 %v31
  %v113 = vunpack.c.l.b16 %v32
  %v114 = vunpack.c.l.b16 %v33
  %v115 = vunpack.c.l.b16 %v34
  %v116 = vunpack.c.l.b16 %v35
  %v117 = vunpack.c.l.b16 %v36
  %v118 = vunpack.c.l.b16 %v37
  %v119 = vunpack.c.l.b16 %v38
  %v120 = vunpack.c.l.b16 %v39
  %v121 = vunpack.c.l.b16 %v40
  %v122 = vunpack.c.l.b16 %v41
  %v123 = vunpack.c.l.b16 %v42
  %v124 = vunpack.c.l.b16 %v43
  %v125 = vunpack.c.l.b16 %v44
  %v126 = vunpack.c.l.b16 %v45
  %v127 = vunpack.c.l.b16 %v46
  %v128 = vunpack.c.l.b16 %v47
  %v129 = vunpack.c.l.b16 %v48
  %v130 = vunpack.c.l.b16 %v49
  %v131 = vunpack.c.l.b16 %v50
  %v132 = vunpack.c.l.b16 %v51
  %v133 = vunpack.c.l.b16 %v52
  %v134 = vunpack.c.l.b16 %v53
  %v135 = vunpack.c.l.b16 %v54
  %v136 = vunpack.c.l.b16 %v55
  %v137 = vunpack.c.l.b16 %v56
  %v138 = vunpack.c.l.b16 %v57
  %v139 = vpack.c.b16 %v108, %v107
  %v140 = vpack.c.b16 %v110, %v109
  %v141 = vpack.c.b16 %v112, %v111
  %v142 = vpack.c.b16 %v114, %v113
  %v143 = vpack.c.b16 %v116, %v115
  %v144 = vpack.c.b16 %v118, %v117
  %v145 = vpack.c.b16 %v120, %v119
  %v146 = vpack.c.b16 %v122, %v121
  %v147 = vpack.c.b16 %v124, %v123
  %v148 = vpack.c.b16 %v126, %v125
  %v149 = vpack.c.b16 %v128, %v127
  %v150 = vpack.c.b16 %v130, %v129
  %v151 = vpack.c.b16 %v132, %v131
  %v152 = vpack.c.b16 %v134, %v133
  %v153 = vpack.c.b16 %v136, %v135
  %v154 = vpack.c.b16 %v138, %v137
  %171 = vmatprep.subr.bf16.mxu0 0
  %172 = vmatpush1.bf16.msra.mxu0 %v146
  %173 = vmatprep.subr.bf16.mxu0 0
  %174 = vmatpush1.bf16.msra.mxu0 %v145
  %175 = vmatprep.subr.bf16.mxu0 0
  %176 = vmatpush1.bf16.msra.mxu0 %v144
  %177 = vmatprep.subr.bf16.mxu0 0
  %178 = vmatpush1.bf16.msra.mxu0 %v143
  %179 = vmatprep.subr.bf16.mxu0 0
  %180 = vmatpush1.bf16.msra.mxu0 %v142
  %181 = vmatprep.subr.bf16.mxu0 0
  %182 = vmatpush1.bf16.msra.mxu0 %v141
  %183 = vmatprep.subr.bf16.mxu0 0
  %184 = vmatpush1.bf16.msra.mxu0 %v140
  %185 = vmatprep.subr.bf16.mxu0 0
  %186 = vmatpush1.bf16.msra.mxu0 %v139
  %187 = vmatprep.subr.bf16.mxu0 0
  %188 = vmatpush2.bf16.msra.mxu0 %v154
  %189 = vmatprep.subr.bf16.mxu0 0
  %190 = vmatpush2.bf16.msra.mxu0 %v153
  %191 = vmatprep.subr.bf16.mxu0 0
  %192 = vmatpush2.bf16.msra.mxu0 %v152
  %193 = vmatprep.subr.bf16.mxu0 0
  %194 = vmatpush2.bf16.msra.mxu0 %v151
  %195 = vmatprep.subr.bf16.mxu0 0
  %196 = vmatpush2.bf16.msra.mxu0 %v150
  %197 = vmatprep.subr.bf16.mxu0 0
  %198 = vmatpush2.bf16.msra.mxu0 %v149
  %199 = vmatprep.subr.bf16.mxu0 0
  %200 = vmatpush2.bf16.msra.mxu0 %v148
  %201 = vmatprep.subr.bf16.mxu0 0
  %202 = vmatpush2.bf16.msra.mxu0 %v147
  %203 = vmatprep.mubr.bf16.mxu0 %v72
  %204 = vmatmul.mubr.bf16.gmra.mxu0 %v71
  %v205 = vpop.f32.mrf.mxu0
  %v206 = vadd.f32 %v63, %v205
  %v207 = vpop.f32.mrf.mxu0
  %v208 = vpop.f32.mrf.mxu0
  %v209 = vadd.f32 %v63, %v208
  %v210 = vpop.f32.mrf.mxu0
  %211 = vdwg.mxu0
  %v212 = vmax.f32 %v206, 0.0
  %v213 = vmax.f32 %v209, 0.0
  %v214 = vld [vmem:[%s3] sm:$0xf]
  %v215 = vld [vmem:[%s3 + $0x4] sm:$0xf]
  %v216 = vld [vmem:[%s4] sm:$0xf]
  %v217 = vld [vmem:[%s4 + $0x4] sm:$0xf]
  %v218 = vld [vmem:[%s4 + $0x8] sm:$0xf]
  %v219 = vld [vmem:[%s4 + $0xc] sm:$0xf]
  %v220 = vld [vmem:[%s4 + $0x10] sm:$0xf]
  %v221 = vld [vmem:[%s4 + $0x14] sm:$0xf]
  %v222 = vld [vmem:[%s4 + $0x18] sm:$0xf]
  %v223 = vld [vmem:[%s4 + $0x1c] sm:$0xf]
  %v224 = vld [vmem:[%s4 + $0x20] sm:$0xf]
  %v225 = vld [vmem:[%s4 + $0x24] sm:$0xf]
  %v226 = vld [vmem:[%s4 + $0x28] sm:$0xf]
  %v227 = vld [vmem:[%s4 + $0x2c] sm:$0xf]
  %v228 = vld [vmem:[%s4 + $0x30] sm:$0xf]
  %v229 = vld [vmem:[%s4 + $0x34] sm:$0xf]
  %v230 = vld [vmem:[%s4 + $0x38] sm:$0xf]
  %v231 = vld [vmem:[%s4 + $0x3c] sm:$0xf]
  %v232 = vld [vmem:[%s5] sm:$0x1]
  %v234 = vlaneseq
  %v235 = vshrl.u32 %v234, 7
  %v236 = vsub.s32 0, %v235
  %v237 = vrot.slane %v232, %v236
  %v241 = vunpack.c.l.b16 %v214
  %v242 = vunpack.c.l.b16 %v215
  %v243 = vpack.c.b16 %v242, %v241
  %v261 = vunpack.c.l.b16 %v216
  %v262 = vunpack.c.l.b16 %v217
  %v263 = vunpack.c.l.b16 %v218
  %v264 = vunpack.c.l.b16 %v219
  %v265 = vunpack.c.l.b16 %v220
  %v266 = vunpack.c.l.b16 %v221
  %v267 = vunpack.c.l.b16 %v222
  %v268 = vunpack.c.l.b16 %v223
  %v269 = vunpack.c.l.b16 %v224
  %v270 = vunpack.c.l.b16 %v225
  %v271 = vunpack.c.l.b16 %v226
  %v272 = vunpack.c.l.b16 %v227
  %v273 = vunpack.c.l.b16 %v228
  %v274 = vunpack.c.l.b16 %v229
  %v275 = vunpack.c.l.b16 %v230
  %v276 = vunpack.c.l.b16 %v231
  %v277 = vpack.c.b16 %v262, %v261
  %v278 = vpack.c.b16 %v264, %v263
  %v279 = vpack.c.b16 %v266, %v265
  %v280 = vpack.c.b16 %v268, %v267
  %v281 = vpack.c.b16 %v270, %v269
  %v282 = vpack.c.b16 %v272, %v271
  %v283 = vpack.c.b16 %v274, %v273
  %v284 = vpack.c.b16 %v276, %v275
  %293 = vmatprep.subr.bf16.mxu0 0
  %294 = vmatpush1.bf16.msra.mxu0 %v284
  %295 = vmatprep.subr.bf16.mxu0 0
  %296 = vmatpush1.bf16.msra.mxu0 %v283
  %297 = vmatprep.subr.bf16.mxu0 0
  %298 = vmatpush1.bf16.msra.mxu0 %v282
  %299 = vmatprep.subr.bf16.mxu0 0
  %300 = vmatpush1.bf16.msra.mxu0 %v281
  %301 = vmatprep.subr.bf16.mxu0 0
  %302 = vmatpush1.bf16.msra.mxu0 %v280
  %303 = vmatprep.subr.bf16.mxu0 0
  %304 = vmatpush1.bf16.msra.mxu0 %v279
  %305 = vmatprep.subr.bf16.mxu0 0
  %306 = vmatpush1.bf16.msra.mxu0 %v278
  %307 = vmatprep.subr.bf16.mxu0 0
  %308 = vmatpush1.bf16.msra.mxu0 %v277
  %309 = vmatprep.subr.bf16.mxu0 0
  %310 = vmatpush2.bf16.msra.mxu0 0
  %311 = vmatprep.subr.bf16.mxu0 0
  %312 = vmatpush2.bf16.msra.mxu0 0
  %313 = vmatprep.subr.bf16.mxu0 0
  %314 = vmatpush2.bf16.msra.mxu0 0
  %315 = vmatprep.subr.bf16.mxu0 0
  %316 = vmatpush2.bf16.msra.mxu0 0
  %317 = vmatprep.subr.bf16.mxu0 0
  %318 = vmatpush2.bf16.msra.mxu0 0
  %319 = vmatprep.subr.bf16.mxu0 0
  %320 = vmatpush2.bf16.msra.mxu0 0
  %321 = vmatprep.subr.bf16.mxu0 0
  %322 = vmatpush2.bf16.msra.mxu0 0
  %323 = vmatprep.subr.bf16.mxu0 0
  %324 = vmatpush2.bf16.msra.mxu0 0
  %325 = vmatprep.mubr.bf16.mxu0 0
  %326 = vmatmul.mubr.bf16.gmra.mxu0 %v243
  %v327 = vpop.f32.mrf.mxu0
  %v328 = vadd.f32 %v237, %v327
  %v329 = vpop.f32.mrf.mxu0
  %v330 = vpop.f32.mrf.mxu0
  %v331 = vadd.f32 %v237, %v330
  %v332 = vpop.f32.mrf.mxu0
  %333 = vdwg.mxu0
  %v334 = vmax.f32 %v328, 0.0
  %v335 = vmax.f32 %v331, 0.0
  %v336 = vadd.f32 %v212, %v334
  %v337 = vadd.f32 %v213, %v335
  %v338 = vpack.c.bf16 %v337, %v336
  %v340 = vunpack.c.l.b16 %v338
  %v341 = vunpack.c.h.b16 %v338
  %v342 = vpack.c.b16 %v340, %v340
  %v343 = vpack.c.b16 %v341, %v341
  %346 = vst [vmem:[%s6] sm:$0xf] %v342
  %347 = vst [vmem:[%s6 + $0x4] sm:$0xf] %v343
  // Predicated region
  $region26: #{_lambda_.13} parent=0 // pred_check
    _
  $region27: #{_lambda_.13} parent=0 // pred_check_branch
    %349 = sbr.rel (0) target = $region29
  $region28: #{_lambda_.13} parent=0 // pred_region
    _
  $region29: #{_lambda_.13} parent=0 // pred_fallthru
    _
  // Predicated region
  $region30: #{_lambda_.13} parent=0 // pred_check
    _
  $region31: #{_lambda_.13} parent=0 // pred_check_branch
    %351 = sbr.rel (0) target = $region33
  $region32: #{_lambda_.13} parent=0 // pred_region
    _
  $region33: #{_lambda_.13} parent=0 // pred_fallthru
    _

// kernel: _lambda_.14
$region0: #{_lambda_.14}
  #allocation0 [shape = 'u32[]', space=smem, size = 0x4, offset = 0x4, fixed_abs, tag = 'smem constant byte address 0x4 - core index']
  #allocation1 [shape = 'u32[144,128]{1,0:T(1,128)}', space=vmem, size = 0x12000, scoped, tag = 'internal scratch']
  %s0 = inlined_call_operand.vmem [shape: bf16[2,8,8], index: 0, kind: input, shape index: {}]
  %s1 = inlined_call_operand.vmem [shape: f32[1,1,8], index: 1, kind: input, shape index: {}]
  %s2 = inlined_call_operand.vmem [shape: f32[1,1,8], index: 2, kind: input, shape index: {}]
  %s3 = inlined_call_operand.vmem [shape: bf16[2,8,8], index: 3, kind: output, shape index: {}]
  %s4 = sld [smem:[#allocation0]]
  $region22: #{_lambda_.14} parent=0
    _
  %s6 = ssub.s32 1, %s4
  %s7 = scalar_select 0, %s6, %s4
  // Predicated region
  $region2: #{_lambda_.14} parent=0 // pred_check
    _
  $region3: #{_lambda_.14} parent=0 // pred_check_branch
    %9 = sbr.rel (0) target = $region5
  $region4: #{_lambda_.14} parent=0 // pred_region
    _
  $region5: #{_lambda_.14} parent=0 // pred_fallthru
    _
  // Predicated region
  $region6: #{_lambda_.14} parent=0 // pred_check
    _
  $region7: #{_lambda_.14} parent=0 // pred_check_branch
    %11 = sbr.rel (0) target = $region9
  $region8: #{_lambda_.14} parent=0 // pred_region
    _
  $region9: #{_lambda_.14} parent=0 // pred_fallthru
    _
  // Predicated region
  $region10: #{_lambda_.14} parent=0 // pred_check
    _
  $region11: #{_lambda_.14} parent=0 // pred_check_branch
    %13 = sbr.rel (0) target = $region13
  $region12: #{_lambda_.14} parent=0 // pred_region
    _
  $region13: #{_lambda_.14} parent=0 // pred_fallthru
    _
  %v14 = vld [vmem:[%s0] sm:$0xf]
  %v15 = vld [vmem:[%s0 + $0x4] sm:$0xf]
  %v16 = vunpack.c.l.bf16 %v14
  %v17 = vunpack.c.l.bf16 %v15
  %v18 = vlaneseq
  %v19 = vand.u32 %v18, 127
  %vm20 = vcmask 31744
  %v21 = vsel %vm20, %v16, 0.0
  %22 = vadd.xlane.f32.xlu0 %v21
  %v23 = vpop.xlane.xlu0 %22
  %v24 = vsel %vm20, %v17, 0.0
  %25 = vadd.xlane.f32.xlu0 %v24
  %v26 = vpop.xlane.xlu0 %25
  %v27 = vrot.slane %v23, 4
  %v28 = vadd.f32 %v23, %v27
  %v29 = vrot.slane %v28, 2
  %v30 = vadd.f32 %v28, %v29
  %v31 = vrot.slane %v30, 1
  %v32 = vadd.f32 %v30, %v31
  %v33 = vrot.slane %v26, 4
  %v34 = vadd.f32 %v26, %v33
  %v35 = vrot.slane %v34, 2
  %v36 = vadd.f32 %v34, %v35
  %v37 = vrot.slane %v36, 1
  %v38 = vadd.f32 %v36, %v37
  %v39 = vmul.f32 %v32, 0.03125
  %v40 = vmul.f32 %v38, 0.03125
  %v41 = vmul.f32 %v16, %v16
  %v42 = vmul.f32 %v17, %v17
  %v43 = vsel %vm20, %v41, 0.0
  %44 = vadd.xlane.f32.xlu0 %v43
  %v45 = vpop.xlane.xlu0 %44
  %v46 = vsel %vm20, %v42, 0.0
  %47 = vadd.xlane.f32.xlu0 %v46
  %v48 = vpop.xlane.xlu0 %47
  %v49 = vrot.slane %v45, 4
  %v50 = vadd.f32 %v45, %v49
  %v51 = vrot.slane %v50, 2
  %v52 = vadd.f32 %v50, %v51
  %v53 = vrot.slane %v52, 1
  %v54 = vadd.f32 %v52, %v53
  %v55 = vrot.slane %v48, 4
  %v56 = vadd.f32 %v48, %v55
  %v57 = vrot.slane %v56, 2
  %v58 = vadd.f32 %v56, %v57
  %v59 = vrot.slane %v58, 1
  %v60 = vadd.f32 %v58, %v59
  %v61 = vmul.f32 %v54, 0.03125
  %v62 = vmul.f32 %v60, 0.03125
  %v63 = vmul.f32 %v39, %v39
  %v64 = vmul.f32 %v40, %v40
  %v65 = vsub.f32 %v61, %v63
  %v66 = vsub.f32 %v62, %v64
  %v67 = vadd.f32 %v65, 1e-05
  %v68 = vadd.f32 %v66, 1e-05
  %v69 = vrsqrt.pop %v67
  %v70 = vrsqrt.pop %v68
  %vm71 = vcmp.ge.s32.totalorder %v19, 0
  %vm72 = vcmp.lt.s32.totalorder %v19, 4
  %vm73 = vmand %vm71, %vm72
  %v74 = vsel %vm73, 1, 0
  %vm75 = vcmp.eq.s32.totalorder %v74, 1
  %v76 = vsel %vm75, %v39, 0.0
  %v77 = vsel %vm75, %v40, 0.0
  %v78 = vadd.f32 %v76, 0.0
  %v79 = vadd.f32 %v77, 0.0
  %v80 = vsel %vm75, %v69, 0.0
  %v81 = vsel %vm75, %v70, 0.0
  %v82 = vadd.f32 %v80, 0.0
  %v83 = vadd.f32 %v81, 0.0
  %86 = vrot.lane.b32.xlu0 %v16, 124
  %v87 = vpop.permute.xlu0 %86
  %88 = vrot.lane.b32.xlu0 %v17, 124
  %v89 = vpop.permute.xlu0 %88
  %v92 = vsel %vm20, %v87, 0.0
  %93 = vadd.xlane.f32.xlu0 %v92
  %v94 = vpop.xlane.xlu0 %93
  %v95 = vsel %vm20, %v89, 0.0
  %96 = vadd.xlane.f32.xlu0 %v95
  %v97 = vpop.xlane.xlu0 %96
  %v98 = vrot.slane %v94, 4
  %v99 = vadd.f32 %v94, %v98
  %v100 = vrot.slane %v99, 2
  %v101 = vadd.f32 %v99, %v100
  %v102 = vrot.slane %v101, 1
  %v103 = vadd.f32 %v101, %v102
  %v104 = vrot.slane %v97, 4
  %v105 = vadd.f32 %v97, %v104
  %v106 = vrot.slane %v105, 2
  %v107 = vadd.f32 %v105, %v106
  %v108 = vrot.slane %v107, 1
  %v109 = vadd.f32 %v107, %v108
  %v110 = vmul.f32 %v103, 0.03125
  %v111 = vmul.f32 %v109, 0.03125
  %114 = vrot.lane.b32.xlu0 %v41, 124
  %v115 = vpop.permute.xlu0 %114
  %116 = vrot.lane.b32.xlu0 %v42, 124
  %v117 = vpop.permute.xlu0 %116
  %v120 = vsel %vm20, %v115, 0.0
  %121 = vadd.xlane.f32.xlu0 %v120
  %v122 = vpop.xlane.xlu0 %121
  %v123 = vsel %vm20, %v117, 0.0
  %124 = vadd.xlane.f32.xlu0 %v123
  %v125 = vpop.xlane.xlu0 %124
  %v126 = vrot.slane %v122, 4
  %v127 = vadd.f32 %v122, %v126
  %v128 = vrot.slane %v127, 2
  %v129 = vadd.f32 %v127, %v128
  %v130 = vrot.slane %v129, 1
  %v131 = vadd.f32 %v129, %v130
  %v132 = vrot.slane %v125, 4
  %v133 = vadd.f32 %v125, %v132
  %v134 = vrot.slane %v133, 2
  %v135 = vadd.f32 %v133, %v134
  %v136 = vrot.slane %v135, 1
  %v137 = vadd.f32 %v135, %v136
  %v138 = vmul.f32 %v131, 0.03125
  %v139 = vmul.f32 %v137, 0.03125
  %v140 = vmul.f32 %v110, %v110
  %v141 = vmul.f32 %v111, %v111
  %v142 = vsub.f32 %v138, %v140
  %v143 = vsub.f32 %v139, %v141
  %v144 = vadd.f32 %v142, 1e-05
  %v145 = vadd.f32 %v143, 1e-05
  %v146 = vrsqrt.pop %v144
  %v147 = vrsqrt.pop %v145
  %vm148 = vcmp.ge.s32.totalorder %v19, 4
  %vm149 = vcmp.lt.s32.totalorder %v19, 8
  %vm150 = vmand %vm148, %vm149
  %v151 = vsel %vm150, 1, 0
  %vm152 = vcmp.eq.s32.totalorder %v151, 1
  %v153 = vsel %vm152, %v110, 0.0
  %v154 = vsel %vm152, %v111, 0.0
  %v155 = vadd.f32 %v78, %v153
  %v156 = vadd.f32 %v79, %v154
  %v157 = vsel %vm152, %v146, 0.0
  %v158 = vsel %vm152, %v147, 0.0
  %v159 = vadd.f32 %v82, %v157
  %v160 = vadd.f32 %v83, %v158
  %v161 = vld [vmem:[%s1] sm:$0x1]
  %v162 = vmul.f32 %v161, %v159
  %v163 = vmul.f32 %v161, %v160
  %v164 = vld [vmem:[%s2] sm:$0x1]
  %v165 = vmul.f32 %v155, %v162
  %v166 = vmul.f32 %v156, %v163
  %v167 = vsub.f32 %v164, %v165
  %v168 = vsub.f32 %v164, %v166
  %v171 = vlaneseq
  %v172 = vshrl.u32 %v171, 7
  %v173 = vsub.s32 0, %v172
  %v174 = vrot.slane %v162, %v173
  %v175 = vlaneseq
  %v176 = vshrl.u32 %v175, 7
  %v177 = vsub.s32 0, %v176
  %v178 = vrot.slane %v163, %v177
  %v181 = vmul.f32 %v16, %v174
  %v182 = vmul.f32 %v17, %v178
  %v185 = vlaneseq
  %v186 = vshrl.u32 %v185, 7
  %v187 = vsub.s32 0, %v186
  %v188 = vrot.slane %v167, %v187
  %v189 = vlaneseq
  %v190 = vshrl.u32 %v189, 7
  %v191 = vsub.s32 0, %v190
  %v192 = vrot.slane %v168, %v191
  %v195 = vadd.f32 %v181, %v188
  %v196 = vadd.f32 %v182, %v192
  %v197 = vmax.f32 %v195, 0.0
  %v198 = vmax.f32 %v196, 0.0
  %v199 = vpack.c.bf16 %v197, %v197
  %v200 = vpack.c.bf16 %v198, %v198
  %vm201 = vcmask 60416
  %202 = vst.msk [vmem:[%s3] sm:$0xf] %vm201, %v199
  %203 = vst.msk [vmem:[%s3 + $0x4] sm:$0xf] %vm201, %v200
  // Predicated region
  $region14: #{_lambda_.14} parent=0 // pred_check
    _
  $region15: #{_lambda_.14} parent=0 // pred_check_branch
    %205 = sbr.rel (0) target = $region17
  $region16: #{_lambda_.14} parent=0 // pred_region
    _
  $region17: #{_lambda_.14} parent=0 // pred_fallthru
    _
  // Predicated region
  $region18: #{_lambda_.14} parent=0 // pred_check
    _
  $region19: #{_lambda_.14} parent=0 // pred_check_branch
    %207 = sbr.rel (0) target = $region21
  $region20: #{_lambda_.14} parent=0 // pred_region
    _
  $region21: #{_lambda_.14} parent=0 // pred_fallthru
    _

// kernel: _lambda_.15
$region0: #{_lambda_.15}
  #allocation0 [shape = 'u32[]', space=smem, size = 0x4, offset = 0x4, fixed_abs, tag = 'smem constant byte address 0x4 - core index']
  #allocation1 [shape = 'u32[144,128]{1,0:T(1,128)}', space=vmem, size = 0x12000, scoped, tag = 'internal scratch']
  %s0 = inlined_call_operand.vmem [shape: bf16[8,128], index: 0, kind: input, shape index: {}]
  %s1 = inlined_call_operand.vmem [shape: bf16[128,128], index: 1, kind: input, shape index: {}]
  %s2 = inlined_call_operand.vmem [shape: f32[1,128], index: 2, kind: input, shape index: {}]
  %s3 = inlined_call_operand.vmem [shape: bf16[128,128], index: 3, kind: input, shape index: {}]
  %s4 = inlined_call_operand.vmem [shape: f32[1,128], index: 4, kind: input, shape index: {}]
  %s5 = inlined_call_operand.vmem [shape: bf16[128,128], index: 5, kind: input, shape index: {}]
  %s6 = inlined_call_operand.vmem [shape: f32[1,128], index: 6, kind: input, shape index: {}]
  %s7 = inlined_call_operand.vmem [shape: bf16[128,128], index: 7, kind: input, shape index: {}]
  %s8 = inlined_call_operand.vmem [shape: f32[1,128], index: 8, kind: input, shape index: {}]
  %s9 = inlined_call_operand.vmem [shape: bf16[128,128], index: 9, kind: input, shape index: {}]
  %s10 = inlined_call_operand.vmem [shape: f32[1,128], index: 10, kind: input, shape index: {}]
  %s11 = inlined_call_operand.vmem [shape: f32[8,128], index: 11, kind: output, shape index: {0}]
  %s12 = inlined_call_operand.vmem [shape: f32[8,128], index: 12, kind: output, shape index: {1}]
  %13 = xla_tuple %s11, %s12
  %s14 = sld [smem:[#allocation0]]
  $region62: #{_lambda_.15} parent=0
    _
  %s16 = ssub.s32 1, %s14
  %s17 = scalar_select 0, %s16, %s14
  // Predicated region
  $region2: #{_lambda_.15} parent=0 // pred_check
    _
  $region3: #{_lambda_.15} parent=0 // pred_check_branch
    %19 = sbr.rel (0) target = $region5
  $region4: #{_lambda_.15} parent=0 // pred_region
    _
  $region5: #{_lambda_.15} parent=0 // pred_fallthru
    _
  // Predicated region
  $region6: #{_lambda_.15} parent=0 // pred_check
    _
  $region7: #{_lambda_.15} parent=0 // pred_check_branch
    %21 = sbr.rel (0) target = $region9
  $region8: #{_lambda_.15} parent=0 // pred_region
    _
  $region9: #{_lambda_.15} parent=0 // pred_fallthru
    _
  // Predicated region
  $region10: #{_lambda_.15} parent=0 // pred_check
    _
  $region11: #{_lambda_.15} parent=0 // pred_check_branch
    %23 = sbr.rel (0) target = $region13
  $region12: #{_lambda_.15} parent=0 // pred_region
    _
  $region13: #{_lambda_.15} parent=0 // pred_fallthru
    _
  // Predicated region
  $region14: #{_lambda_.15} parent=0 // pred_check
    _
  $region15: #{_lambda_.15} parent=0 // pred_check_branch
    %25 = sbr.rel (0) target = $region17
  $region16: #{_lambda_.15} parent=0 // pred_region
    _
  $region17: #{_lambda_.15} parent=0 // pred_fallthru
    _
  // Predicated region
  $region18: #{_lambda_.15} parent=0 // pred_check
    _
  $region19: #{_lambda_.15} parent=0 // pred_check_branch
    %27 = sbr.rel (0) target = $region21
  $region20: #{_lambda_.15} parent=0 // pred_region
    _
  $region21: #{_lambda_.15} parent=0 // pred_fallthru
    _
  // Predicated region
  $region22: #{_lambda_.15} parent=0 // pred_check
    _
  $region23: #{_lambda_.15} parent=0 // pred_check_branch
    %29 = sbr.rel (0) target = $region25
  $region24: #{_lambda_.15} parent=0 // pred_region
    _
  $region25: #{_lambda_.15} parent=0 // pred_fallthru
    _
  // Predicated region
  $region26: #{_lambda_.15} parent=0 // pred_check
    _
  $region27: #{_lambda_.15} parent=0 // pred_check_branch
    %31 = sbr.rel (0) target = $region29
  $region28: #{_lambda_.15} parent=0 // pred_region
    _
  $region29: #{_lambda_.15} parent=0 // pred_fallthru
    _
  // Predicated region
  $region30: #{_lambda_.15} parent=0 // pred_check
    _
  $region31: #{_lambda_.15} parent=0 // pred_check_branch
    %33 = sbr.rel (0) target = $region33
  $region32: #{_lambda_.15} parent=0 // pred_region
    _
  $region33: #{_lambda_.15} parent=0 // pred_fallthru
    _
  // Predicated region
  $region34: #{_lambda_.15} parent=0 // pred_check
    _
  $region35: #{_lambda_.15} parent=0 // pred_check_branch
    %35 = sbr.rel (0) target = $region37
  $region36: #{_lambda_.15} parent=0 // pred_region
    _
  $region37: #{_lambda_.15} parent=0 // pred_fallthru
    _
  // Predicated region
  $region38: #{_lambda_.15} parent=0 // pred_check
    _
  $region39: #{_lambda_.15} parent=0 // pred_check_branch
    %37 = sbr.rel (0) target = $region41
  $region40: #{_lambda_.15} parent=0 // pred_region
    _
  $region41: #{_lambda_.15} parent=0 // pred_fallthru
    _
  // Predicated region
  $region42: #{_lambda_.15} parent=0 // pred_check
    _
  $region43: #{_lambda_.15} parent=0 // pred_check_branch
    %39 = sbr.rel (0) target = $region45
  $region44: #{_lambda_.15} parent=0 // pred_region
    _
  $region45: #{_lambda_.15} parent=0 // pred_fallthru
    _
  %v41 = vld [vmem:[%s0] sm:$0xf]
  %v42 = vld [vmem:[%s1] sm:$0xf]
  %v43 = vld [vmem:[%s1 + $0x4] sm:$0xf]
  %v44 = vld [vmem:[%s1 + $0x8] sm:$0xf]
  %v45 = vld [vmem:[%s1 + $0xc] sm:$0xf]
  %v46 = vld [vmem:[%s1 + $0x10] sm:$0xf]
  %v47 = vld [vmem:[%s1 + $0x14] sm:$0xf]
  %v48 = vld [vmem:[%s1 + $0x18] sm:$0xf]
  %v49 = vld [vmem:[%s1 + $0x1c] sm:$0xf]
  %v50 = vld [vmem:[%s1 + $0x20] sm:$0xf]
  %v51 = vld [vmem:[%s1 + $0x24] sm:$0xf]
  %v52 = vld [vmem:[%s1 + $0x28] sm:$0xf]
  %v53 = vld [vmem:[%s1 + $0x2c] sm:$0xf]
  %v54 = vld [vmem:[%s1 + $0x30] sm:$0xf]
  %v55 = vld [vmem:[%s1 + $0x34] sm:$0xf]
  %v56 = vld [vmem:[%s1 + $0x38] sm:$0xf]
  %v57 = vld [vmem:[%s1 + $0x3c] sm:$0xf]
  %v58 = vld [vmem:[%s2] sm:$0x1]
  %v60 = vlaneseq
  %v61 = vshrl.u32 %v60, 7
  %v62 = vsub.s32 0, %v61
  %v63 = vrot.slane %v58, %v62
  %v81 = vunpack.c.l.b16 %v42
  %v82 = vunpack.c.l.b16 %v43
  %v83 = vunpack.c.l.b16 %v44
  %v84 = vunpack.c.l.b16 %v45
  %v85 = vunpack.c.l.b16 %v46
  %v86 = vunpack.c.l.b16 %v47
  %v87 = vunpack.c.l.b16 %v48
  %v88 = vunpack.c.l.b16 %v49
  %v89 = vunpack.c.l.b16 %v50
  %v90 = vunpack.c.l.b16 %v51
  %v91 = vunpack.c.l.b16 %v52
  %v92 = vunpack.c.l.b16 %v53
  %v93 = vunpack.c.l.b16 %v54
  %v94 = vunpack.c.l.b16 %v55
  %v95 = vunpack.c.l.b16 %v56
  %v96 = vunpack.c.l.b16 %v57
  %v97 = vpack.c.b16 %v82, %v81
  %v98 = vpack.c.b16 %v84, %v83
  %v99 = vpack.c.b16 %v86, %v85
  %v100 = vpack.c.b16 %v88, %v87
  %v101 = vpack.c.b16 %v90, %v89
  %v102 = vpack.c.b16 %v92, %v91
  %v103 = vpack.c.b16 %v94, %v93
  %v104 = vpack.c.b16 %v96, %v95
  %113 = vmatprep.subr.bf16.mxu0 0
  %114 = vmatpush1.bf16.msra.mxu0 %v104
  %115 = vmatprep.subr.bf16.mxu0 0
  %116 = vmatpush1.bf16.msra.mxu0 %v103
  %117 = vmatprep.subr.bf16.mxu0 0
  %118 = vmatpush1.bf16.msra.mxu0 %v102
  %119 = vmatprep.subr.bf16.mxu0 0
  %120 = vmatpush1.bf16.msra.mxu0 %v101
  %121 = vmatprep.subr.bf16.mxu0 0
  %122 = vmatpush1.bf16.msra.mxu0 %v100
  %123 = vmatprep.subr.bf16.mxu0 0
  %124 = vmatpush1.bf16.msra.mxu0 %v99
  %125 = vmatprep.subr.bf16.mxu0 0
  %126 = vmatpush1.bf16.msra.mxu0 %v98
  %127 = vmatprep.subr.bf16.mxu0 0
  %128 = vmatpush1.bf16.msra.mxu0 %v97
  %129 = vmatprep.subr.bf16.mxu0 0
  %130 = vmatpush2.bf16.msra.mxu0 0
  %131 = vmatprep.subr.bf16.mxu0 0
  %132 = vmatpush2.bf16.msra.mxu0 0
  %133 = vmatprep.subr.bf16.mxu0 0
  %134 = vmatpush2.bf16.msra.mxu0 0
  %135 = vmatprep.subr.bf16.mxu0 0
  %136 = vmatpush2.bf16.msra.mxu0 0
  %137 = vmatprep.subr.bf16.mxu0 0
  %138 = vmatpush2.bf16.msra.mxu0 0
  %139 = vmatprep.subr.bf16.mxu0 0
  %140 = vmatpush2.bf16.msra.mxu0 0
  %141 = vmatprep.subr.bf16.mxu0 0
  %142 = vmatpush2.bf16.msra.mxu0 0
  %143 = vmatprep.subr.bf16.mxu0 0
  %144 = vmatpush2.bf16.msra.mxu0 0
  %145 = vmatprep.mubr.bf16.mxu0 0
  %146 = vmatmul.mubr.bf16.gmra.mxu0 %v41
  %v147 = vpop.f32.mrf.mxu0
  %v148 = vadd.f32 %v63, %v147
  %v149 = vpop.f32.mrf.mxu0
  %v150 = vpop.f32.mrf.mxu0
  %v151 = vpop.f32.mrf.mxu0
  %152 = vdwg.mxu0
  %v153 = vmax.f32 %v148, 0.0
  %v154 = vpack.c.bf16 %v153, %v153
  %v155 = vld [vmem:[%s3] sm:$0xf]
  %v156 = vld [vmem:[%s3 + $0x4] sm:$0xf]
  %v157 = vld [vmem:[%s3 + $0x8] sm:$0xf]
  %v158 = vld [vmem:[%s3 + $0xc] sm:$0xf]
  %v159 = vld [vmem:[%s3 + $0x10] sm:$0xf]
  %v160 = vld [vmem:[%s3 + $0x14] sm:$0xf]
  %v161 = vld [vmem:[%s3 + $0x18] sm:$0xf]
  %v162 = vld [vmem:[%s3 + $0x1c] sm:$0xf]
  %v163 = vld [vmem:[%s3 + $0x20] sm:$0xf]
  %v164 = vld [vmem:[%s3 + $0x24] sm:$0xf]
  %v165 = vld [vmem:[%s3 + $0x28] sm:$0xf]
  %v166 = vld [vmem:[%s3 + $0x2c] sm:$0xf]
  %v167 = vld [vmem:[%s3 + $0x30] sm:$0xf]
  %v168 = vld [vmem:[%s3 + $0x34] sm:$0xf]
  %v169 = vld [vmem:[%s3 + $0x38] sm:$0xf]
  %v170 = vld [vmem:[%s3 + $0x3c] sm:$0xf]
  %v171 = vld [vmem:[%s4] sm:$0x1]
  %v173 = vlaneseq
  %v174 = vshrl.u32 %v173, 7
  %v175 = vsub.s32 0, %v174
  %v176 = vrot.slane %v171, %v175
  %v194 = vunpack.c.l.b16 %v155
  %v195 = vunpack.c.l.b16 %v156
  %v196 = vunpack.c.l.b16 %v157
  %v197 = vunpack.c.l.b16 %v158
  %v198 = vunpack.c.l.b16 %v159
  %v199 = vunpack.c.l.b16 %v160
  %v200 = vunpack.c.l.b16 %v161
  %v201 = vunpack.c.l.b16 %v162
  %v202 = vunpack.c.l.b16 %v163
  %v203 = vunpack.c.l.b16 %v164
  %v204 = vunpack.c.l.b16 %v165
  %v205 = vunpack.c.l.b16 %v166
  %v206 = vunpack.c.l.b16 %v167
  %v207 = vunpack.c.l.b16 %v168
  %v208 = vunpack.c.l.b16 %v169
  %v209 = vunpack.c.l.b16 %v170
  %v210 = vpack.c.b16 %v195, %v194
  %v211 = vpack.c.b16 %v197, %v196
  %v212 = vpack.c.b16 %v199, %v198
  %v213 = vpack.c.b16 %v201, %v200
  %v214 = vpack.c.b16 %v203, %v202
  %v215 = vpack.c.b16 %v205, %v204
  %v216 = vpack.c.b16 %v207, %v206
  %v217 = vpack.c.b16 %v209, %v208
  %226 = vmatprep.subr.bf16.mxu0 0
  %227 = vmatpush1.bf16.msra.mxu0 %v217
  %228 = vmatprep.subr.bf16.mxu0 0
  %229 = vmatpush1.bf16.msra.mxu0 %v216
  %230 = vmatprep.subr.bf16.mxu0 0
  %231 = vmatpush1.bf16.msra.mxu0 %v215
  %232 = vmatprep.subr.bf16.mxu0 0
  %233 = vmatpush1.bf16.msra.mxu0 %v214
  %234 = vmatprep.subr.bf16.mxu0 0
  %235 = vmatpush1.bf16.msra.mxu0 %v213
  %236 = vmatprep.subr.bf16.mxu0 0
  %237 = vmatpush1.bf16.msra.mxu0 %v212
  %238 = vmatprep.subr.bf16.mxu0 0
  %239 = vmatpush1.bf16.msra.mxu0 %v211
  %240 = vmatprep.subr.bf16.mxu0 0
  %241 = vmatpush1.bf16.msra.mxu0 %v210
  %242 = vmatprep.subr.bf16.mxu0 0
  %243 = vmatpush2.bf16.msra.mxu0 0
  %244 = vmatprep.subr.bf16.mxu0 0
  %245 = vmatpush2.bf16.msra.mxu0 0
  %246 = vmatprep.subr.bf16.mxu0 0
  %247 = vmatpush2.bf16.msra.mxu0 0
  %248 = vmatprep.subr.bf16.mxu0 0
  %249 = vmatpush2.bf16.msra.mxu0 0
  %250 = vmatprep.subr.bf16.mxu0 0
  %251 = vmatpush2.bf16.msra.mxu0 0
  %252 = vmatprep.subr.bf16.mxu0 0
  %253 = vmatpush2.bf16.msra.mxu0 0
  %254 = vmatprep.subr.bf16.mxu0 0
  %255 = vmatpush2.bf16.msra.mxu0 0
  %256 = vmatprep.subr.bf16.mxu0 0
  %257 = vmatpush2.bf16.msra.mxu0 0
  %258 = vmatprep.mubr.bf16.mxu0 0
  %259 = vmatmul.mubr.bf16.gmra.mxu0 %v154
  %v260 = vpop.f32.mrf.mxu0
  %v261 = vadd.f32 %v176, %v260
  %v262 = vpop.f32.mrf.mxu0
  %v263 = vpop.f32.mrf.mxu0
  %v264 = vpop.f32.mrf.mxu0
  %265 = vdwg.mxu0
  %v266 = vmax.f32 %v261, 0.0
  %v267 = vpack.c.bf16 %v266, %v266
  %v268 = vld [vmem:[%s5] sm:$0xf]
  %v269 = vld [vmem:[%s5 + $0x4] sm:$0xf]
  %v270 = vld [vmem:[%s5 + $0x8] sm:$0xf]
  %v271 = vld [vmem:[%s5 + $0xc] sm:$0xf]
  %v272 = vld [vmem:[%s5 + $0x10] sm:$0xf]
  %v273 = vld [vmem:[%s5 + $0x14] sm:$0xf]
  %v274 = vld [vmem:[%s5 + $0x18] sm:$0xf]
  %v275 = vld [vmem:[%s5 + $0x1c] sm:$0xf]
  %v276 = vld [vmem:[%s5 + $0x20] sm:$0xf]
  %v277 = vld [vmem:[%s5 + $0x24] sm:$0xf]
  %v278 = vld [vmem:[%s5 + $0x28] sm:$0xf]
  %v279 = vld [vmem:[%s5 + $0x2c] sm:$0xf]
  %v280 = vld [vmem:[%s5 + $0x30] sm:$0xf]
  %v281 = vld [vmem:[%s5 + $0x34] sm:$0xf]
  %v282 = vld [vmem:[%s5 + $0x38] sm:$0xf]
  %v283 = vld [vmem:[%s5 + $0x3c] sm:$0xf]
  %v284 = vld [vmem:[%s6] sm:$0x1]
  %v286 = vlaneseq
  %v287 = vshrl.u32 %v286, 7
  %v288 = vsub.s32 0, %v287
  %v289 = vrot.slane %v284, %v288
  %v307 = vunpack.c.l.b16 %v268
  %v308 = vunpack.c.l.b16 %v269
  %v309 = vunpack.c.l.b16 %v270
  %v310 = vunpack.c.l.b16 %v271
  %v311 = vunpack.c.l.b16 %v272
  %v312 = vunpack.c.l.b16 %v273
  %v313 = vunpack.c.l.b16 %v274
  %v314 = vunpack.c.l.b16 %v275
  %v315 = vunpack.c.l.b16 %v276
  %v316 = vunpack.c.l.b16 %v277
  %v317 = vunpack.c.l.b16 %v278
  %v318 = vunpack.c.l.b16 %v279
  %v319 = vunpack.c.l.b16 %v280
  %v320 = vunpack.c.l.b16 %v281
  %v321 = vunpack.c.l.b16 %v282
  %v322 = vunpack.c.l.b16 %v283
  %v323 = vpack.c.b16 %v308, %v307
  %v324 = vpack.c.b16 %v310, %v309
  %v325 = vpack.c.b16 %v312, %v311
  %v326 = vpack.c.b16 %v314, %v313
  %v327 = vpack.c.b16 %v316, %v315
  %v328 = vpack.c.b16 %v318, %v317
  %v329 = vpack.c.b16 %v320, %v319
  %v330 = vpack.c.b16 %v322, %v321
  %339 = vmatprep.subr.bf16.mxu0 0
  %340 = vmatpush1.bf16.msra.mxu0 %v330
  %341 = vmatprep.subr.bf16.mxu0 0
  %342 = vmatpush1.bf16.msra.mxu0 %v329
  %343 = vmatprep.subr.bf16.mxu0 0
  %344 = vmatpush1.bf16.msra.mxu0 %v328
  %345 = vmatprep.subr.bf16.mxu0 0
  %346 = vmatpush1.bf16.msra.mxu0 %v327
  %347 = vmatprep.subr.bf16.mxu0 0
  %348 = vmatpush1.bf16.msra.mxu0 %v326
  %349 = vmatprep.subr.bf16.mxu0 0
  %350 = vmatpush1.bf16.msra.mxu0 %v325
  %351 = vmatprep.subr.bf16.mxu0 0
  %352 = vmatpush1.bf16.msra.mxu0 %v324
  %353 = vmatprep.subr.bf16.mxu0 0
  %354 = vmatpush1.bf16.msra.mxu0 %v323
  %355 = vmatprep.subr.bf16.mxu0 0
  %356 = vmatpush2.bf16.msra.mxu0 0
  %357 = vmatprep.subr.bf16.mxu0 0
  %358 = vmatpush2.bf16.msra.mxu0 0
  %359 = vmatprep.subr.bf16.mxu0 0
  %360 = vmatpush2.bf16.msra.mxu0 0
  %361 = vmatprep.subr.bf16.mxu0 0
  %362 = vmatpush2.bf16.msra.mxu0 0
  %363 = vmatprep.subr.bf16.mxu0 0
  %364 = vmatpush2.bf16.msra.mxu0 0
  %365 = vmatprep.subr.bf16.mxu0 0
  %366 = vmatpush2.bf16.msra.mxu0 0
  %367 = vmatprep.subr.bf16.mxu0 0
  %368 = vmatpush2.bf16.msra.mxu0 0
  %369 = vmatprep.subr.bf16.mxu0 0
  %370 = vmatpush2.bf16.msra.mxu0 0
  %371 = vmatprep.mubr.bf16.mxu0 0
  %372 = vmatmul.mubr.bf16.gmra.mxu0 %v267
  %v373 = vpop.f32.mrf.mxu0
  %v374 = vadd.f32 %v289, %v373
  %v375 = vpop.f32.mrf.mxu0
  %v376 = vpop.f32.mrf.mxu0
  %v377 = vpop.f32.mrf.mxu0
  %378 = vdwg.mxu0
  %379 = vst [vmem:[%s11] sm:$0xff] %v374
  %v380 = vld [vmem:[%s7] sm:$0xf]
  %v381 = vld [vmem:[%s7 + $0x4] sm:$0xf]
  %v382 = vld [vmem:[%s7 + $0x8] sm:$0xf]
  %v383 = vld [vmem:[%s7 + $0xc] sm:$0xf]
  %v384 = vld [vmem:[%s7 + $0x10] sm:$0xf]
  %v385 = vld [vmem:[%s7 + $0x14] sm:$0xf]
  %v386 = vld [vmem:[%s7 + $0x18] sm:$0xf]
  %v387 = vld [vmem:[%s7 + $0x1c] sm:$0xf]
  %v388 = vld [vmem:[%s7 + $0x20] sm:$0xf]
  %v389 = vld [vmem:[%s7 + $0x24] sm:$0xf]
  %v390 = vld [vmem:[%s7 + $0x28] sm:$0xf]
  %v391 = vld [vmem:[%s7 + $0x2c] sm:$0xf]
  %v392 = vld [vmem:[%s7 + $0x30] sm:$0xf]
  %v393 = vld [vmem:[%s7 + $0x34] sm:$0xf]
  %v394 = vld [vmem:[%s7 + $0x38] sm:$0xf]
  %v395 = vld [vmem:[%s7 + $0x3c] sm:$0xf]
  %v396 = vld [vmem:[%s8] sm:$0x1]
  %v398 = vlaneseq
  %v399 = vshrl.u32 %v398, 7
  %v400 = vsub.s32 0, %v399
  %v401 = vrot.slane %v396, %v400
  %v419 = vunpack.c.l.b16 %v380
  %v420 = vunpack.c.l.b16 %v381
  %v421 = vunpack.c.l.b16 %v382
  %v422 = vunpack.c.l.b16 %v383
  %v423 = vunpack.c.l.b16 %v384
  %v424 = vunpack.c.l.b16 %v385
  %v425 = vunpack.c.l.b16 %v386
  %v426 = vunpack.c.l.b16 %v387
  %v427 = vunpack.c.l.b16 %v388
  %v428 = vunpack.c.l.b16 %v389
  %v429 = vunpack.c.l.b16 %v390
  %v430 = vunpack.c.l.b16 %v391
  %v431 = vunpack.c.l.b16 %v392
  %v432 = vunpack.c.l.b16 %v393
  %v433 = vunpack.c.l.b16 %v394
  %v434 = vunpack.c.l.b16 %v395
  %v435 = vpack.c.b16 %v420, %v419
  %v436 = vpack.c.b16 %v422, %v421
  %v437 = vpack.c.b16 %v424, %v423
  %v438 = vpack.c.b16 %v426, %v425
  %v439 = vpack.c.b16 %v428, %v427
  %v440 = vpack.c.b16 %v430, %v429
  %v441 = vpack.c.b16 %v432, %v431
  %v442 = vpack.c.b16 %v434, %v433
  %451 = vmatprep.subr.bf16.mxu0 0
  %452 = vmatpush1.bf16.msra.mxu0 %v442
  %453 = vmatprep.subr.bf16.mxu0 0
  %454 = vmatpush1.bf16.msra.mxu0 %v441
  %455 = vmatprep.subr.bf16.mxu0 0
  %456 = vmatpush1.bf16.msra.mxu0 %v440
  %457 = vmatprep.subr.bf16.mxu0 0
  %458 = vmatpush1.bf16.msra.mxu0 %v439
  %459 = vmatprep.subr.bf16.mxu0 0
  %460 = vmatpush1.bf16.msra.mxu0 %v438
  %461 = vmatprep.subr.bf16.mxu0 0
  %462 = vmatpush1.bf16.msra.mxu0 %v437
  %463 = vmatprep.subr.bf16.mxu0 0
  %464 = vmatpush1.bf16.msra.mxu0 %v436
  %465 = vmatprep.subr.bf16.mxu0 0
  %466 = vmatpush1.bf16.msra.mxu0 %v435
  %467 = vmatprep.subr.bf16.mxu0 0
  %468 = vmatpush2.bf16.msra.mxu0 0
  %469 = vmatprep.subr.bf16.mxu0 0
  %470 = vmatpush2.bf16.msra.mxu0 0
  %471 = vmatprep.subr.bf16.mxu0 0
  %472 = vmatpush2.bf16.msra.mxu0 0
  %473 = vmatprep.subr.bf16.mxu0 0
  %474 = vmatpush2.bf16.msra.mxu0 0
  %475 = vmatprep.subr.bf16.mxu0 0
  %476 = vmatpush2.bf16.msra.mxu0 0
  %477 = vmatprep.subr.bf16.mxu0 0
  %478 = vmatpush2.bf16.msra.mxu0 0
  %479 = vmatprep.subr.bf16.mxu0 0
  %480 = vmatpush2.bf16.msra.mxu0 0
  %481 = vmatprep.subr.bf16.mxu0 0
  %482 = vmatpush2.bf16.msra.mxu0 0
  %483 = vmatprep.mubr.bf16.mxu0 0
  %484 = vmatmul.mubr.bf16.gmra.mxu0 %v41
  %v485 = vpop.f32.mrf.mxu0
  %v486 = vadd.f32 %v401, %v485
  %v487 = vpop.f32.mrf.mxu0
  %v488 = vpop.f32.mrf.mxu0
  %v489 = vpop.f32.mrf.mxu0
  %490 = vdwg.mxu0
  %v491 = vmax.f32 %v486, 0.0
  %v492 = vpack.c.bf16 %v491, %v491
  %v493 = vld [vmem:[%s9] sm:$0xf]
  %v494 = vld [vmem:[%s9 + $0x4] sm:$0xf]
  %v495 = vld [vmem:[%s9 + $0x8] sm:$0xf]
  %v496 = vld [vmem:[%s9 + $0xc] sm:$0xf]
  %v497 = vld [vmem:[%s9 + $0x10] sm:$0xf]
  %v498 = vld [vmem:[%s9 + $0x14] sm:$0xf]
  %v499 = vld [vmem:[%s9 + $0x18] sm:$0xf]
  %v500 = vld [vmem:[%s9 + $0x1c] sm:$0xf]
  %v501 = vld [vmem:[%s9 + $0x20] sm:$0xf]
  %v502 = vld [vmem:[%s9 + $0x24] sm:$0xf]
  %v503 = vld [vmem:[%s9 + $0x28] sm:$0xf]
  %v504 = vld [vmem:[%s9 + $0x2c] sm:$0xf]
  %v505 = vld [vmem:[%s9 + $0x30] sm:$0xf]
  %v506 = vld [vmem:[%s9 + $0x34] sm:$0xf]
  %v507 = vld [vmem:[%s9 + $0x38] sm:$0xf]
  %v508 = vld [vmem:[%s9 + $0x3c] sm:$0xf]
  %v509 = vld [vmem:[%s10] sm:$0x1]
  %v511 = vlaneseq
  %v512 = vshrl.u32 %v511, 7
  %v513 = vsub.s32 0, %v512
  %v514 = vrot.slane %v509, %v513
  %v532 = vunpack.c.l.b16 %v493
  %v533 = vunpack.c.l.b16 %v494
  %v534 = vunpack.c.l.b16 %v495
  %v535 = vunpack.c.l.b16 %v496
  %v536 = vunpack.c.l.b16 %v497
  %v537 = vunpack.c.l.b16 %v498
  %v538 = vunpack.c.l.b16 %v499
  %v539 = vunpack.c.l.b16 %v500
  %v540 = vunpack.c.l.b16 %v501
  %v541 = vunpack.c.l.b16 %v502
  %v542 = vunpack.c.l.b16 %v503
  %v543 = vunpack.c.l.b16 %v504
  %v544 = vunpack.c.l.b16 %v505
  %v545 = vunpack.c.l.b16 %v506
  %v546 = vunpack.c.l.b16 %v507
  %v547 = vunpack.c.l.b16 %v508
  %v548 = vpack.c.b16 %v533, %v532
  %v549 = vpack.c.b16 %v535, %v534
  %v550 = vpack.c.b16 %v537, %v536
  %v551 = vpack.c.b16 %v539, %v538
  %v552 = vpack.c.b16 %v541, %v540
  %v553 = vpack.c.b16 %v543, %v542
  %v554 = vpack.c.b16 %v545, %v544
  %v555 = vpack.c.b16 %v547, %v546
  %564 = vmatprep.subr.bf16.mxu0 0
  %565 = vmatpush1.bf16.msra.mxu0 %v555
  %566 = vmatprep.subr.bf16.mxu0 0
  %567 = vmatpush1.bf16.msra.mxu0 %v554
  %568 = vmatprep.subr.bf16.mxu0 0
  %569 = vmatpush1.bf16.msra.mxu0 %v553
  %570 = vmatprep.subr.bf16.mxu0 0
  %571 = vmatpush1.bf16.msra.mxu0 %v552
  %572 = vmatprep.subr.bf16.mxu0 0
  %573 = vmatpush1.bf16.msra.mxu0 %v551
  %574 = vmatprep.subr.bf16.mxu0 0
  %575 = vmatpush1.bf16.msra.mxu0 %v550
  %576 = vmatprep.subr.bf16.mxu0 0
  %577 = vmatpush1.bf16.msra.mxu0 %v549
  %578 = vmatprep.subr.bf16.mxu0 0
  %579 = vmatpush1.bf16.msra.mxu0 %v548
  %580 = vmatprep.subr.bf16.mxu0 0
  %581 = vmatpush2.bf16.msra.mxu0 0
  %582 = vmatprep.subr.bf16.mxu0 0
  %583 = vmatpush2.bf16.msra.mxu0 0
  %584 = vmatprep.subr.bf16.mxu0 0
  %585 = vmatpush2.bf16.msra.mxu0 0
  %586 = vmatprep.subr.bf16.mxu0 0
  %587 = vmatpush2.bf16.msra.mxu0 0
  %588 = vmatprep.subr.bf16.mxu0 0
  %589 = vmatpush2.bf16.msra.mxu0 0
  %590 = vmatprep.subr.bf16.mxu0 0
  %591 = vmatpush2.bf16.msra.mxu0 0
  %592 = vmatprep.subr.bf16.mxu0 0
  %593 = vmatpush2.bf16.msra.mxu0 0
  %594 = vmatprep.subr.bf16.mxu0 0
  %595 = vmatpush2.bf16.msra.mxu0 0
  %596 = vmatprep.mubr.bf16.mxu0 0
  %597 = vmatmul.mubr.bf16.gmra.mxu0 %v492
  %v598 = vpop.f32.mrf.mxu0
  %v599 = vadd.f32 %v514, %v598
  %v600 = vpop.f32.mrf.mxu0
  %v601 = vpop.f32.mrf.mxu0
  %v602 = vpop.f32.mrf.mxu0
  %603 = vdwg.mxu0
  %v604 = vmax.f32 %v599, 0.0
  %605 = vst [vmem:[%s12] sm:$0xff] %v604
  // Predicated region
  $region46: #{_lambda_.15} parent=0 // pred_check
    _
  $region47: #{_lambda_.15} parent=0 // pred_check_branch
    %607 = sbr.rel (0) target = $region49
  $region48: #{_lambda_.15} parent=0 // pred_region
    _
  $region49: #{_lambda_.15} parent=0 // pred_fallthru
    _
  // Predicated region
  $region50: #{_lambda_.15} parent=0 // pred_check
    _
  $region51: #{_lambda_.15} parent=0 // pred_check_branch
    %609 = sbr.rel (0) target = $region53
  $region52: #{_lambda_.15} parent=0 // pred_region
    _
  $region53: #{_lambda_.15} parent=0 // pred_fallthru
    _
  // Predicated region
  $region54: #{_lambda_.15} parent=0 // pred_check
    _
  $region55: #{_lambda_.15} parent=0 // pred_check_branch
    %611 = sbr.rel (0) target = $region57
  $region56: #{_lambda_.15} parent=0 // pred_region
    _
  $region57: #{_lambda_.15} parent=0 // pred_fallthru
    _
  // Predicated region
  $region58: #{_lambda_.15} parent=0 // pred_check
    _
  $region59: #{_lambda_.15} parent=0 // pred_check_branch
    %613 = sbr.rel (0) target = $region61
  $region60: #{_lambda_.15} parent=0 // pred_region
    _
  $region61: #{_lambda_.15} parent=0 // pred_fallthru
    _

</llo_original>
